<compile_context>
chip_gen: v6e
topology: v6e:2x2x1
jax: 0.10.0
libtpu: 0.0.40
codegen_flags: <defaults>
</compile_context>

<pallas_src>
import functools

import jax
import jax.numpy as jnp
from jax.experimental import pallas as pl
from jax.experimental.pallas import tpu as pltpu

EPS = 1e-5  # PyTorch InstanceNorm2d default eps (affine=False, biased variance)


# ----------------------------- kernel helpers -----------------------------

def _reflect_pad1(x):
    # x: (H, W, C) -> (H+2, W+2, C), ReflectionPad2d(1) semantics.
    H, W, _ = x.shape
    x = jnp.concatenate([x[1:2], x, x[H - 2:H - 1]], axis=0)
    x = jnp.concatenate([x[:, 1:2], x, x[:, W - 2:W - 1]], axis=1)
    return x


def _conv3x3_rows(xp, w_ref, b_ref):
    # xp: (H+2, W+2, Cp) padded activation, already in the matmul dtype (cast hoisted).
    # w_ref: (3, 3*Cp, Cp) weight slabs, index [dy, dx*Cp + ci, co].
    # b_ref: (1, Cp) bias (f32).
    # The 3 horizontal (dx) taps are folded into the contraction dim, so the conv is
    # 3 matmuls of shape (H*W, 3*Cp) x (3*Cp, Cp) instead of 9 of (H*W, Cp) x (Cp, Cp).
    Hp, Wp, Cp = xp.shape
    H, W = Hp - 2, Wp - 2
    row_cat = jnp.concatenate(
        [xp[:, 0:W, :], xp[:, 1:W + 1, :], xp[:, 2:W + 2, :]], axis=-1)  # (H+2, W, 3Cp)

    def tap(dy):
        patch = row_cat[dy:dy + H].reshape(H * W, 3 * Cp)
        return jnp.dot(patch, w_ref[dy], preferred_element_type=jnp.float32)

    acc = tap(0) + b_ref[...]       # bias folded into the first accumulation
    acc = acc + tap(1)              # chained accumulator -> MRB in-place accumulate on v7x
    acc = acc + tap(2)
    return acc                      # (H*W, Cp) f32


def _instance_norm(y):
    # Single-pass stats (sum + sum-of-squares) in f32; max(.,0) guards the variance.
    n = y.shape[0]
    inv_n = 1.0 / n
    s = jnp.sum(y, axis=0, keepdims=True)
    ss = jnp.sum(y * y, axis=0, keepdims=True)
    m = s * inv_n
    v = jnp.maximum(ss * inv_n - m * m, 0.0)
    return (y - m) * jax.lax.rsqrt(v + EPS)


# ------------------------------- the kernel -------------------------------

def _residual_block_kernel(alpha_ref, x_ref, w1_ref, b1_ref, w2_ref, b2_ref, out_ref,
                           *, H, W, mm_dtype):
    Cp = x_ref.shape[-1]
    alpha = alpha_ref[0]            # PReLU slope, loaded once from SMEM

    def prelu(v):
        return jnp.where(v >= 0, v, alpha * v)

    x = x_ref[...]                                         # (H*W, Cp) f32, lane dense

    # conv1 -> IN -> PReLU  (reflection pad in-kernel; single upfront cast to mm_dtype)
    xpad = _reflect_pad1(x.reshape(H, W, Cp).astype(mm_dtype))
    y = prelu(_instance_norm(_conv3x3_rows(xpad, w1_ref, b1_ref)))

    # conv2 -> IN -> +residual (reuse the same VMEM slab x) -> PReLU
    ypad = _reflect_pad1(y.reshape(H, W, Cp).astype(mm_dtype))
    z = _instance_norm(_conv3x3_rows(ypad, w2_ref, b2_ref)) + x
    out_ref[...] = prelu(z).astype(out_ref.dtype)          # lane-dense (H*W, Cp) store


# ------------------------------ JAX wrapper -------------------------------

def residual_block(x_nchw, w1, b1, w2, b2, alpha, *, matmul_dtype=jnp.bfloat16):
    # bf16 MXU operands by default (v6e/v7x native); accumulation stays f32.
    # Pass matmul_dtype=jnp.float32 for bit-tight agreement with an f32 reference.
    N, C, H, W = x_nchw.shape
    Cout = w1.shape[0]
    assert Cout == C, "residual add requires in_channels == out_channels"
    assert H >= 2 and W >= 2, "ReflectionPad2d(1) requires H >= 2 and W >= 2"

    Cp = ((C + 127) // 128) * 128           # lane-dense channel width (fills 256-wide MXU
    mm_dtype = jnp.dtype(matmul_dtype)      # on v6e/v7x automatically once C >= 256)

    # NHWC + channel zero-pad; padded channels stay exactly 0 through the whole block,
    # so dropping them at the end is lossless. Single lane-dense (H*W, Cp) slab per image
    # serves both conv1 (padded in-kernel) and the residual add.
    x = jnp.transpose(x_nchw, (0, 2, 3, 1)).astype(jnp.float32)
    xc = jnp.pad(x, ((0, 0), (0, 0), (0, 0), (0, Cp - C))).reshape(N, H * W, Cp)

    def prep_w(w, b):
        wk = jnp.transpose(w, (2, 3, 1, 0))                       # (kh, kw, Cin, Cout)
        wk = jnp.pad(wk, ((0, 0), (0, 0), (0, Cp - C), (0, Cp - Cout)))
        wk = wk.reshape(3, 3 * Cp, Cp).astype(mm_dtype)           # [dy, dx*Cp + ci, co]
        bk = jnp.pad(b, (0, Cp - Cout)).reshape(1, Cp).astype(jnp.float32)
        return wk, bk

    w1k, b1k = prep_w(w1, b1)
    w2k, b2k = prep_w(w2, b2)
    alpha_arr = jnp.asarray([alpha], jnp.float32)

    # --- VMEM budget: honest working-set estimate + generation-aware cap with headroom ---
    f32b, wb = 4, mm_dtype.itemsize
    hw, hw_pad = H * W, (H + 2) * (W + 2)
    io_slabs = 2 * 2 * hw * Cp * f32b                        # double-buffered in + out slabs
    weights = 2 * 2 * (3 * 3 * Cp * Cp * wb + Cp * f32b)     # double-buffered w1/b1/w2/b2
    compute = (hw_pad * Cp * wb                              # xpad / ypad
               + (H + 2) * W * 3 * Cp * wb                   # row_cat (3x activation)
               + 4 * hw * Cp * f32b)                         # x, y, z + IN temporaries
    est = io_slabs + weights + compute + (8 << 20)           # margin
    try:
        cap = pltpu.get_tpu_info().vmem_capacity_bytes
    except Exception:
        cap = 128 * 2**20
    # Never request the full physical VMEM: leave ~25% for Mosaic internal scratch
    # (~48 MiB usable on v7x's 64 MiB, ~96 MiB on v5e/v6e's 128 MiB).
    vmem_bytes = int(min(cap * 3 // 4, max(16 * 2**20, est)))

    kernel = functools.partial(_residual_block_kernel, H=H, W=W, mm_dtype=mm_dtype)

    out = pl.pallas_call(
        kernel,
        out_shape=jax.ShapeDtypeStruct((N, H * W, Cp), jnp.float32),
        grid_spec=pltpu.PrefetchScalarGridSpec(
            num_scalar_prefetch=0,
            grid=(N,),
            in_specs=[
                pl.BlockSpec(memory_space=pltpu.MemorySpace.SMEM),           # alpha
                pl.BlockSpec((None, H * W, Cp), lambda b: (b, 0, 0)),        # x slab (conv1 + residual)
                pl.BlockSpec((3, 3 * Cp, Cp), lambda b: (0, 0, 0)),          # w1 (grid-invariant, resident)
                pl.BlockSpec((1, Cp), lambda b: (0, 0)),                     # b1
                pl.BlockSpec((3, 3 * Cp, Cp), lambda b: (0, 0, 0)),          # w2 (grid-invariant, resident)
                pl.BlockSpec((1, Cp), lambda b: (0, 0)),                     # b2
            ],
            out_specs=pl.BlockSpec((None, H * W, Cp), lambda b: (b, 0, 0)),  # lane-dense out
        ),
        compiler_params=pltpu.CompilerParams(
            dimension_semantics=("parallel",),      # independent per-image -> megacore sharding
            vmem_limit_bytes=vmem_bytes,
        ),
    )(alpha_arr, xc, w1k, b1k, w2k, b2k)

    out = out.reshape(N, H, W, Cp)[..., :C]          # drop channel padding
    return jnp.transpose(out, (0, 3, 1, 2))          # back to NCHW


# --------------------------- pure-JAX reference ----------------------------

def reference(x_nchw, w1, b1, w2, b2, alpha):
    def conv(x, w, b):
        xp = jnp.pad(x, ((0, 0), (0, 0), (1, 1), (1, 1)), mode="reflect")
        y = jax.lax.conv_general_dilated(
            xp, w, window_strides=(1, 1), padding="VALID",
            dimension_numbers=("NCHW", "OIHW", "NCHW"))
        return y + b[None, :, None, None]

    def inorm(y):
        m = y.mean(axis=(2, 3), keepdims=True)
        v = ((y - m) ** 2).mean(axis=(2, 3), keepdims=True)
        return (y - m) / jnp.sqrt(v + EPS)

    def prelu(y):
        return jnp.where(y >= 0, y, alpha * y)

    y = prelu(inorm(conv(x_nchw, w1, b1)))
    z = inorm(conv(y, w2, b2)) + x_nchw
    return prelu(z)


# ---------------------------------- main -----------------------------------

if __name__ == "__main__":
    key = jax.random.PRNGKey(0)
    N, C, H, W = 2, 4, 16, 16
    k1, k2, k3, k4, k5 = jax.random.split(key, 5)

    x = jax.random.normal(k1, (N, C, H, W), jnp.float32)

    # Deterministic parameter init (Conv2d-style uniform bounds), PReLU alpha=0.25.
    fan_in = C * 3 * 3
    bound = 1.0 / (fan_in ** 0.5)
    w1 = jax.random.uniform(k2, (C, C, 3, 3), jnp.float32, -bound, bound)
    b1 = jax.random.uniform(k3, (C,), jnp.float32, -bound, bound)
    w2 = jax.random.uniform(k4, (C, C, 3, 3), jnp.float32, -bound, bound)
    b2 = jax.random.uniform(k5, (C,), jnp.float32, -bound, bound)
    alpha = 0.25

    ref = reference(x, w1, b1, w2, b2, alpha)

    # Default path: bf16 MXU operands, f32 accumulation (recommended on v6e/v7x).
    out = jax.block_until_ready(residual_block(x, w1, b1, w2, b2, alpha))
    assert out.shape == ref.shape == (N, C, H, W)
    err_bf16 = float(jnp.max(jnp.abs(out - ref)))
    assert err_bf16 < 5e-2, f"bf16-matmul mismatch vs reference: {err_bf16}"

    # Strict semantics check: f32-matmul path must match the f32 reference tightly.
    out_f32 = jax.block_until_ready(
        residual_block(x, w1, b1, w2, b2, alpha, matmul_dtype=jnp.float32))
    err_f32 = float(jnp.max(jnp.abs(out_f32 - ref)))
    assert err_f32 < 1e-3, f"f32-matmul mismatch vs reference: {err_f32}"

    print("KERNEL_OK")
</pallas_src>

<mosaic_0001>
module attributes {stable_mosaic.version = 11 : i64} {
  func.func @_residual_block_kernel(%arg0: i32, %arg1: memref<1xf32, #tpu.memory_space<smem>>, %arg2: memref<1x256x128xf32, #tpu.memory_space<vmem>>, %arg3: memref<3x384x128xbf16, #tpu.memory_space<vmem>>, %arg4: memref<1x128xf32, #tpu.memory_space<vmem>>, %arg5: memref<3x384x128xbf16, #tpu.memory_space<vmem>>, %arg6: memref<1x128xf32, #tpu.memory_space<vmem>>, %arg7: memref<1x256x128xf32, #tpu.memory_space<vmem>>) attributes {dimension_semantics = [#tpu.dimension_semantics<parallel>], iteration_bounds = array<i64: 2>, scalar_prefetch = 0 : i64, scratch_operands = 0 : i64, tpu.core_type = #tpu.core_type<tc>, window_params = [{transform_indices = @transform_0, window_bounds = array<i64: 1>}, {transform_indices = @transform_1, window_bounds = array<i64: 1, 256, 128>}, {pipeline_mode = #tpu.pipeline_mode<synchronous>, transform_indices = @transform_2, window_bounds = array<i64: 3, 384, 128>}, {pipeline_mode = #tpu.pipeline_mode<synchronous>, transform_indices = @transform_3, window_bounds = array<i64: 1, 128>}, {pipeline_mode = #tpu.pipeline_mode<synchronous>, transform_indices = @transform_4, window_bounds = array<i64: 3, 384, 128>}, {pipeline_mode = #tpu.pipeline_mode<synchronous>, transform_indices = @transform_5, window_bounds = array<i64: 1, 128>}, {transform_indices = @transform_6, window_bounds = array<i64: 1, 256, 128>}]} {
    %c0 = arith.constant 0 : index
    %0 = memref.load %arg1[%c0] : memref<1xf32, #tpu.memory_space<smem>>
    %c0_0 = arith.constant 0 : index
    %c0_1 = arith.constant 0 : index
    %c0_2 = arith.constant 0 : index
    %1 = vector.load %arg2[%c0_0, %c0_1, %c0_2] : memref<1x256x128xf32, #tpu.memory_space<vmem>>, vector<1x256x128xf32>
    %2 = vector.shape_cast %1 : vector<1x256x128xf32> to vector<256x128xf32>
    %3 = vector.shape_cast %2 : vector<256x128xf32> to vector<16x16x128xf32>
    %4 = arith.truncf %3 : vector<16x16x128xf32> to vector<16x16x128xbf16>
    %5 = vector.extract_strided_slice %4 {offsets = [1, 0, 0], sizes = [1, 16, 128], strides = [1, 1, 1]} : vector<16x16x128xbf16> to vector<1x16x128xbf16>
    %6 = vector.extract_strided_slice %4 {offsets = [14, 0, 0], sizes = [1, 16, 128], strides = [1, 1, 1]} : vector<16x16x128xbf16> to vector<1x16x128xbf16>
    %7 = tpu.concatenate %5, %4, %6 in 0 : vector<1x16x128xbf16>, vector<16x16x128xbf16>, vector<1x16x128xbf16> -> vector<18x16x128xbf16>
    %8 = vector.extract_strided_slice %7 {offsets = [0, 1, 0], sizes = [18, 1, 128], strides = [1, 1, 1]} : vector<18x16x128xbf16> to vector<18x1x128xbf16>
    %9 = vector.extract_strided_slice %7 {offsets = [0, 14, 0], sizes = [18, 1, 128], strides = [1, 1, 1]} : vector<18x16x128xbf16> to vector<18x1x128xbf16>
    %10 = tpu.concatenate %8, %7, %9 in 1 : vector<18x1x128xbf16>, vector<18x16x128xbf16>, vector<18x1x128xbf16> -> vector<18x18x128xbf16>
    %11 = vector.extract_strided_slice %10 {offsets = [0, 0, 0], sizes = [18, 16, 128], strides = [1, 1, 1]} : vector<18x18x128xbf16> to vector<18x16x128xbf16>
    %12 = vector.extract_strided_slice %10 {offsets = [0, 1, 0], sizes = [18, 16, 128], strides = [1, 1, 1]} : vector<18x18x128xbf16> to vector<18x16x128xbf16>
    %13 = vector.extract_strided_slice %10 {offsets = [0, 2, 0], sizes = [18, 16, 128], strides = [1, 1, 1]} : vector<18x18x128xbf16> to vector<18x16x128xbf16>
    %14 = tpu.concatenate %11, %12, %13 in 2 : vector<18x16x128xbf16>, vector<18x16x128xbf16>, vector<18x16x128xbf16> -> vector<18x16x384xbf16>
    %15 = vector.extract_strided_slice %14 {offsets = [0, 0, 0], sizes = [16, 16, 384], strides = [1, 1, 1]} : vector<18x16x384xbf16> to vector<16x16x384xbf16>
    %16 = vector.shape_cast %15 : vector<16x16x384xbf16> to vector<256x384xbf16>
    %c0_3 = arith.constant 0 : index
    %c0_4 = arith.constant 0 : index
    %c0_5 = arith.constant 0 : index
    %17 = vector.load %arg3[%c0_3, %c0_4, %c0_5] : memref<3x384x128xbf16, #tpu.memory_space<vmem>>, vector<1x384x128xbf16>
    %18 = vector.shape_cast %17 : vector<1x384x128xbf16> to vector<384x128xbf16>
    %cst = arith.constant dense<0.000000e+00> : vector<256x128xf32>
    %19 = tpu.matmul %16, %18, %cst {dimension_numbers = #tpu.dot_dimension_numbers<[1], [0], [0], [1], [0, 0, 1, 1], [], []>} : vector<256x384xbf16>, vector<384x128xbf16>, vector<256x128xf32> -> vector<256x128xf32>
    %c0_6 = arith.constant 0 : index
    %c0_7 = arith.constant 0 : index
    %20 = vector.load %arg4[%c0_6, %c0_7] : memref<1x128xf32, #tpu.memory_space<vmem>>, vector<1x128xf32>
    %21 = vector.broadcast %20 : vector<1x128xf32> to vector<256x128xf32>
    %22 = arith.addf %19, %21 : vector<256x128xf32>
    %23 = vector.extract_strided_slice %14 {offsets = [1, 0, 0], sizes = [16, 16, 384], strides = [1, 1, 1]} : vector<18x16x384xbf16> to vector<16x16x384xbf16>
    %24 = vector.shape_cast %23 : vector<16x16x384xbf16> to vector<256x384xbf16>
    %c1 = arith.constant 1 : index
    %c0_8 = arith.constant 0 : index
    %c0_9 = arith.constant 0 : index
    %25 = vector.load %arg3[%c1, %c0_8, %c0_9] : memref<3x384x128xbf16, #tpu.memory_space<vmem>>, vector<1x384x128xbf16>
    %26 = vector.shape_cast %25 : vector<1x384x128xbf16> to vector<384x128xbf16>
    %cst_10 = arith.constant dense<0.000000e+00> : vector<256x128xf32>
    %27 = tpu.matmul %24, %26, %cst_10 {dimension_numbers = #tpu.dot_dimension_numbers<[1], [0], [0], [1], [0, 0, 1, 1], [], []>} : vector<256x384xbf16>, vector<384x128xbf16>, vector<256x128xf32> -> vector<256x128xf32>
    %28 = arith.addf %22, %27 : vector<256x128xf32>
    %29 = vector.extract_strided_slice %14 {offsets = [2, 0, 0], sizes = [16, 16, 384], strides = [1, 1, 1]} : vector<18x16x384xbf16> to vector<16x16x384xbf16>
    %30 = vector.shape_cast %29 : vector<16x16x384xbf16> to vector<256x384xbf16>
    %c2 = arith.constant 2 : index
    %c0_11 = arith.constant 0 : index
    %c0_12 = arith.constant 0 : index
    %31 = vector.load %arg3[%c2, %c0_11, %c0_12] : memref<3x384x128xbf16, #tpu.memory_space<vmem>>, vector<1x384x128xbf16>
    %32 = vector.shape_cast %31 : vector<1x384x128xbf16> to vector<384x128xbf16>
    %cst_13 = arith.constant dense<0.000000e+00> : vector<256x128xf32>
    %33 = tpu.matmul %30, %32, %cst_13 {dimension_numbers = #tpu.dot_dimension_numbers<[1], [0], [0], [1], [0, 0, 1, 1], [], []>} : vector<256x384xbf16>, vector<384x128xbf16>, vector<256x128xf32> -> vector<256x128xf32>
    %34 = arith.addf %28, %33 : vector<256x128xf32>
    %cst_14 = arith.constant dense<0.000000e+00> : vector<128xf32>
    %35 = vector.multi_reduction <add>, %34, %cst_14 [0] : vector<256x128xf32> to vector<128xf32>
    %36 = vector.shape_cast %35 : vector<128xf32> to vector<1x128xf32>
    %37 = arith.mulf %34, %34 : vector<256x128xf32>
    %cst_15 = arith.constant dense<0.000000e+00> : vector<128xf32>
    %38 = vector.multi_reduction <add>, %37, %cst_15 [0] : vector<256x128xf32> to vector<128xf32>
    %39 = vector.shape_cast %38 : vector<128xf32> to vector<1x128xf32>
    %cst_16 = arith.constant 3.906250e-03 : f32
    %40 = vector.broadcast %cst_16 : f32 to vector<1x128xf32>
    %41 = arith.mulf %36, %40 : vector<1x128xf32>
    %cst_17 = arith.constant 3.906250e-03 : f32
    %42 = vector.broadcast %cst_17 : f32 to vector<1x128xf32>
    %43 = arith.mulf %39, %42 : vector<1x128xf32>
    %44 = arith.mulf %41, %41 : vector<1x128xf32>
    %45 = arith.subf %43, %44 : vector<1x128xf32>
    %cst_18 = arith.constant 0.000000e+00 : f32
    %46 = vector.broadcast %cst_18 : f32 to vector<1x128xf32>
    %47 = arith.maximumf %45, %46 : vector<1x128xf32>
    %48 = vector.broadcast %41 : vector<1x128xf32> to vector<256x128xf32>
    %49 = arith.subf %34, %48 : vector<256x128xf32>
    %cst_19 = arith.constant 9.99999974E-6 : f32
    %50 = vector.broadcast %cst_19 : f32 to vector<1x128xf32>
    %51 = arith.addf %47, %50 : vector<1x128xf32>
    %52 = math.rsqrt %51 : vector<1x128xf32>
    %53 = vector.broadcast %52 : vector<1x128xf32> to vector<256x128xf32>
    %54 = arith.mulf %49, %53 : vector<256x128xf32>
    %cst_20 = arith.constant 0.000000e+00 : f32
    %55 = vector.broadcast %cst_20 : f32 to vector<256x128xf32>
    %56 = arith.cmpf oge, %54, %55 : vector<256x128xf32>
    %57 = vector.broadcast %0 : f32 to vector<256x128xf32>
    %58 = arith.mulf %57, %54 : vector<256x128xf32>
    %59 = arith.select %56, %54, %58 : vector<256x128xi1>, vector<256x128xf32>
    %60 = vector.shape_cast %59 : vector<256x128xf32> to vector<16x16x128xf32>
    %61 = arith.truncf %60 : vector<16x16x128xf32> to vector<16x16x128xbf16>
    %62 = vector.extract_strided_slice %61 {offsets = [1, 0, 0], sizes = [1, 16, 128], strides = [1, 1, 1]} : vector<16x16x128xbf16> to vector<1x16x128xbf16>
    %63 = vector.extract_strided_slice %61 {offsets = [14, 0, 0], sizes = [1, 16, 128], strides = [1, 1, 1]} : vector<16x16x128xbf16> to vector<1x16x128xbf16>
    %64 = tpu.concatenate %62, %61, %63 in 0 : vector<1x16x128xbf16>, vector<16x16x128xbf16>, vector<1x16x128xbf16> -> vector<18x16x128xbf16>
    %65 = vector.extract_strided_slice %64 {offsets = [0, 1, 0], sizes = [18, 1, 128], strides = [1, 1, 1]} : vector<18x16x128xbf16> to vector<18x1x128xbf16>
    %66 = vector.extract_strided_slice %64 {offsets = [0, 14, 0], sizes = [18, 1, 128], strides = [1, 1, 1]} : vector<18x16x128xbf16> to vector<18x1x128xbf16>
    %67 = tpu.concatenate %65, %64, %66 in 1 : vector<18x1x128xbf16>, vector<18x16x128xbf16>, vector<18x1x128xbf16> -> vector<18x18x128xbf16>
    %68 = vector.extract_strided_slice %67 {offsets = [0, 0, 0], sizes = [18, 16, 128], strides = [1, 1, 1]} : vector<18x18x128xbf16> to vector<18x16x128xbf16>
    %69 = vector.extract_strided_slice %67 {offsets = [0, 1, 0], sizes = [18, 16, 128], strides = [1, 1, 1]} : vector<18x18x128xbf16> to vector<18x16x128xbf16>
    %70 = vector.extract_strided_slice %67 {offsets = [0, 2, 0], sizes = [18, 16, 128], strides = [1, 1, 1]} : vector<18x18x128xbf16> to vector<18x16x128xbf16>
    %71 = tpu.concatenate %68, %69, %70 in 2 : vector<18x16x128xbf16>, vector<18x16x128xbf16>, vector<18x16x128xbf16> -> vector<18x16x384xbf16>
    %72 = vector.extract_strided_slice %71 {offsets = [0, 0, 0], sizes = [16, 16, 384], strides = [1, 1, 1]} : vector<18x16x384xbf16> to vector<16x16x384xbf16>
    %73 = vector.shape_cast %72 : vector<16x16x384xbf16> to vector<256x384xbf16>
    %c0_21 = arith.constant 0 : index
    %c0_22 = arith.constant 0 : index
    %c0_23 = arith.constant 0 : index
    %74 = vector.load %arg5[%c0_21, %c0_22, %c0_23] : memref<3x384x128xbf16, #tpu.memory_space<vmem>>, vector<1x384x128xbf16>
    %75 = vector.shape_cast %74 : vector<1x384x128xbf16> to vector<384x128xbf16>
    %cst_24 = arith.constant dense<0.000000e+00> : vector<256x128xf32>
    %76 = tpu.matmul %73, %75, %cst_24 {dimension_numbers = #tpu.dot_dimension_numbers<[1], [0], [0], [1], [0, 0, 1, 1], [], []>} : vector<256x384xbf16>, vector<384x128xbf16>, vector<256x128xf32> -> vector<256x128xf32>
    %c0_25 = arith.constant 0 : index
    %c0_26 = arith.constant 0 : index
    %77 = vector.load %arg6[%c0_25, %c0_26] : memref<1x128xf32, #tpu.memory_space<vmem>>, vector<1x128xf32>
    %78 = vector.broadcast %77 : vector<1x128xf32> to vector<256x128xf32>
    %79 = arith.addf %76, %78 : vector<256x128xf32>
    %80 = vector.extract_strided_slice %71 {offsets = [1, 0, 0], sizes = [16, 16, 384], strides = [1, 1, 1]} : vector<18x16x384xbf16> to vector<16x16x384xbf16>
    %81 = vector.shape_cast %80 : vector<16x16x384xbf16> to vector<256x384xbf16>
    %c1_27 = arith.constant 1 : index
    %c0_28 = arith.constant 0 : index
    %c0_29 = arith.constant 0 : index
    %82 = vector.load %arg5[%c1_27, %c0_28, %c0_29] : memref<3x384x128xbf16, #tpu.memory_space<vmem>>, vector<1x384x128xbf16>
    %83 = vector.shape_cast %82 : vector<1x384x128xbf16> to vector<384x128xbf16>
    %cst_30 = arith.constant dense<0.000000e+00> : vector<256x128xf32>
    %84 = tpu.matmul %81, %83, %cst_30 {dimension_numbers = #tpu.dot_dimension_numbers<[1], [0], [0], [1], [0, 0, 1, 1], [], []>} : vector<256x384xbf16>, vector<384x128xbf16>, vector<256x128xf32> -> vector<256x128xf32>
    %85 = arith.addf %79, %84 : vector<256x128xf32>
    %86 = vector.extract_strided_slice %71 {offsets = [2, 0, 0], sizes = [16, 16, 384], strides = [1, 1, 1]} : vector<18x16x384xbf16> to vector<16x16x384xbf16>
    %87 = vector.shape_cast %86 : vector<16x16x384xbf16> to vector<256x384xbf16>
    %c2_31 = arith.constant 2 : index
    %c0_32 = arith.constant 0 : index
    %c0_33 = arith.constant 0 : index
    %88 = vector.load %arg5[%c2_31, %c0_32, %c0_33] : memref<3x384x128xbf16, #tpu.memory_space<vmem>>, vector<1x384x128xbf16>
    %89 = vector.shape_cast %88 : vector<1x384x128xbf16> to vector<384x128xbf16>
    %cst_34 = arith.constant dense<0.000000e+00> : vector<256x128xf32>
    %90 = tpu.matmul %87, %89, %cst_34 {dimension_numbers = #tpu.dot_dimension_numbers<[1], [0], [0], [1], [0, 0, 1, 1], [], []>} : vector<256x384xbf16>, vector<384x128xbf16>, vector<256x128xf32> -> vector<256x128xf32>
    %91 = arith.addf %85, %90 : vector<256x128xf32>
    %cst_35 = arith.constant dense<0.000000e+00> : vector<128xf32>
    %92 = vector.multi_reduction <add>, %91, %cst_35 [0] : vector<256x128xf32> to vector<128xf32>
    %93 = vector.shape_cast %92 : vector<128xf32> to vector<1x128xf32>
    %94 = arith.mulf %91, %91 : vector<256x128xf32>
    %cst_36 = arith.constant dense<0.000000e+00> : vector<128xf32>
    %95 = vector.multi_reduction <add>, %94, %cst_36 [0] : vector<256x128xf32> to vector<128xf32>
    %96 = vector.shape_cast %95 : vector<128xf32> to vector<1x128xf32>
    %cst_37 = arith.constant 3.906250e-03 : f32
    %97 = vector.broadcast %cst_37 : f32 to vector<1x128xf32>
    %98 = arith.mulf %93, %97 : vector<1x128xf32>
    %cst_38 = arith.constant 3.906250e-03 : f32
    %99 = vector.broadcast %cst_38 : f32 to vector<1x128xf32>
    %100 = arith.mulf %96, %99 : vector<1x128xf32>
    %101 = arith.mulf %98, %98 : vector<1x128xf32>
    %102 = arith.subf %100, %101 : vector<1x128xf32>
    %cst_39 = arith.constant 0.000000e+00 : f32
    %103 = vector.broadcast %cst_39 : f32 to vector<1x128xf32>
    %104 = arith.maximumf %102, %103 : vector<1x128xf32>
    %105 = vector.broadcast %98 : vector<1x128xf32> to vector<256x128xf32>
    %106 = arith.subf %91, %105 : vector<256x128xf32>
    %cst_40 = arith.constant 9.99999974E-6 : f32
    %107 = vector.broadcast %cst_40 : f32 to vector<1x128xf32>
    %108 = arith.addf %104, %107 : vector<1x128xf32>
    %109 = math.rsqrt %108 : vector<1x128xf32>
    %110 = vector.broadcast %109 : vector<1x128xf32> to vector<256x128xf32>
    %111 = arith.mulf %106, %110 : vector<256x128xf32>
    %112 = arith.addf %111, %2 : vector<256x128xf32>
    %cst_41 = arith.constant 0.000000e+00 : f32
    %113 = vector.broadcast %cst_41 : f32 to vector<256x128xf32>
    %114 = arith.cmpf oge, %112, %113 : vector<256x128xf32>
    %115 = vector.broadcast %0 : f32 to vector<256x128xf32>
    %116 = arith.mulf %115, %112 : vector<256x128xf32>
    %117 = arith.select %114, %112, %116 : vector<256x128xi1>, vector<256x128xf32>
    %c0_42 = arith.constant 0 : index
    %c0_43 = arith.constant 0 : index
    %c0_44 = arith.constant 0 : index
    %118 = vector.load %arg7[%c0_42, %c0_43, %c0_44] : memref<1x256x128xf32, #tpu.memory_space<vmem>>, vector<1x256x128xf32>
    %119 = vector.shape_cast %118 : vector<1x256x128xf32> to vector<256x128xf32>
    %120 = vector.shape_cast %117 : vector<256x128xf32> to vector<1x256x128xf32>
    tpu.vector_store %arg7[%c0_42, %c0_43, %c0_44], %120 {strides = array<i32>} : memref<1x256x128xf32, #tpu.memory_space<vmem>>, vector<1x256x128xf32>,
    return
  }
  func.func @transform_0(%arg0: i32) -> i32 {
    %c0_i32 = arith.constant 0 : i32
    %c0_i32_0 = arith.constant 0 : i32
    return %c0_i32 : i32
  }
  func.func @transform_1(%arg0: i32) -> (i32, i32, i32) {
    %c0_i32 = arith.constant 0 : i32
    %c0_i32_0 = arith.constant 0 : i32
    %c0_i32_1 = arith.constant 0 : i32
    return %arg0, %c0_i32, %c0_i32_0 : i32, i32, i32
  }
  func.func @transform_2(%arg0: i32) -> (i32, i32, i32) {
    %c0_i32 = arith.constant 0 : i32
    %c0_i32_0 = arith.constant 0 : i32
    %c0_i32_1 = arith.constant 0 : i32
    %c0_i32_2 = arith.constant 0 : i32
    return %c0_i32, %c0_i32_0, %c0_i32_1 : i32, i32, i32
  }
  func.func @transform_3(%arg0: i32) -> (i32, i32) {
    %c0_i32 = arith.constant 0 : i32
    %c0_i32_0 = arith.constant 0 : i32
    %c0_i32_1 = arith.constant 0 : i32
    return %c0_i32, %c0_i32_0 : i32, i32
  }
  func.func @transform_4(%arg0: i32) -> (i32, i32, i32) {
    %c0_i32 = arith.constant 0 : i32
    %c0_i32_0 = arith.constant 0 : i32
    %c0_i32_1 = arith.constant 0 : i32
    %c0_i32_2 = arith.constant 0 : i32
    return %c0_i32, %c0_i32_0, %c0_i32_1 : i32, i32, i32
  }
  func.func @transform_5(%arg0: i32) -> (i32, i32) {
    %c0_i32 = arith.constant 0 : i32
    %c0_i32_0 = arith.constant 0 : i32
    %c0_i32_1 = arith.constant 0 : i32
    return %c0_i32, %c0_i32_0 : i32, i32
  }
  func.func @transform_6(%arg0: i32) -> (i32, i32, i32) {
    %c0_i32 = arith.constant 0 : i32
    %c0_i32_0 = arith.constant 0 : i32
    %c0_i32_1 = arith.constant 0 : i32
    return %arg0, %c0_i32, %c0_i32_0 : i32, i32, i32
  }
}

</mosaic_0001>

<llo_original>
// kernel: tpu_custom_call.1
$region0: #{tpu_custom_call.1}
  #allocation0 [shape = 'u32[]', space=smem, size = 0x4, offset = 0x4, fixed_abs, tag = 'smem constant byte address 0x4 - core index']
  #allocation1 [shape = 'u32[144,128]{1,0:T(1,128)}', space=vmem, size = 0x12000, scoped, tag = 'internal scratch']
  #allocation2 [shape = 'f32[1]{0:T(128)S(6)}', space=smem, size = 0x200, scoped, tag = 'scoped memory for tpu_custom_call.1']
  %s0 = inlined_call_operand.<no memory space> [shape: f32[1], index: 0, kind: input, shape index: {}]
  %s1 = inlined_call_operand.hbm [shape: f32[2,256,128], index: 1, kind: input, shape index: {}]
  %s2 = inlined_call_operand.hbm [shape: bf16[3,384,128], index: 2, kind: input, shape index: {}]
  %s3 = inlined_call_operand.vmem [shape: f32[1,128], index: 3, kind: input, shape index: {}]
  %s4 = inlined_call_operand.hbm [shape: bf16[3,384,128], index: 4, kind: input, shape index: {}]
  %s5 = inlined_call_operand.vmem [shape: f32[1,128], index: 5, kind: input, shape index: {}]
  %s6 = inlined_call_operand.hbm [shape: f32[2,256,128], index: 6, kind: output, shape index: {}]
  %s7 = sld [smem:[#allocation0]]
  $region69: #{tpu_custom_call.1} parent=0
    _
  %s9 = ssub.s32 1, %s7
  %s10 = scalar_select 0, %s9, %s7
  %11 = sst [smem:[#allocation2]] %s0
  $region1: #{tpu_custom_call.1} parent=0
    #allocation3 [shape = 'u8[262144]{0}', space=vmem, size = 0x40000, scoped, tag = 'input window, operand 1']
    #allocation4 [shape = 's32[2]{0}', space=sflag, size = 0x8, scoped, tag = 'scoped memory for tpu_custom_call.1']
    #allocation5 [shape = 's32[2]{0}', space=sflag, size = 0x8, scoped, tag = 'scoped memory for tpu_custom_call.1']
    #allocation6 [shape = 'u8[294912]{0}', space=vmem, size = 0x48000, scoped, tag = 'input window, operand 2, single buffered']
    #allocation7 [shape = 's32[1]{0}', space=sflag, size = 0x4, scoped, tag = 'scoped memory for tpu_custom_call.1']
    #allocation8 [shape = 'u8[294912]{0}', space=vmem, size = 0x48000, scoped, tag = 'input window, operand 4, single buffered']
    #allocation9 [shape = 'u8[262144]{0}', space=vmem, size = 0x40000, scoped, tag = 'output window, operand 0']
    %12 = vsyncpa [#allocation4], 0
    %s13 = scalar_lea.sflag [#allocation4], 1
    %14 = vsyncpa %s13, 0
    %15 = vsyncpa [#allocation7], 0
    %16 = vsyncpa [#allocation5], 0
    %s17 = scalar_lea.sflag [#allocation5], 1
    %18 = vsyncpa %s17, 0
    loop: start=0, step=1, limit=4
    $region2: #{tpu_custom_call.1} parent=1 // loop_pre_header
      _
    $region3: #{tpu_custom_call.1} parent=1 // loop_header
      %s20 = sphi 0, %s24
      %p21 = scmp.ge.s32.totalorder %s20, 4
      %s28 = sphi 0, %s28
      %s30 = sphi 0, %s28
      %s31 = sphi 0, %s30
      %s45 = sphi 0, %s31
      %s51 = sphi 0, %s53
      %s54 = sphi 0, %s51
      %s55 = sphi 0, %s54
      %s71 = sphi 0, %s55
      %s75 = sphi 0, %s75
      %s77 = sphi 0, %s75
      %s78 = sphi 0, %s77
      %s92 = sphi 0, %s78
      %s96 = sphi 0, %s96
      %s98 = sphi 0, %s96
      %s99 = sphi 0, %s98
      %s113 = sphi 0, %s99
      %s117 = sphi 0, %s117
      %s119 = sphi 0, %s117
      %s120 = sphi 0, %s119
      %s134 = sphi 0, %s120
      %s138 = sphi 0, %s138
      %s140 = sphi 0, %s138
      %s141 = sphi 0, %s140
      %s155 = sphi 0, %s141
      %s161 = sphi 0, %s163
      %s164 = sphi 0, %s161
      %s165 = sphi 0, %s164
      %s181 = sphi 0, %s165
    $region4: #{tpu_custom_call.1} parent=1 // loop_header_branch
      %23 = sbr.rel (%p21) target = $region8
    $region5: #{tpu_custom_call.1} parent=1 // loop_body
      %s25 = ssub.s32 %s20, 1
      %s26 = ssub.s32 %s20, 2
      %s27 = sadd.s32 %s20, 1
      %s29 = sadd.s32 %s28, 1
      %p32 = scmp.eq.s32.totalorder %s20, 1
      %p33 = scmp.ne.s32.totalorder %s28, %s30
      %p34 = scmp.eq.s32.totalorder %s20, 0
      %p35 = por %p33, %p34
      %p36 = scmp.ne.s32.totalorder %s28, %s30
      %p37 = scmp.eq.s32.totalorder %s25, 1
      %p38 = por %p36, %p37
      %p39 = scmp.ne.s32.totalorder %s30, %s31
      %p40 = scmp.eq.s32.totalorder %s25, 0
      %p41 = por %p39, %p40
      %p42 = scmp.ne.s32.totalorder %s30, %s31
      %p43 = scmp.eq.s32.totalorder %s26, 1
      %p44 = por %p42, %p43
      %p46 = scmp.ne.s32.totalorder %s31, %s45
      %p47 = scmp.eq.s32.totalorder %s26, 0
      %p48 = por %p46, %p47
      %s49 = ssub.s32 %s20, %s27
      %p50 = scmp.eq.s32.totalorder %s49, 0
      %s52 = sadd.s32 %s51, 1
      %s53 = scalar_select %p50, %s51, %s52
      %p56 = pneg %p50
      %p57 = scmp.eq.s32.totalorder %s20, 1
      %p58 = por %p56, %p57
      %p59 = scmp.ne.s32.totalorder %s51, %s54
      %p60 = scmp.eq.s32.totalorder %s20, 0
      %p61 = por %p59, %p60
      %p62 = scmp.ne.s32.totalorder %s51, %s54
      %p63 = scmp.eq.s32.totalorder %s25, 1
      %p64 = por %p62, %p63
      %p65 = scmp.ne.s32.totalorder %s54, %s55
      %p66 = scmp.eq.s32.totalorder %s25, 0
      %p67 = por %p65, %p66
      %p68 = scmp.ne.s32.totalorder %s54, %s55
      %p69 = scmp.eq.s32.totalorder %s26, 1
      %p70 = por %p68, %p69
      %p72 = scmp.ne.s32.totalorder %s55, %s71
      %p73 = scmp.eq.s32.totalorder %s26, 0
      %p74 = por %p72, %p73
      %s76 = sadd.s32 %s75, 1
      %p79 = scmp.eq.s32.totalorder %s20, 1
      %p80 = scmp.ne.s32.totalorder %s75, %s77
      %p81 = scmp.eq.s32.totalorder %s20, 0
      %p82 = por %p80, %p81
      %p83 = scmp.ne.s32.totalorder %s75, %s77
      %p84 = scmp.eq.s32.totalorder %s25, 1
      %p85 = por %p83, %p84
      %p86 = scmp.ne.s32.totalorder %s77, %s78
      %p87 = scmp.eq.s32.totalorder %s25, 0
      %p88 = por %p86, %p87
      %p89 = scmp.ne.s32.totalorder %s77, %s78
      %p90 = scmp.eq.s32.totalorder %s26, 1
      %p91 = por %p89, %p90
      %p93 = scmp.ne.s32.totalorder %s78, %s92
      %p94 = scmp.eq.s32.totalorder %s26, 0
      %p95 = por %p93, %p94
      %s97 = sadd.s32 %s96, 1
      %p100 = scmp.eq.s32.totalorder %s20, 1
      %p101 = scmp.ne.s32.totalorder %s96, %s98
      %p102 = scmp.eq.s32.totalorder %s20, 0
      %p103 = por %p101, %p102
      %p104 = scmp.ne.s32.totalorder %s96, %s98
      %p105 = scmp.eq.s32.totalorder %s25, 1
      %p106 = por %p104, %p105
      %p107 = scmp.ne.s32.totalorder %s98, %s99
      %p108 = scmp.eq.s32.totalorder %s25, 0
      %p109 = por %p107, %p108
      %p110 = scmp.ne.s32.totalorder %s98, %s99
      %p111 = scmp.eq.s32.totalorder %s26, 1
      %p112 = por %p110, %p111
      %p114 = scmp.ne.s32.totalorder %s99, %s113
      %p115 = scmp.eq.s32.totalorder %s26, 0
      %p116 = por %p114, %p115
      %s118 = sadd.s32 %s117, 1
      %p121 = scmp.eq.s32.totalorder %s20, 1
      %p122 = scmp.ne.s32.totalorder %s117, %s119
      %p123 = scmp.eq.s32.totalorder %s20, 0
      %p124 = por %p122, %p123
      %p125 = scmp.ne.s32.totalorder %s117, %s119
      %p126 = scmp.eq.s32.totalorder %s25, 1
      %p127 = por %p125, %p126
      %p128 = scmp.ne.s32.totalorder %s119, %s120
      %p129 = scmp.eq.s32.totalorder %s25, 0
      %p130 = por %p128, %p129
      %p131 = scmp.ne.s32.totalorder %s119, %s120
      %p132 = scmp.eq.s32.totalorder %s26, 1
      %p133 = por %p131, %p132
      %p135 = scmp.ne.s32.totalorder %s120, %s134
      %p136 = scmp.eq.s32.totalorder %s26, 0
      %p137 = por %p135, %p136
      %s139 = sadd.s32 %s138, 1
      %p142 = scmp.eq.s32.totalorder %s20, 1
      %p143 = scmp.ne.s32.totalorder %s138, %s140
      %p144 = scmp.eq.s32.totalorder %s20, 0
      %p145 = por %p143, %p144
      %p146 = scmp.ne.s32.totalorder %s138, %s140
      %p147 = scmp.eq.s32.totalorder %s25, 1
      %p148 = por %p146, %p147
      %p149 = scmp.ne.s32.totalorder %s140, %s141
      %p150 = scmp.eq.s32.totalorder %s25, 0
      %p151 = por %p149, %p150
      %p152 = scmp.ne.s32.totalorder %s140, %s141
      %p153 = scmp.eq.s32.totalorder %s26, 1
      %p154 = por %p152, %p153
      %p156 = scmp.ne.s32.totalorder %s141, %s155
      %p157 = scmp.eq.s32.totalorder %s26, 0
      %p158 = por %p156, %p157
      %s159 = ssub.s32 %s20, %s27
      %p160 = scmp.eq.s32.totalorder %s159, 0
      %s162 = sadd.s32 %s161, 1
      %s163 = scalar_select %p160, %s161, %s162
      %p166 = pneg %p160
      %p167 = scmp.eq.s32.totalorder %s20, 1
      %p168 = por %p166, %p167
      %p169 = scmp.ne.s32.totalorder %s161, %s164
      %p170 = scmp.eq.s32.totalorder %s20, 0
      %p171 = por %p169, %p170
      %p172 = scmp.ne.s32.totalorder %s161, %s164
      %p173 = scmp.eq.s32.totalorder %s25, 1
      %p174 = por %p172, %p173
      %p175 = scmp.ne.s32.totalorder %s164, %s165
      %p176 = scmp.eq.s32.totalorder %s25, 0
      %p177 = por %p175, %p176
      %p178 = scmp.ne.s32.totalorder %s164, %s165
      %p179 = scmp.eq.s32.totalorder %s26, 1
      %p180 = por %p178, %p179
      %p182 = scmp.ne.s32.totalorder %s165, %s181
      %p183 = scmp.eq.s32.totalorder %s26, 0
      %p184 = por %p182, %p183
      %p185 = scmp.le.s32.totalorder 1, %s20
      %p186 = scmp.lt.s32.totalorder %s20, 3
      %p187 = pnand %p185, %p186
      %p188 = pneg %p187
      // Predicated region
      $region9: #{tpu_custom_call.1} parent=5 // pred_check
        _
      $region10: #{tpu_custom_call.1} parent=5 // pred_check_branch
        %190 = sbr.rel (%p187) target = $region12
      $region11: #{tpu_custom_call.1} parent=5 // pred_region
        %s191 = ssub.s32 %s20, 1
        // Predicated region
        $region13: #{tpu_custom_call.1} parent=11 // pred_check
          %p192 = pneg %p41
        $region14: #{tpu_custom_call.1} parent=11 // pred_check_branch
          %194 = sbr.rel (%p192) target = $region16
        $region15: #{tpu_custom_call.1} parent=11 // pred_region
          _
        $region16: #{tpu_custom_call.1} parent=11 // pred_fallthru
          _
        // Predicated region
        $region17: #{tpu_custom_call.1} parent=11 // pred_check
          %p195 = pneg %p88
        $region18: #{tpu_custom_call.1} parent=11 // pred_check_branch
          %197 = sbr.rel (%p195) target = $region20
        $region19: #{tpu_custom_call.1} parent=11 // pred_region
          %s199 = ssub.s32 9216, 9216
          %200 = vsyncadd [#allocation7], %s199
          %s201 = sshll.u32 [#allocation6], 4
          %s202 = int_to_ptr.vmem [resolvable:$true] %s201
          %207 = dma.hbm_to_vmem [thread:$0]  %s2, 9216, %s202, [#allocation7], 64, 64, 4
        $region20: #{tpu_custom_call.1} parent=11 // pred_fallthru
          _
        // Predicated region
        $region21: #{tpu_custom_call.1} parent=11 // pred_check
          %p208 = pneg %p109
        $region22: #{tpu_custom_call.1} parent=11 // pred_check_branch
          %210 = sbr.rel (%p208) target = $region24
        $region23: #{tpu_custom_call.1} parent=11 // pred_region
          _
        $region24: #{tpu_custom_call.1} parent=11 // pred_fallthru
          _
        // Predicated region
        $region25: #{tpu_custom_call.1} parent=11 // pred_check
          %p211 = pneg %p130
        $region26: #{tpu_custom_call.1} parent=11 // pred_check_branch
          %213 = sbr.rel (%p211) target = $region28
        $region27: #{tpu_custom_call.1} parent=11 // pred_region
          %s215 = ssub.s32 9216, 9216
          %216 = vsyncadd [#allocation7], %s215
          %s217 = sshll.u32 [#allocation8], 4
          %s218 = int_to_ptr.vmem [resolvable:$true] %s217
          %223 = dma.hbm_to_vmem [thread:$0]  %s4, 9216, %s218, [#allocation7], 64, 64, 4
        $region28: #{tpu_custom_call.1} parent=11 // pred_fallthru
          _
        // Predicated region
        $region29: #{tpu_custom_call.1} parent=11 // pred_check
          %p224 = pneg %p151
        $region30: #{tpu_custom_call.1} parent=11 // pred_check_branch
          %226 = sbr.rel (%p224) target = $region32
        $region31: #{tpu_custom_call.1} parent=11 // pred_region
          _
        $region32: #{tpu_custom_call.1} parent=11 // pred_fallthru
          _
      $region12: #{tpu_custom_call.1} parent=5 // pred_fallthru
        _
      %p227 = scmp.lt.s32.totalorder %s20, 2
      // Predicated region
      $region33: #{tpu_custom_call.1} parent=5 // pred_check
        %p228 = pneg %p227
      $region34: #{tpu_custom_call.1} parent=5 // pred_check_branch
        %230 = sbr.rel (%p228) target = $region36
      $region35: #{tpu_custom_call.1} parent=5 // pred_region
        // Predicated region
        $region37: #{tpu_custom_call.1} parent=35 // pred_check
          %p231 = pneg %p61
        $region38: #{tpu_custom_call.1} parent=35 // pred_check_branch
          %233 = sbr.rel (%p231) target = $region40
        $region39: #{tpu_custom_call.1} parent=35 // pred_region
          %s234 = sand.u32 %s51, 1
          %s235 = scalar_lea.sflag [#allocation4], %s234
          %s236 = sand.u32 %s51, 1
          %s237 = smul.addr %s236, 256
          %s238 = scalar_lea.vmem [#allocation3], %s237
          %s240 = ssub.s32 4096, 4096
          %241 = vsyncadd %s235, %s240
          %s242 = smul.addr %s20, 32
          %s243 = smul.addr %s242, 128
          %s244 = scalar_lea.hbm %s1, %s243
          %s245 = sshll.u32 %s238, 4
          %s246 = int_to_ptr.vmem [resolvable:$true] %s245
          %251 = dma.hbm_to_vmem [thread:$0]  %s244, 4096, %s246, %s235, 128, 128, 8
        $region40: #{tpu_custom_call.1} parent=35 // pred_fallthru
          _
      $region36: #{tpu_custom_call.1} parent=5 // pred_fallthru
        _
      %p252 = scmp.le.s32.totalorder 1, %s20
      %p253 = scmp.lt.s32.totalorder %s20, 3
      %p254 = pnand %p252, %p253
      %p255 = pneg %p254
      // Predicated region
      $region41: #{tpu_custom_call.1} parent=5 // pred_check
        _
      $region42: #{tpu_custom_call.1} parent=5 // pred_check_branch
        %257 = sbr.rel (%p254) target = $region44
      $region43: #{tpu_custom_call.1} parent=5 // pred_region
        %s258 = ssub.s32 %s20, 1
        %s259 = sand.u32 %s54, 1
        %s260 = scalar_lea.sflag [#allocation4], %s259
        %s261 = sand.u32 %s54, 1
        %s262 = smul.addr %s261, 256
        %s263 = scalar_lea.vmem [#allocation3], %s262
        // Predicated region
        $region45: #{tpu_custom_call.1} parent=43 // pred_check
          %p264 = pneg %p67
        $region46: #{tpu_custom_call.1} parent=43 // pred_check_branch
          %266 = sbr.rel (%p264) target = $region48
        $region47: #{tpu_custom_call.1} parent=43 // pred_region
          %267 = dma.done %s260, 4096
        $region48: #{tpu_custom_call.1} parent=43 // pred_fallthru
          _
        // Predicated region
        $region49: #{tpu_custom_call.1} parent=43 // pred_check
          %p268 = pneg %p88
        $region50: #{tpu_custom_call.1} parent=43 // pred_check_branch
          %270 = sbr.rel (%p268) target = $region52
        $region51: #{tpu_custom_call.1} parent=43 // pred_region
          %271 = dma.done [#allocation7], 9216
        $region52: #{tpu_custom_call.1} parent=43 // pred_fallthru
          _
        // Predicated region
        $region53: #{tpu_custom_call.1} parent=43 // pred_check
          %p272 = pneg %p130
        $region54: #{tpu_custom_call.1} parent=43 // pred_check_branch
          %274 = sbr.rel (%p272) target = $region56
        $region55: #{tpu_custom_call.1} parent=43 // pred_region
          %275 = dma.done [#allocation7], 9216
        $region56: #{tpu_custom_call.1} parent=43 // pred_fallthru
          _
        %p276 = pneg %p41
        %p277 = pneg %p38
        %s278 = sand.u32 %s54, 1
        %s279 = scalar_lea.sflag [#allocation4], %s278
        %s280 = sand.u32 %s54, 1
        %s281 = smul.addr %s280, 256
        %s282 = scalar_lea.vmem [#allocation3], %s281
        %p283 = pneg %p67
        %p284 = pneg %p64
        %p285 = pneg %p88
        %p286 = pneg %p85
        %p287 = pneg %p109
        %p288 = pneg %p106
        %p289 = pneg %p130
        %p290 = pneg %p127
        %p291 = pneg %p151
        %p292 = pneg %p148
        %p293 = pneg %p177
        %p294 = pneg %p174
        %s295 = sand.u32 %s164, 1
        %s296 = scalar_lea.sflag [#allocation5], %s295
        %s297 = sand.u32 %s164, 1
        %s298 = smul.addr %s297, 256
        %s299 = scalar_lea.vmem [#allocation9], %s298
        %s301 = sld [smem:[#allocation2]]
        %v302 = vld [vmem:[%s263] sm:$0xff]
        %v303 = vld [vmem:[%s263 + $0x8] sm:$0xff]
        %v304 = vld [vmem:[%s263 + $0x10] sm:$0xff]
        %v305 = vld [vmem:[%s263 + $0x18] sm:$0xff]
        %v306 = vld [vmem:[%s263 + $0x20] sm:$0xff]
        %v307 = vld [vmem:[%s263 + $0x28] sm:$0xff]
        %v308 = vld [vmem:[%s263 + $0x30] sm:$0xff]
        %v309 = vld [vmem:[%s263 + $0x38] sm:$0xff]
        %v310 = vld [vmem:[%s263 + $0x40] sm:$0xff]
        %v311 = vld [vmem:[%s263 + $0x48] sm:$0xff]
        %v312 = vld [vmem:[%s263 + $0x50] sm:$0xff]
        %v313 = vld [vmem:[%s263 + $0x58] sm:$0xff]
        %v314 = vld [vmem:[%s263 + $0x60] sm:$0xff]
        %v315 = vld [vmem:[%s263 + $0x68] sm:$0xff]
        %v316 = vld [vmem:[%s263 + $0x70] sm:$0xff]
        %v317 = vld [vmem:[%s263 + $0x78] sm:$0xff]
        %v318 = vld [vmem:[%s263 + $0x80] sm:$0xff]
        %v319 = vld [vmem:[%s263 + $0x88] sm:$0xff]
        %v320 = vld [vmem:[%s263 + $0x90] sm:$0xff]
        %v321 = vld [vmem:[%s263 + $0x98] sm:$0xff]
        %v322 = vld [vmem:[%s263 + $0xa0] sm:$0xff]
        %v323 = vld [vmem:[%s263 + $0xa8] sm:$0xff]
        %v324 = vld [vmem:[%s263 + $0xb0] sm:$0xff]
        %v325 = vld [vmem:[%s263 + $0xb8] sm:$0xff]
        %v326 = vld [vmem:[%s263 + $0xc0] sm:$0xff]
        %v327 = vld [vmem:[%s263 + $0xc8] sm:$0xff]
        %v328 = vld [vmem:[%s263 + $0xd0] sm:$0xff]
        %v329 = vld [vmem:[%s263 + $0xd8] sm:$0xff]
        %v330 = vld [vmem:[%s263 + $0xe0] sm:$0xff]
        %v331 = vld [vmem:[%s263 + $0xe8] sm:$0xff]
        %v332 = vld [vmem:[%s263 + $0xf0] sm:$0xff]
        %v333 = vld [vmem:[%s263 + $0xf8] sm:$0xff]
        %v334 = vpack.c.bf16 %v303, %v302
        %v335 = vpack.c.bf16 %v305, %v304
        %v336 = vpack.c.bf16 %v307, %v306
        %v337 = vpack.c.bf16 %v309, %v308
        %v338 = vpack.c.bf16 %v311, %v310
        %v339 = vpack.c.bf16 %v313, %v312
        %v340 = vpack.c.bf16 %v315, %v314
        %v341 = vpack.c.bf16 %v317, %v316
        %v342 = vpack.c.bf16 %v319, %v318
        %v343 = vpack.c.bf16 %v321, %v320
        %v344 = vpack.c.bf16 %v323, %v322
        %v345 = vpack.c.bf16 %v325, %v324
        %v346 = vpack.c.bf16 %v327, %v326
        %v347 = vpack.c.bf16 %v329, %v328
        %v348 = vpack.c.bf16 %v331, %v330
        %v349 = vpack.c.bf16 %v333, %v332
        %v351 = vshrl.u32 %v335, 16
        %v354 = vshrl.u32 %v334, 16
        %v357 = vshrl.u32 %v336, 16
        %v360 = vshrl.u32 %v337, 16
        %v363 = vshrl.u32 %v338, 16
        %v366 = vshrl.u32 %v339, 16
        %v369 = vshrl.u32 %v340, 16
        %v372 = vshrl.u32 %v341, 16
        %v375 = vshrl.u32 %v342, 16
        %v378 = vshrl.u32 %v343, 16
        %v381 = vshrl.u32 %v344, 16
        %v384 = vshrl.u32 %v345, 16
        %v387 = vshrl.u32 %v346, 16
        %v390 = vshrl.u32 %v347, 16
        %v393 = vshrl.u32 %v348, 16
        %v396 = vshrl.u32 %v349, 16
        %v414 = vrot.slane %v351, 7
        %v415 = vshll.u32 %v335, 16
        %v417 = vor.u32 %v414, %v415
        %v418 = vrot.slane %v354, 7
        %v419 = vshll.u32 %v334, 16
        %v421 = vor.u32 %v418, %v419
        %v422 = vrot.slane %v357, 7
        %v423 = vshll.u32 %v336, 16
        %v425 = vor.u32 %v422, %v423
        %v426 = vrot.slane %v360, 7
        %v427 = vshll.u32 %v337, 16
        %v429 = vor.u32 %v426, %v427
        %v430 = vrot.slane %v363, 7
        %v431 = vshll.u32 %v338, 16
        %v433 = vor.u32 %v430, %v431
        %v434 = vrot.slane %v366, 7
        %v435 = vshll.u32 %v339, 16
        %v437 = vor.u32 %v434, %v435
        %v438 = vrot.slane %v369, 7
        %v439 = vshll.u32 %v340, 16
        %v441 = vor.u32 %v438, %v439
        %v442 = vrot.slane %v372, 7
        %v443 = vshll.u32 %v341, 16
        %v445 = vor.u32 %v442, %v443
        %v446 = vrot.slane %v375, 7
        %v447 = vshll.u32 %v342, 16
        %v449 = vor.u32 %v446, %v447
        %v450 = vrot.slane %v378, 7
        %v451 = vshll.u32 %v343, 16
        %v453 = vor.u32 %v450, %v451
        %v454 = vrot.slane %v381, 7
        %v455 = vshll.u32 %v344, 16
        %v457 = vor.u32 %v454, %v455
        %v458 = vrot.slane %v384, 7
        %v459 = vshll.u32 %v345, 16
        %v461 = vor.u32 %v458, %v459
        %v462 = vrot.slane %v387, 7
        %v463 = vshll.u32 %v346, 16
        %v465 = vor.u32 %v462, %v463
        %v466 = vrot.slane %v390, 7
        %v467 = vshll.u32 %v347, 16
        %v469 = vor.u32 %v466, %v467
        %v470 = vrot.slane %v393, 7
        %v471 = vshll.u32 %v348, 16
        %v473 = vor.u32 %v470, %v471
        %v474 = vrot.slane %v396, 7
        %v475 = vshll.u32 %v349, 16
        %v477 = vor.u32 %v474, %v475
        %v510 = vrot.slane %v415, 7
        %v511 = vrot.slane %v419, 7
        %v512 = vrot.slane %v423, 7
        %v513 = vrot.slane %v427, 7
        %v514 = vrot.slane %v431, 7
        %v515 = vrot.slane %v435, 7
        %v516 = vrot.slane %v439, 7
        %v517 = vrot.slane %v443, 7
        %v518 = vrot.slane %v447, 7
        %v519 = vrot.slane %v451, 7
        %v520 = vrot.slane %v455, 7
        %v521 = vrot.slane %v459, 7
        %v522 = vrot.slane %v463, 7
        %v523 = vrot.slane %v467, 7
        %v524 = vrot.slane %v471, 7
        %v525 = vrot.slane %v475, 7
        %vm542 = vcmask 1040384
        %vm543 = vsmask.f32 256
        %vm544 = vmand %vm542, %vm543
        %v545 = vsel %vm544, %v351, %v417
        %v546 = vsel %vm544, %v354, %v421
        %v547 = vsel %vm544, %v357, %v425
        %v548 = vsel %vm544, %v360, %v429
        %v549 = vsel %vm544, %v363, %v433
        %v550 = vsel %vm544, %v366, %v437
        %v551 = vsel %vm544, %v369, %v441
        %v552 = vsel %vm544, %v372, %v445
        %v553 = vsel %vm544, %v375, %v449
        %v554 = vsel %vm544, %v378, %v453
        %v555 = vsel %vm544, %v381, %v457
        %v556 = vsel %vm544, %v384, %v461
        %v557 = vsel %vm544, %v387, %v465
        %v558 = vsel %vm544, %v390, %v469
        %v559 = vsel %vm544, %v393, %v473
        %v560 = vsel %vm544, %v396, %v477
        %v561 = vsel %vm544, %v414, %v510
        %v562 = vsel %vm544, %v418, %v511
        %v563 = vsel %vm544, %v422, %v512
        %v564 = vsel %vm544, %v426, %v513
        %v565 = vsel %vm544, %v430, %v514
        %v566 = vsel %vm544, %v434, %v515
        %v567 = vsel %vm544, %v438, %v516
        %v568 = vsel %vm544, %v442, %v517
        %v569 = vsel %vm544, %v446, %v518
        %v570 = vsel %vm544, %v450, %v519
        %v571 = vsel %vm544, %v454, %v520
        %v572 = vsel %vm544, %v458, %v521
        %v573 = vsel %vm544, %v462, %v522
        %v574 = vsel %vm544, %v466, %v523
        %v575 = vsel %vm544, %v470, %v524
        %v576 = vsel %vm544, %v474, %v525
        %vm577 = vsmask.f32 7424
        %v579 = vshrl.u32 %v545, 16
        %v581 = vshll.u32 %v545, 16
        %v583 = vrot.slane %v581, 1
        %v584 = vor.u32 %v579, %v583
        %v586 = vshll.u32 %v561, 16
        %v588 = vrot.slane %v586, 1
        %v589 = vsel %vm577, %v584, %v588
        %v591 = vshrl.u32 %v546, 16
        %v593 = vshll.u32 %v546, 16
        %v595 = vrot.slane %v593, 1
        %v596 = vor.u32 %v591, %v595
        %v598 = vshll.u32 %v562, 16
        %v600 = vrot.slane %v598, 1
        %v601 = vsel %vm577, %v596, %v600
        %v603 = vshrl.u32 %v547, 16
        %v605 = vshll.u32 %v547, 16
        %v607 = vrot.slane %v605, 1
        %v608 = vor.u32 %v603, %v607
        %v610 = vshll.u32 %v563, 16
        %v612 = vrot.slane %v610, 1
        %v613 = vsel %vm577, %v608, %v612
        %v615 = vshrl.u32 %v548, 16
        %v617 = vshll.u32 %v548, 16
        %v619 = vrot.slane %v617, 1
        %v620 = vor.u32 %v615, %v619
        %v622 = vshll.u32 %v564, 16
        %v624 = vrot.slane %v622, 1
        %v625 = vsel %vm577, %v620, %v624
        %v627 = vshrl.u32 %v549, 16
        %v629 = vshll.u32 %v549, 16
        %v631 = vrot.slane %v629, 1
        %v632 = vor.u32 %v627, %v631
        %v634 = vshll.u32 %v565, 16
        %v636 = vrot.slane %v634, 1
        %v637 = vsel %vm577, %v632, %v636
        %v639 = vshrl.u32 %v550, 16
        %v641 = vshll.u32 %v550, 16
        %v643 = vrot.slane %v641, 1
        %v644 = vor.u32 %v639, %v643
        %v646 = vshll.u32 %v566, 16
        %v648 = vrot.slane %v646, 1
        %v649 = vsel %vm577, %v644, %v648
        %v651 = vshrl.u32 %v551, 16
        %v653 = vshll.u32 %v551, 16
        %v655 = vrot.slane %v653, 1
        %v656 = vor.u32 %v651, %v655
        %v658 = vshll.u32 %v567, 16
        %v660 = vrot.slane %v658, 1
        %v661 = vsel %vm577, %v656, %v660
        %v663 = vshrl.u32 %v552, 16
        %v665 = vshll.u32 %v552, 16
        %v667 = vrot.slane %v665, 1
        %v668 = vor.u32 %v663, %v667
        %v670 = vshll.u32 %v568, 16
        %v672 = vrot.slane %v670, 1
        %v673 = vsel %vm577, %v668, %v672
        %v675 = vshrl.u32 %v553, 16
        %v677 = vshll.u32 %v553, 16
        %v679 = vrot.slane %v677, 1
        %v680 = vor.u32 %v675, %v679
        %v682 = vshll.u32 %v569, 16
        %v684 = vrot.slane %v682, 1
        %v685 = vsel %vm577, %v680, %v684
        %v687 = vshrl.u32 %v554, 16
        %v689 = vshll.u32 %v554, 16
        %v691 = vrot.slane %v689, 1
        %v692 = vor.u32 %v687, %v691
        %v694 = vshll.u32 %v570, 16
        %v696 = vrot.slane %v694, 1
        %v697 = vsel %vm577, %v692, %v696
        %v699 = vshrl.u32 %v555, 16
        %v701 = vshll.u32 %v555, 16
        %v703 = vrot.slane %v701, 1
        %v704 = vor.u32 %v699, %v703
        %v706 = vshll.u32 %v571, 16
        %v708 = vrot.slane %v706, 1
        %v709 = vsel %vm577, %v704, %v708
        %v711 = vshrl.u32 %v556, 16
        %v713 = vshll.u32 %v556, 16
        %v715 = vrot.slane %v713, 1
        %v716 = vor.u32 %v711, %v715
        %v718 = vshll.u32 %v572, 16
        %v720 = vrot.slane %v718, 1
        %v721 = vsel %vm577, %v716, %v720
        %v723 = vshrl.u32 %v557, 16
        %v725 = vshll.u32 %v557, 16
        %v727 = vrot.slane %v725, 1
        %v728 = vor.u32 %v723, %v727
        %v730 = vshll.u32 %v573, 16
        %v732 = vrot.slane %v730, 1
        %v733 = vsel %vm577, %v728, %v732
        %v735 = vshrl.u32 %v558, 16
        %v737 = vshll.u32 %v558, 16
        %v739 = vrot.slane %v737, 1
        %v740 = vor.u32 %v735, %v739
        %v742 = vshll.u32 %v574, 16
        %v744 = vrot.slane %v742, 1
        %v745 = vsel %vm577, %v740, %v744
        %v747 = vshrl.u32 %v559, 16
        %v749 = vshll.u32 %v559, 16
        %v751 = vrot.slane %v749, 1
        %v752 = vor.u32 %v747, %v751
        %v754 = vshll.u32 %v575, 16
        %v756 = vrot.slane %v754, 1
        %v757 = vsel %vm577, %v752, %v756
        %v759 = vshrl.u32 %v560, 16
        %v761 = vshll.u32 %v560, 16
        %v763 = vrot.slane %v761, 1
        %v764 = vor.u32 %v759, %v763
        %v766 = vshll.u32 %v576, 16
        %v768 = vrot.slane %v766, 1
        %v769 = vsel %vm577, %v764, %v768
        %vm818 = vcmask 1046528
        %v819 = vrot.slane %v545, 1
        %v820 = vrot.slane %v561, 1
        %v821 = vsel %vm818, %v819, %v820
        %v822 = vrot.slane %v546, 1
        %v823 = vrot.slane %v562, 1
        %v824 = vsel %vm818, %v822, %v823
        %v825 = vrot.slane %v547, 1
        %v826 = vrot.slane %v563, 1
        %v827 = vsel %vm818, %v825, %v826
        %v828 = vrot.slane %v548, 1
        %v829 = vrot.slane %v564, 1
        %v830 = vsel %vm818, %v828, %v829
        %v831 = vrot.slane %v549, 1
        %v832 = vrot.slane %v565, 1
        %v833 = vsel %vm818, %v831, %v832
        %v834 = vrot.slane %v550, 1
        %v835 = vrot.slane %v566, 1
        %v836 = vsel %vm818, %v834, %v835
        %v837 = vrot.slane %v551, 1
        %v838 = vrot.slane %v567, 1
        %v839 = vsel %vm818, %v837, %v838
        %v840 = vrot.slane %v552, 1
        %v841 = vrot.slane %v568, 1
        %v842 = vsel %vm818, %v840, %v841
        %v843 = vrot.slane %v553, 1
        %v844 = vrot.slane %v569, 1
        %v845 = vsel %vm818, %v843, %v844
        %v846 = vrot.slane %v554, 1
        %v847 = vrot.slane %v570, 1
        %v848 = vsel %vm818, %v846, %v847
        %v849 = vrot.slane %v555, 1
        %v850 = vrot.slane %v571, 1
        %v851 = vsel %vm818, %v849, %v850
        %v852 = vrot.slane %v556, 1
        %v853 = vrot.slane %v572, 1
        %v854 = vsel %vm818, %v852, %v853
        %v855 = vrot.slane %v557, 1
        %v856 = vrot.slane %v573, 1
        %v857 = vsel %vm818, %v855, %v856
        %v858 = vrot.slane %v558, 1
        %v859 = vrot.slane %v574, 1
        %v860 = vsel %vm818, %v858, %v859
        %v861 = vrot.slane %v559, 1
        %v862 = vrot.slane %v575, 1
        %v863 = vsel %vm818, %v861, %v862
        %v864 = vrot.slane %v560, 1
        %v865 = vrot.slane %v576, 1
        %v866 = vsel %vm818, %v864, %v865
        %v883 = vld [vmem:[#allocation6] sm:$0xf]
        %v884 = vld [vmem:[#allocation6 + $0x4] sm:$0xf]
        %v885 = vld [vmem:[#allocation6 + $0x8] sm:$0xf]
        %v886 = vld [vmem:[#allocation6 + $0xc] sm:$0xf]
        %v887 = vld [vmem:[#allocation6 + $0x10] sm:$0xf]
        %v888 = vld [vmem:[#allocation6 + $0x14] sm:$0xf]
        %v889 = vld [vmem:[#allocation6 + $0x18] sm:$0xf]
        %v890 = vld [vmem:[#allocation6 + $0x1c] sm:$0xf]
        %v891 = vld [vmem:[#allocation6 + $0x20] sm:$0xf]
        %v892 = vld [vmem:[#allocation6 + $0x24] sm:$0xf]
        %v893 = vld [vmem:[#allocation6 + $0x28] sm:$0xf]
        %v894 = vld [vmem:[#allocation6 + $0x2c] sm:$0xf]
        %v895 = vld [vmem:[#allocation6 + $0x30] sm:$0xf]
        %v896 = vld [vmem:[#allocation6 + $0x34] sm:$0xf]
        %v897 = vld [vmem:[#allocation6 + $0x38] sm:$0xf]
        %v898 = vld [vmem:[#allocation6 + $0x3c] sm:$0xf]
        %v899 = vld [vmem:[#allocation6 + $0x40] sm:$0xf]
        %v900 = vld [vmem:[#allocation6 + $0x44] sm:$0xf]
        %v901 = vld [vmem:[#allocation6 + $0x48] sm:$0xf]
        %v902 = vld [vmem:[#allocation6 + $0x4c] sm:$0xf]
        %v903 = vld [vmem:[#allocation6 + $0x50] sm:$0xf]
        %v904 = vld [vmem:[#allocation6 + $0x54] sm:$0xf]
        %v905 = vld [vmem:[#allocation6 + $0x58] sm:$0xf]
        %v906 = vld [vmem:[#allocation6 + $0x5c] sm:$0xf]
        %v907 = vld [vmem:[#allocation6 + $0x60] sm:$0xf]
        %v908 = vld [vmem:[#allocation6 + $0x64] sm:$0xf]
        %v909 = vld [vmem:[#allocation6 + $0x68] sm:$0xf]
        %v910 = vld [vmem:[#allocation6 + $0x6c] sm:$0xf]
        %v911 = vld [vmem:[#allocation6 + $0x70] sm:$0xf]
        %v912 = vld [vmem:[#allocation6 + $0x74] sm:$0xf]
        %v913 = vld [vmem:[#allocation6 + $0x78] sm:$0xf]
        %v914 = vld [vmem:[#allocation6 + $0x7c] sm:$0xf]
        %v915 = vld [vmem:[#allocation6 + $0x80] sm:$0xf]
        %v916 = vld [vmem:[#allocation6 + $0x84] sm:$0xf]
        %v917 = vld [vmem:[#allocation6 + $0x88] sm:$0xf]
        %v918 = vld [vmem:[#allocation6 + $0x8c] sm:$0xf]
        %v919 = vld [vmem:[#allocation6 + $0x90] sm:$0xf]
        %v920 = vld [vmem:[#allocation6 + $0x94] sm:$0xf]
        %v921 = vld [vmem:[#allocation6 + $0x98] sm:$0xf]
        %v922 = vld [vmem:[#allocation6 + $0x9c] sm:$0xf]
        %v923 = vld [vmem:[#allocation6 + $0xa0] sm:$0xf]
        %v924 = vld [vmem:[#allocation6 + $0xa4] sm:$0xf]
        %v925 = vld [vmem:[#allocation6 + $0xa8] sm:$0xf]
        %v926 = vld [vmem:[#allocation6 + $0xac] sm:$0xf]
        %v927 = vld [vmem:[#allocation6 + $0xb0] sm:$0xf]
        %v928 = vld [vmem:[#allocation6 + $0xb4] sm:$0xf]
        %v929 = vld [vmem:[#allocation6 + $0xb8] sm:$0xf]
        %v930 = vld [vmem:[#allocation6 + $0xbc] sm:$0xf]
        %v931 = vld [vmem:[%s3] sm:$0x1]
        %v933 = vlaneseq
        %v934 = vshrl.u32 %v933, 7
        %v935 = vsub.s32 0, %v934
        %v936 = vrot.slane %v931, %v935
        %v986 = vunpack.c.l.b16 %v883
        %v987 = vunpack.c.l.b16 %v884
        %v988 = vunpack.c.l.b16 %v885
        %v989 = vunpack.c.l.b16 %v886
        %v990 = vunpack.c.l.b16 %v887
        %v991 = vunpack.c.l.b16 %v888
        %v992 = vunpack.c.l.b16 %v889
        %v993 = vunpack.c.l.b16 %v890
        %v994 = vunpack.c.l.b16 %v891
        %v995 = vunpack.c.l.b16 %v892
        %v996 = vunpack.c.l.b16 %v893
        %v997 = vunpack.c.l.b16 %v894
        %v998 = vunpack.c.l.b16 %v895
        %v999 = vunpack.c.l.b16 %v896
        %v1000 = vunpack.c.l.b16 %v897
        %v1001 = vunpack.c.l.b16 %v898
        %v1002 = vunpack.c.l.b16 %v899
        %v1003 = vunpack.c.l.b16 %v900
        %v1004 = vunpack.c.l.b16 %v901
        %v1005 = vunpack.c.l.b16 %v902
        %v1006 = vunpack.c.l.b16 %v903
        %v1007 = vunpack.c.l.b16 %v904
        %v1008 = vunpack.c.l.b16 %v905
        %v1009 = vunpack.c.l.b16 %v906
        %v1010 = vunpack.c.l.b16 %v907
        %v1011 = vunpack.c.l.b16 %v908
        %v1012 = vunpack.c.l.b16 %v909
        %v1013 = vunpack.c.l.b16 %v910
        %v1014 = vunpack.c.l.b16 %v911
        %v1015 = vunpack.c.l.b16 %v912
        %v1016 = vunpack.c.l.b16 %v913
        %v1017 = vunpack.c.l.b16 %v914
        %v1018 = vunpack.c.l.b16 %v915
        %v1019 = vunpack.c.l.b16 %v916
        %v1020 = vunpack.c.l.b16 %v917
        %v1021 = vunpack.c.l.b16 %v918
        %v1022 = vunpack.c.l.b16 %v919
        %v1023 = vunpack.c.l.b16 %v920
        %v1024 = vunpack.c.l.b16 %v921
        %v1025 = vunpack.c.l.b16 %v922
        %v1026 = vunpack.c.l.b16 %v923
        %v1027 = vunpack.c.l.b16 %v924
        %v1028 = vunpack.c.l.b16 %v925
        %v1029 = vunpack.c.l.b16 %v926
        %v1030 = vunpack.c.l.b16 %v927
        %v1031 = vunpack.c.l.b16 %v928
        %v1032 = vunpack.c.l.b16 %v929
        %v1033 = vunpack.c.l.b16 %v930
        %v1034 = vpack.c.b16 %v987, %v986
        %v1035 = vpack.c.b16 %v989, %v988
        %v1036 = vpack.c.b16 %v991, %v990
        %v1037 = vpack.c.b16 %v993, %v992
        %v1038 = vpack.c.b16 %v995, %v994
        %v1039 = vpack.c.b16 %v997, %v996
        %v1040 = vpack.c.b16 %v999, %v998
        %v1041 = vpack.c.b16 %v1001, %v1000
        %v1042 = vpack.c.b16 %v1003, %v1002
        %v1043 = vpack.c.b16 %v1005, %v1004
        %v1044 = vpack.c.b16 %v1007, %v1006
        %v1045 = vpack.c.b16 %v1009, %v1008
        %v1046 = vpack.c.b16 %v1011, %v1010
        %v1047 = vpack.c.b16 %v1013, %v1012
        %v1048 = vpack.c.b16 %v1015, %v1014
        %v1049 = vpack.c.b16 %v1017, %v1016
        %v1050 = vpack.c.b16 %v1019, %v1018
        %v1051 = vpack.c.b16 %v1021, %v1020
        %v1052 = vpack.c.b16 %v1023, %v1022
        %v1053 = vpack.c.b16 %v1025, %v1024
        %v1054 = vpack.c.b16 %v1027, %v1026
        %v1055 = vpack.c.b16 %v1029, %v1028
        %v1056 = vpack.c.b16 %v1031, %v1030
        %v1057 = vpack.c.b16 %v1033, %v1032
        %1082 = vmatprep.subr.bf16.mxu0 0
        %1083 = vmatpush1.bf16.msra.mxu0 %v1041
        %1084 = vmatprep.subr.bf16.mxu0 0
        %1085 = vmatpush1.bf16.msra.mxu0 %v1040
        %1086 = vmatprep.subr.bf16.mxu0 0
        %1087 = vmatpush1.bf16.msra.mxu0 %v1039
        %1088 = vmatprep.subr.bf16.mxu0 0
        %1089 = vmatpush1.bf16.msra.mxu0 %v1038
        %1090 = vmatprep.subr.bf16.mxu0 0
        %1091 = vmatpush1.bf16.msra.mxu0 %v1037
        %1092 = vmatprep.subr.bf16.mxu0 0
        %1093 = vmatpush1.bf16.msra.mxu0 %v1036
        %1094 = vmatprep.subr.bf16.mxu0 0
        %1095 = vmatpush1.bf16.msra.mxu0 %v1035
        %1096 = vmatprep.subr.bf16.mxu0 0
        %1097 = vmatpush1.bf16.msra.mxu0 %v1034
        %1098 = vmatprep.subr.bf16.mxu0 0
        %1099 = vmatpush2.bf16.msra.mxu0 %v1049
        %1100 = vmatprep.subr.bf16.mxu0 0
        %1101 = vmatpush2.bf16.msra.mxu0 %v1048
        %1102 = vmatprep.subr.bf16.mxu0 0
        %1103 = vmatpush2.bf16.msra.mxu0 %v1047
        %1104 = vmatprep.subr.bf16.mxu0 0
        %1105 = vmatpush2.bf16.msra.mxu0 %v1046
        %1106 = vmatprep.subr.bf16.mxu0 0
        %1107 = vmatpush2.bf16.msra.mxu0 %v1045
        %1108 = vmatprep.subr.bf16.mxu0 0
        %1109 = vmatpush2.bf16.msra.mxu0 %v1044
        %1110 = vmatprep.subr.bf16.mxu0 0
        %1111 = vmatpush2.bf16.msra.mxu0 %v1043
        %1112 = vmatprep.subr.bf16.mxu0 0
        %1113 = vmatpush2.bf16.msra.mxu0 %v1042
        %1114 = vmatprep.mubr.bf16.mxu0 %v589
        %1115 = vmatmul.mubr.bf16.gmra.mxu0 %v545
        %v1116 = vpop.f32.mrf.mxu0
        %v1117 = vadd.f32 %v936, %v1116
        %v1118 = vpop.f32.mrf.mxu0
        %v1119 = vpop.f32.mrf.mxu0
        %v1120 = vadd.f32 %v936, %v1119
        %v1121 = vpop.f32.mrf.mxu0
        %1122 = vmatprep.mubr.bf16.mxu0 %v601
        %1123 = vmatmul.mubr.bf16.gmra.mxu0 %v546
        %v1124 = vpop.f32.mrf.mxu0
        %v1125 = vadd.f32 %v936, %v1124
        %v1126 = vpop.f32.mrf.mxu0
        %v1127 = vpop.f32.mrf.mxu0
        %v1128 = vadd.f32 %v936, %v1127
        %v1129 = vpop.f32.mrf.mxu0
        %1130 = vmatprep.mubr.bf16.mxu0 %v589
        %1131 = vmatmul.mubr.bf16.gmra.mxu0 %v545
        %v1132 = vpop.f32.mrf.mxu0
        %v1133 = vadd.f32 %v936, %v1132
        %v1134 = vpop.f32.mrf.mxu0
        %v1135 = vpop.f32.mrf.mxu0
        %v1136 = vadd.f32 %v936, %v1135
        %v1137 = vpop.f32.mrf.mxu0
        %1138 = vmatprep.mubr.bf16.mxu0 %v613
        %1139 = vmatmul.mubr.bf16.gmra.mxu0 %v547
        %v1140 = vpop.f32.mrf.mxu0
        %v1141 = vadd.f32 %v936, %v1140
        %v1142 = vpop.f32.mrf.mxu0
        %v1143 = vpop.f32.mrf.mxu0
        %v1144 = vadd.f32 %v936, %v1143
        %v1145 = vpop.f32.mrf.mxu0
        %1146 = vmatprep.mubr.bf16.mxu0 %v625
        %1147 = vmatmul.mubr.bf16.gmra.mxu0 %v548
        %v1148 = vpop.f32.mrf.mxu0
        %v1149 = vadd.f32 %v936, %v1148
        %v1150 = vpop.f32.mrf.mxu0
        %v1151 = vpop.f32.mrf.mxu0
        %v1152 = vadd.f32 %v936, %v1151
        %v1153 = vpop.f32.mrf.mxu0
        %1154 = vmatprep.mubr.bf16.mxu0 %v637
        %1155 = vmatmul.mubr.bf16.gmra.mxu0 %v549
        %v1156 = vpop.f32.mrf.mxu0
        %v1157 = vadd.f32 %v936, %v1156
        %v1158 = vpop.f32.mrf.mxu0
        %v1159 = vpop.f32.mrf.mxu0
        %v1160 = vadd.f32 %v936, %v1159
        %v1161 = vpop.f32.mrf.mxu0
        %1162 = vmatprep.mubr.bf16.mxu0 %v649
        %1163 = vmatmul.mubr.bf16.gmra.mxu0 %v550
        %v1164 = vpop.f32.mrf.mxu0
        %v1165 = vadd.f32 %v936, %v1164
        %v1166 = vpop.f32.mrf.mxu0
        %v1167 = vpop.f32.mrf.mxu0
        %v1168 = vadd.f32 %v936, %v1167
        %v1169 = vpop.f32.mrf.mxu0
        %1170 = vmatprep.mubr.bf16.mxu0 %v661
        %1171 = vmatmul.mubr.bf16.gmra.mxu0 %v551
        %v1172 = vpop.f32.mrf.mxu0
        %v1173 = vadd.f32 %v936, %v1172
        %v1174 = vpop.f32.mrf.mxu0
        %v1175 = vpop.f32.mrf.mxu0
        %v1176 = vadd.f32 %v936, %v1175
        %v1177 = vpop.f32.mrf.mxu0
        %1178 = vmatprep.mubr.bf16.mxu0 %v673
        %1179 = vmatmul.mubr.bf16.gmra.mxu0 %v552
        %v1180 = vpop.f32.mrf.mxu0
        %v1181 = vadd.f32 %v936, %v1180
        %v1182 = vpop.f32.mrf.mxu0
        %v1183 = vpop.f32.mrf.mxu0
        %v1184 = vadd.f32 %v936, %v1183
        %v1185 = vpop.f32.mrf.mxu0
        %1186 = vmatprep.mubr.bf16.mxu0 %v685
        %1187 = vmatmul.mubr.bf16.gmra.mxu0 %v553
        %v1188 = vpop.f32.mrf.mxu0
        %v1189 = vadd.f32 %v936, %v1188
        %v1190 = vpop.f32.mrf.mxu0
        %v1191 = vpop.f32.mrf.mxu0
        %v1192 = vadd.f32 %v936, %v1191
        %v1193 = vpop.f32.mrf.mxu0
        %1194 = vmatprep.mubr.bf16.mxu0 %v697
        %1195 = vmatmul.mubr.bf16.gmra.mxu0 %v554
        %v1196 = vpop.f32.mrf.mxu0
        %v1197 = vadd.f32 %v936, %v1196
        %v1198 = vpop.f32.mrf.mxu0
        %v1199 = vpop.f32.mrf.mxu0
        %v1200 = vadd.f32 %v936, %v1199
        %v1201 = vpop.f32.mrf.mxu0
        %1202 = vmatprep.mubr.bf16.mxu0 %v709
        %1203 = vmatmul.mubr.bf16.gmra.mxu0 %v555
        %v1204 = vpop.f32.mrf.mxu0
        %v1205 = vadd.f32 %v936, %v1204
        %v1206 = vpop.f32.mrf.mxu0
        %v1207 = vpop.f32.mrf.mxu0
        %v1208 = vadd.f32 %v936, %v1207
        %v1209 = vpop.f32.mrf.mxu0
        %1210 = vmatprep.mubr.bf16.mxu0 %v721
        %1211 = vmatmul.mubr.bf16.gmra.mxu0 %v556
        %v1212 = vpop.f32.mrf.mxu0
        %v1213 = vadd.f32 %v936, %v1212
        %v1214 = vpop.f32.mrf.mxu0
        %v1215 = vpop.f32.mrf.mxu0
        %v1216 = vadd.f32 %v936, %v1215
        %v1217 = vpop.f32.mrf.mxu0
        %1218 = vmatprep.mubr.bf16.mxu0 %v733
        %1219 = vmatmul.mubr.bf16.gmra.mxu0 %v557
        %v1220 = vpop.f32.mrf.mxu0
        %v1221 = vadd.f32 %v936, %v1220
        %v1222 = vpop.f32.mrf.mxu0
        %v1223 = vpop.f32.mrf.mxu0
        %v1224 = vadd.f32 %v936, %v1223
        %v1225 = vpop.f32.mrf.mxu0
        %1226 = vmatprep.mubr.bf16.mxu0 %v745
        %1227 = vmatmul.mubr.bf16.gmra.mxu0 %v558
        %v1228 = vpop.f32.mrf.mxu0
        %v1229 = vadd.f32 %v936, %v1228
        %v1230 = vpop.f32.mrf.mxu0
        %v1231 = vpop.f32.mrf.mxu0
        %v1232 = vadd.f32 %v936, %v1231
        %v1233 = vpop.f32.mrf.mxu0
        %1234 = vmatprep.mubr.bf16.mxu0 %v757
        %1235 = vmatmul.mubr.bf16.gmra.mxu0 %v559
        %v1236 = vpop.f32.mrf.mxu0
        %v1237 = vadd.f32 %v936, %v1236
        %v1238 = vpop.f32.mrf.mxu0
        %v1239 = vpop.f32.mrf.mxu0
        %v1240 = vadd.f32 %v936, %v1239
        %v1241 = vpop.f32.mrf.mxu0
        %1242 = vdwg.mxu0
        %1243 = vmatprep.subr.bf16.mxu0 0
        %1244 = vmatpush1.bf16.msra.mxu0 %v1057
        %1245 = vmatprep.subr.bf16.mxu0 0
        %1246 = vmatpush1.bf16.msra.mxu0 %v1056
        %1247 = vmatprep.subr.bf16.mxu0 0
        %1248 = vmatpush1.bf16.msra.mxu0 %v1055
        %1249 = vmatprep.subr.bf16.mxu0 0
        %1250 = vmatpush1.bf16.msra.mxu0 %v1054
        %1251 = vmatprep.subr.bf16.mxu0 0
        %1252 = vmatpush1.bf16.msra.mxu0 %v1053
        %1253 = vmatprep.subr.bf16.mxu0 0
        %1254 = vmatpush1.bf16.msra.mxu0 %v1052
        %1255 = vmatprep.subr.bf16.mxu0 0
        %1256 = vmatpush1.bf16.msra.mxu0 %v1051
        %1257 = vmatprep.subr.bf16.mxu0 0
        %1258 = vmatpush1.bf16.msra.mxu0 %v1050
        %1259 = vmatprep.subr.bf16.mxu0 0
        %1260 = vmatpush2.bf16.msra.mxu0 0
        %1261 = vmatprep.subr.bf16.mxu0 0
        %1262 = vmatpush2.bf16.msra.mxu0 0
        %1263 = vmatprep.subr.bf16.mxu0 0
        %1264 = vmatpush2.bf16.msra.mxu0 0
        %1265 = vmatprep.subr.bf16.mxu0 0
        %1266 = vmatpush2.bf16.msra.mxu0 0
        %1267 = vmatprep.subr.bf16.mxu0 0
        %1268 = vmatpush2.bf16.msra.mxu0 0
        %1269 = vmatprep.subr.bf16.mxu0 0
        %1270 = vmatpush2.bf16.msra.mxu0 0
        %1271 = vmatprep.subr.bf16.mxu0 0
        %1272 = vmatpush2.bf16.msra.mxu0 0
        %1273 = vmatprep.subr.bf16.mxu0 0
        %1274 = vmatpush2.bf16.msra.mxu0 0
        %1275 = vmatprep.mubr.bf16.mxu0 0
        %1276 = vmatmul.mubr.bf16.gmra.mxu0 %v821
        %v1277 = vpop.f32.mrf.mxu0
        %v1278 = vadd.f32 %v1117, %v1277
        %v1279 = vpop.f32.mrf.mxu0
        %v1280 = vpop.f32.mrf.mxu0
        %v1281 = vadd.f32 %v1120, %v1280
        %v1282 = vpop.f32.mrf.mxu0
        %1283 = vmatprep.mubr.bf16.mxu0 0
        %1284 = vmatmul.mubr.bf16.gmra.mxu0 %v824
        %v1285 = vpop.f32.mrf.mxu0
        %v1286 = vadd.f32 %v1125, %v1285
        %v1287 = vpop.f32.mrf.mxu0
        %v1288 = vpop.f32.mrf.mxu0
        %v1289 = vadd.f32 %v1128, %v1288
        %v1290 = vpop.f32.mrf.mxu0
        %1291 = vmatprep.mubr.bf16.mxu0 0
        %1292 = vmatmul.mubr.bf16.gmra.mxu0 %v821
        %v1293 = vpop.f32.mrf.mxu0
        %v1294 = vadd.f32 %v1133, %v1293
        %v1295 = vpop.f32.mrf.mxu0
        %v1296 = vpop.f32.mrf.mxu0
        %v1297 = vadd.f32 %v1136, %v1296
        %v1298 = vpop.f32.mrf.mxu0
        %1299 = vmatprep.mubr.bf16.mxu0 0
        %1300 = vmatmul.mubr.bf16.gmra.mxu0 %v827
        %v1301 = vpop.f32.mrf.mxu0
        %v1302 = vadd.f32 %v1141, %v1301
        %v1303 = vpop.f32.mrf.mxu0
        %v1304 = vpop.f32.mrf.mxu0
        %v1305 = vadd.f32 %v1144, %v1304
        %v1306 = vpop.f32.mrf.mxu0
        %1307 = vmatprep.mubr.bf16.mxu0 0
        %1308 = vmatmul.mubr.bf16.gmra.mxu0 %v830
        %v1309 = vpop.f32.mrf.mxu0
        %v1310 = vadd.f32 %v1149, %v1309
        %v1311 = vpop.f32.mrf.mxu0
        %v1312 = vpop.f32.mrf.mxu0
        %v1313 = vadd.f32 %v1152, %v1312
        %v1314 = vpop.f32.mrf.mxu0
        %1315 = vmatprep.mubr.bf16.mxu0 0
        %1316 = vmatmul.mubr.bf16.gmra.mxu0 %v833
        %v1317 = vpop.f32.mrf.mxu0
        %v1318 = vadd.f32 %v1157, %v1317
        %v1319 = vpop.f32.mrf.mxu0
        %v1320 = vpop.f32.mrf.mxu0
        %v1321 = vadd.f32 %v1160, %v1320
        %v1322 = vpop.f32.mrf.mxu0
        %1323 = vmatprep.mubr.bf16.mxu0 0
        %1324 = vmatmul.mubr.bf16.gmra.mxu0 %v836
        %v1325 = vpop.f32.mrf.mxu0
        %v1326 = vadd.f32 %v1165, %v1325
        %v1327 = vpop.f32.mrf.mxu0
        %v1328 = vpop.f32.mrf.mxu0
        %v1329 = vadd.f32 %v1168, %v1328
        %v1330 = vpop.f32.mrf.mxu0
        %1331 = vmatprep.mubr.bf16.mxu0 0
        %1332 = vmatmul.mubr.bf16.gmra.mxu0 %v839
        %v1333 = vpop.f32.mrf.mxu0
        %v1334 = vadd.f32 %v1173, %v1333
        %v1335 = vpop.f32.mrf.mxu0
        %v1336 = vpop.f32.mrf.mxu0
        %v1337 = vadd.f32 %v1176, %v1336
        %v1338 = vpop.f32.mrf.mxu0
        %1339 = vmatprep.mubr.bf16.mxu0 0
        %1340 = vmatmul.mubr.bf16.gmra.mxu0 %v842
        %v1341 = vpop.f32.mrf.mxu0
        %v1342 = vadd.f32 %v1181, %v1341
        %v1343 = vpop.f32.mrf.mxu0
        %v1344 = vpop.f32.mrf.mxu0
        %v1345 = vadd.f32 %v1184, %v1344
        %v1346 = vpop.f32.mrf.mxu0
        %1347 = vmatprep.mubr.bf16.mxu0 0
        %1348 = vmatmul.mubr.bf16.gmra.mxu0 %v845
        %v1349 = vpop.f32.mrf.mxu0
        %v1350 = vadd.f32 %v1189, %v1349
        %v1351 = vpop.f32.mrf.mxu0
        %v1352 = vpop.f32.mrf.mxu0
        %v1353 = vadd.f32 %v1192, %v1352
        %v1354 = vpop.f32.mrf.mxu0
        %1355 = vmatprep.mubr.bf16.mxu0 0
        %1356 = vmatmul.mubr.bf16.gmra.mxu0 %v848
        %v1357 = vpop.f32.mrf.mxu0
        %v1358 = vadd.f32 %v1197, %v1357
        %v1359 = vpop.f32.mrf.mxu0
        %v1360 = vpop.f32.mrf.mxu0
        %v1361 = vadd.f32 %v1200, %v1360
        %v1362 = vpop.f32.mrf.mxu0
        %1363 = vmatprep.mubr.bf16.mxu0 0
        %1364 = vmatmul.mubr.bf16.gmra.mxu0 %v851
        %v1365 = vpop.f32.mrf.mxu0
        %v1366 = vadd.f32 %v1205, %v1365
        %v1367 = vpop.f32.mrf.mxu0
        %v1368 = vpop.f32.mrf.mxu0
        %v1369 = vadd.f32 %v1208, %v1368
        %v1370 = vpop.f32.mrf.mxu0
        %1371 = vmatprep.mubr.bf16.mxu0 0
        %1372 = vmatmul.mubr.bf16.gmra.mxu0 %v854
        %v1373 = vpop.f32.mrf.mxu0
        %v1374 = vadd.f32 %v1213, %v1373
        %v1375 = vpop.f32.mrf.mxu0
        %v1376 = vpop.f32.mrf.mxu0
        %v1377 = vadd.f32 %v1216, %v1376
        %v1378 = vpop.f32.mrf.mxu0
        %1379 = vmatprep.mubr.bf16.mxu0 0
        %1380 = vmatmul.mubr.bf16.gmra.mxu0 %v857
        %v1381 = vpop.f32.mrf.mxu0
        %v1382 = vadd.f32 %v1221, %v1381
        %v1383 = vpop.f32.mrf.mxu0
        %v1384 = vpop.f32.mrf.mxu0
        %v1385 = vadd.f32 %v1224, %v1384
        %v1386 = vpop.f32.mrf.mxu0
        %1387 = vmatprep.mubr.bf16.mxu0 0
        %1388 = vmatmul.mubr.bf16.gmra.mxu0 %v860
        %v1389 = vpop.f32.mrf.mxu0
        %v1390 = vadd.f32 %v1229, %v1389
        %v1391 = vpop.f32.mrf.mxu0
        %v1392 = vpop.f32.mrf.mxu0
        %v1393 = vadd.f32 %v1232, %v1392
        %v1394 = vpop.f32.mrf.mxu0
        %1395 = vmatprep.mubr.bf16.mxu0 0
        %1396 = vmatmul.mubr.bf16.gmra.mxu0 %v863
        %v1397 = vpop.f32.mrf.mxu0
        %v1398 = vadd.f32 %v1237, %v1397
        %v1399 = vpop.f32.mrf.mxu0
        %v1400 = vpop.f32.mrf.mxu0
        %v1401 = vadd.f32 %v1240, %v1400
        %v1402 = vpop.f32.mrf.mxu0
        %1403 = vdwg.mxu0
        %s1404 = scalar_lea.vmem [#allocation6], 192
        %v1405 = vld [vmem:[%s1404] sm:$0xf]
        %v1406 = vld [vmem:[%s1404 + $0x4] sm:$0xf]
        %v1407 = vld [vmem:[%s1404 + $0x8] sm:$0xf]
        %v1408 = vld [vmem:[%s1404 + $0xc] sm:$0xf]
        %v1409 = vld [vmem:[%s1404 + $0x10] sm:$0xf]
        %v1410 = vld [vmem:[%s1404 + $0x14] sm:$0xf]
        %v1411 = vld [vmem:[%s1404 + $0x18] sm:$0xf]
        %v1412 = vld [vmem:[%s1404 + $0x1c] sm:$0xf]
        %v1413 = vld [vmem:[%s1404 + $0x20] sm:$0xf]
        %v1414 = vld [vmem:[%s1404 + $0x24] sm:$0xf]
        %v1415 = vld [vmem:[%s1404 + $0x28] sm:$0xf]
        %v1416 = vld [vmem:[%s1404 + $0x2c] sm:$0xf]
        %v1417 = vld [vmem:[%s1404 + $0x30] sm:$0xf]
        %v1418 = vld [vmem:[%s1404 + $0x34] sm:$0xf]
        %v1419 = vld [vmem:[%s1404 + $0x38] sm:$0xf]
        %v1420 = vld [vmem:[%s1404 + $0x3c] sm:$0xf]
        %v1421 = vld [vmem:[%s1404 + $0x40] sm:$0xf]
        %v1422 = vld [vmem:[%s1404 + $0x44] sm:$0xf]
        %v1423 = vld [vmem:[%s1404 + $0x48] sm:$0xf]
        %v1424 = vld [vmem:[%s1404 + $0x4c] sm:$0xf]
        %v1425 = vld [vmem:[%s1404 + $0x50] sm:$0xf]
        %v1426 = vld [vmem:[%s1404 + $0x54] sm:$0xf]
        %v1427 = vld [vmem:[%s1404 + $0x58] sm:$0xf]
        %v1428 = vld [vmem:[%s1404 + $0x5c] sm:$0xf]
        %v1429 = vld [vmem:[%s1404 + $0x60] sm:$0xf]
        %v1430 = vld [vmem:[%s1404 + $0x64] sm:$0xf]
        %v1431 = vld [vmem:[%s1404 + $0x68] sm:$0xf]
        %v1432 = vld [vmem:[%s1404 + $0x6c] sm:$0xf]
        %v1433 = vld [vmem:[%s1404 + $0x70] sm:$0xf]
        %v1434 = vld [vmem:[%s1404 + $0x74] sm:$0xf]
        %v1435 = vld [vmem:[%s1404 + $0x78] sm:$0xf]
        %v1436 = vld [vmem:[%s1404 + $0x7c] sm:$0xf]
        %v1437 = vld [vmem:[%s1404 + $0x80] sm:$0xf]
        %v1438 = vld [vmem:[%s1404 + $0x84] sm:$0xf]
        %v1439 = vld [vmem:[%s1404 + $0x88] sm:$0xf]
        %v1440 = vld [vmem:[%s1404 + $0x8c] sm:$0xf]
        %v1441 = vld [vmem:[%s1404 + $0x90] sm:$0xf]
        %v1442 = vld [vmem:[%s1404 + $0x94] sm:$0xf]
        %v1443 = vld [vmem:[%s1404 + $0x98] sm:$0xf]
        %v1444 = vld [vmem:[%s1404 + $0x9c] sm:$0xf]
        %v1445 = vld [vmem:[%s1404 + $0xa0] sm:$0xf]
        %v1446 = vld [vmem:[%s1404 + $0xa4] sm:$0xf]
        %v1447 = vld [vmem:[%s1404 + $0xa8] sm:$0xf]
        %v1448 = vld [vmem:[%s1404 + $0xac] sm:$0xf]
        %v1449 = vld [vmem:[%s1404 + $0xb0] sm:$0xf]
        %v1450 = vld [vmem:[%s1404 + $0xb4] sm:$0xf]
        %v1451 = vld [vmem:[%s1404 + $0xb8] sm:$0xf]
        %v1452 = vld [vmem:[%s1404 + $0xbc] sm:$0xf]
        %v1501 = vunpack.c.l.b16 %v1405
        %v1502 = vunpack.c.l.b16 %v1406
        %v1503 = vunpack.c.l.b16 %v1407
        %v1504 = vunpack.c.l.b16 %v1408
        %v1505 = vunpack.c.l.b16 %v1409
        %v1506 = vunpack.c.l.b16 %v1410
        %v1507 = vunpack.c.l.b16 %v1411
        %v1508 = vunpack.c.l.b16 %v1412
        %v1509 = vunpack.c.l.b16 %v1413
        %v1510 = vunpack.c.l.b16 %v1414
        %v1511 = vunpack.c.l.b16 %v1415
        %v1512 = vunpack.c.l.b16 %v1416
        %v1513 = vunpack.c.l.b16 %v1417
        %v1514 = vunpack.c.l.b16 %v1418
        %v1515 = vunpack.c.l.b16 %v1419
        %v1516 = vunpack.c.l.b16 %v1420
        %v1517 = vunpack.c.l.b16 %v1421
        %v1518 = vunpack.c.l.b16 %v1422
        %v1519 = vunpack.c.l.b16 %v1423
        %v1520 = vunpack.c.l.b16 %v1424
        %v1521 = vunpack.c.l.b16 %v1425
        %v1522 = vunpack.c.l.b16 %v1426
        %v1523 = vunpack.c.l.b16 %v1427
        %v1524 = vunpack.c.l.b16 %v1428
        %v1525 = vunpack.c.l.b16 %v1429
        %v1526 = vunpack.c.l.b16 %v1430
        %v1527 = vunpack.c.l.b16 %v1431
        %v1528 = vunpack.c.l.b16 %v1432
        %v1529 = vunpack.c.l.b16 %v1433
        %v1530 = vunpack.c.l.b16 %v1434
        %v1531 = vunpack.c.l.b16 %v1435
        %v1532 = vunpack.c.l.b16 %v1436
        %v1533 = vunpack.c.l.b16 %v1437
        %v1534 = vunpack.c.l.b16 %v1438
        %v1535 = vunpack.c.l.b16 %v1439
        %v1536 = vunpack.c.l.b16 %v1440
        %v1537 = vunpack.c.l.b16 %v1441
        %v1538 = vunpack.c.l.b16 %v1442
        %v1539 = vunpack.c.l.b16 %v1443
        %v1540 = vunpack.c.l.b16 %v1444
        %v1541 = vunpack.c.l.b16 %v1445
        %v1542 = vunpack.c.l.b16 %v1446
        %v1543 = vunpack.c.l.b16 %v1447
        %v1544 = vunpack.c.l.b16 %v1448
        %v1545 = vunpack.c.l.b16 %v1449
        %v1546 = vunpack.c.l.b16 %v1450
        %v1547 = vunpack.c.l.b16 %v1451
        %v1548 = vunpack.c.l.b16 %v1452
        %v1549 = vpack.c.b16 %v1502, %v1501
        %v1550 = vpack.c.b16 %v1504, %v1503
        %v1551 = vpack.c.b16 %v1506, %v1505
        %v1552 = vpack.c.b16 %v1508, %v1507
        %v1553 = vpack.c.b16 %v1510, %v1509
        %v1554 = vpack.c.b16 %v1512, %v1511
        %v1555 = vpack.c.b16 %v1514, %v1513
        %v1556 = vpack.c.b16 %v1516, %v1515
        %v1557 = vpack.c.b16 %v1518, %v1517
        %v1558 = vpack.c.b16 %v1520, %v1519
        %v1559 = vpack.c.b16 %v1522, %v1521
        %v1560 = vpack.c.b16 %v1524, %v1523
        %v1561 = vpack.c.b16 %v1526, %v1525
        %v1562 = vpack.c.b16 %v1528, %v1527
        %v1563 = vpack.c.b16 %v1530, %v1529
        %v1564 = vpack.c.b16 %v1532, %v1531
        %v1565 = vpack.c.b16 %v1534, %v1533
        %v1566 = vpack.c.b16 %v1536, %v1535
        %v1567 = vpack.c.b16 %v1538, %v1537
        %v1568 = vpack.c.b16 %v1540, %v1539
        %v1569 = vpack.c.b16 %v1542, %v1541
        %v1570 = vpack.c.b16 %v1544, %v1543
        %v1571 = vpack.c.b16 %v1546, %v1545
        %v1572 = vpack.c.b16 %v1548, %v1547
        %1597 = vmatprep.subr.bf16.mxu0 0
        %1598 = vmatpush1.bf16.msra.mxu0 %v1556
        %1599 = vmatprep.subr.bf16.mxu0 0
        %1600 = vmatpush1.bf16.msra.mxu0 %v1555
        %1601 = vmatprep.subr.bf16.mxu0 0
        %1602 = vmatpush1.bf16.msra.mxu0 %v1554
        %1603 = vmatprep.subr.bf16.mxu0 0
        %1604 = vmatpush1.bf16.msra.mxu0 %v1553
        %1605 = vmatprep.subr.bf16.mxu0 0
        %1606 = vmatpush1.bf16.msra.mxu0 %v1552
        %1607 = vmatprep.subr.bf16.mxu0 0
        %1608 = vmatpush1.bf16.msra.mxu0 %v1551
        %1609 = vmatprep.subr.bf16.mxu0 0
        %1610 = vmatpush1.bf16.msra.mxu0 %v1550
        %1611 = vmatprep.subr.bf16.mxu0 0
        %1612 = vmatpush1.bf16.msra.mxu0 %v1549
        %1613 = vmatprep.subr.bf16.mxu0 0
        %1614 = vmatpush2.bf16.msra.mxu0 %v1564
        %1615 = vmatprep.subr.bf16.mxu0 0
        %1616 = vmatpush2.bf16.msra.mxu0 %v1563
        %1617 = vmatprep.subr.bf16.mxu0 0
        %1618 = vmatpush2.bf16.msra.mxu0 %v1562
        %1619 = vmatprep.subr.bf16.mxu0 0
        %1620 = vmatpush2.bf16.msra.mxu0 %v1561
        %1621 = vmatprep.subr.bf16.mxu0 0
        %1622 = vmatpush2.bf16.msra.mxu0 %v1560
        %1623 = vmatprep.subr.bf16.mxu0 0
        %1624 = vmatpush2.bf16.msra.mxu0 %v1559
        %1625 = vmatprep.subr.bf16.mxu0 0
        %1626 = vmatpush2.bf16.msra.mxu0 %v1558
        %1627 = vmatprep.subr.bf16.mxu0 0
        %1628 = vmatpush2.bf16.msra.mxu0 %v1557
        %1629 = vmatprep.mubr.bf16.mxu0 %v601
        %1630 = vmatmul.mubr.bf16.gmra.mxu0 %v546
        %v1631 = vpop.f32.mrf.mxu0
        %v1632 = vadd.f32 0.0, %v1631
        %v1633 = vpop.f32.mrf.mxu0
        %v1634 = vpop.f32.mrf.mxu0
        %v1635 = vadd.f32 0.0, %v1634
        %v1636 = vpop.f32.mrf.mxu0
        %1637 = vmatprep.mubr.bf16.mxu0 %v589
        %1638 = vmatmul.mubr.bf16.gmra.mxu0 %v545
        %v1639 = vpop.f32.mrf.mxu0
        %v1640 = vadd.f32 0.0, %v1639
        %v1641 = vpop.f32.mrf.mxu0
        %v1642 = vpop.f32.mrf.mxu0
        %v1643 = vadd.f32 0.0, %v1642
        %v1644 = vpop.f32.mrf.mxu0
        %1645 = vmatprep.mubr.bf16.mxu0 %v613
        %1646 = vmatmul.mubr.bf16.gmra.mxu0 %v547
        %v1647 = vpop.f32.mrf.mxu0
        %v1648 = vadd.f32 0.0, %v1647
        %v1649 = vpop.f32.mrf.mxu0
        %v1650 = vpop.f32.mrf.mxu0
        %v1651 = vadd.f32 0.0, %v1650
        %v1652 = vpop.f32.mrf.mxu0
        %1653 = vmatprep.mubr.bf16.mxu0 %v625
        %1654 = vmatmul.mubr.bf16.gmra.mxu0 %v548
        %v1655 = vpop.f32.mrf.mxu0
        %v1656 = vadd.f32 0.0, %v1655
        %v1657 = vpop.f32.mrf.mxu0
        %v1658 = vpop.f32.mrf.mxu0
        %v1659 = vadd.f32 0.0, %v1658
        %v1660 = vpop.f32.mrf.mxu0
        %1661 = vmatprep.mubr.bf16.mxu0 %v637
        %1662 = vmatmul.mubr.bf16.gmra.mxu0 %v549
        %v1663 = vpop.f32.mrf.mxu0
        %v1664 = vadd.f32 0.0, %v1663
        %v1665 = vpop.f32.mrf.mxu0
        %v1666 = vpop.f32.mrf.mxu0
        %v1667 = vadd.f32 0.0, %v1666
        %v1668 = vpop.f32.mrf.mxu0
        %1669 = vmatprep.mubr.bf16.mxu0 %v649
        %1670 = vmatmul.mubr.bf16.gmra.mxu0 %v550
        %v1671 = vpop.f32.mrf.mxu0
        %v1672 = vadd.f32 0.0, %v1671
        %v1673 = vpop.f32.mrf.mxu0
        %v1674 = vpop.f32.mrf.mxu0
        %v1675 = vadd.f32 0.0, %v1674
        %v1676 = vpop.f32.mrf.mxu0
        %1677 = vmatprep.mubr.bf16.mxu0 %v661
        %1678 = vmatmul.mubr.bf16.gmra.mxu0 %v551
        %v1679 = vpop.f32.mrf.mxu0
        %v1680 = vadd.f32 0.0, %v1679
        %v1681 = vpop.f32.mrf.mxu0
        %v1682 = vpop.f32.mrf.mxu0
        %v1683 = vadd.f32 0.0, %v1682
        %v1684 = vpop.f32.mrf.mxu0
        %1685 = vmatprep.mubr.bf16.mxu0 %v673
        %1686 = vmatmul.mubr.bf16.gmra.mxu0 %v552
        %v1687 = vpop.f32.mrf.mxu0
        %v1688 = vadd.f32 0.0, %v1687
        %v1689 = vpop.f32.mrf.mxu0
        %v1690 = vpop.f32.mrf.mxu0
        %v1691 = vadd.f32 0.0, %v1690
        %v1692 = vpop.f32.mrf.mxu0
        %1693 = vmatprep.mubr.bf16.mxu0 %v685
        %1694 = vmatmul.mubr.bf16.gmra.mxu0 %v553
        %v1695 = vpop.f32.mrf.mxu0
        %v1696 = vadd.f32 0.0, %v1695
        %v1697 = vpop.f32.mrf.mxu0
        %v1698 = vpop.f32.mrf.mxu0
        %v1699 = vadd.f32 0.0, %v1698
        %v1700 = vpop.f32.mrf.mxu0
        %1701 = vmatprep.mubr.bf16.mxu0 %v697
        %1702 = vmatmul.mubr.bf16.gmra.mxu0 %v554
        %v1703 = vpop.f32.mrf.mxu0
        %v1704 = vadd.f32 0.0, %v1703
        %v1705 = vpop.f32.mrf.mxu0
        %v1706 = vpop.f32.mrf.mxu0
        %v1707 = vadd.f32 0.0, %v1706
        %v1708 = vpop.f32.mrf.mxu0
        %1709 = vmatprep.mubr.bf16.mxu0 %v709
        %1710 = vmatmul.mubr.bf16.gmra.mxu0 %v555
        %v1711 = vpop.f32.mrf.mxu0
        %v1712 = vadd.f32 0.0, %v1711
        %v1713 = vpop.f32.mrf.mxu0
        %v1714 = vpop.f32.mrf.mxu0
        %v1715 = vadd.f32 0.0, %v1714
        %v1716 = vpop.f32.mrf.mxu0
        %1717 = vmatprep.mubr.bf16.mxu0 %v721
        %1718 = vmatmul.mubr.bf16.gmra.mxu0 %v556
        %v1719 = vpop.f32.mrf.mxu0
        %v1720 = vadd.f32 0.0, %v1719
        %v1721 = vpop.f32.mrf.mxu0
        %v1722 = vpop.f32.mrf.mxu0
        %v1723 = vadd.f32 0.0, %v1722
        %v1724 = vpop.f32.mrf.mxu0
        %1725 = vmatprep.mubr.bf16.mxu0 %v733
        %1726 = vmatmul.mubr.bf16.gmra.mxu0 %v557
        %v1727 = vpop.f32.mrf.mxu0
        %v1728 = vadd.f32 0.0, %v1727
        %v1729 = vpop.f32.mrf.mxu0
        %v1730 = vpop.f32.mrf.mxu0
        %v1731 = vadd.f32 0.0, %v1730
        %v1732 = vpop.f32.mrf.mxu0
        %1733 = vmatprep.mubr.bf16.mxu0 %v745
        %1734 = vmatmul.mubr.bf16.gmra.mxu0 %v558
        %v1735 = vpop.f32.mrf.mxu0
        %v1736 = vadd.f32 0.0, %v1735
        %v1737 = vpop.f32.mrf.mxu0
        %v1738 = vpop.f32.mrf.mxu0
        %v1739 = vadd.f32 0.0, %v1738
        %v1740 = vpop.f32.mrf.mxu0
        %1741 = vmatprep.mubr.bf16.mxu0 %v757
        %1742 = vmatmul.mubr.bf16.gmra.mxu0 %v559
        %v1743 = vpop.f32.mrf.mxu0
        %v1744 = vadd.f32 0.0, %v1743
        %v1745 = vpop.f32.mrf.mxu0
        %v1746 = vpop.f32.mrf.mxu0
        %v1747 = vadd.f32 0.0, %v1746
        %v1748 = vpop.f32.mrf.mxu0
        %1749 = vmatprep.mubr.bf16.mxu0 %v769
        %1750 = vmatmul.mubr.bf16.gmra.mxu0 %v560
        %v1751 = vpop.f32.mrf.mxu0
        %v1752 = vadd.f32 0.0, %v1751
        %v1753 = vpop.f32.mrf.mxu0
        %v1754 = vpop.f32.mrf.mxu0
        %v1755 = vadd.f32 0.0, %v1754
        %v1756 = vpop.f32.mrf.mxu0
        %1757 = vdwg.mxu0
        %1758 = vmatprep.subr.bf16.mxu0 0
        %1759 = vmatpush1.bf16.msra.mxu0 %v1572
        %1760 = vmatprep.subr.bf16.mxu0 0
        %1761 = vmatpush1.bf16.msra.mxu0 %v1571
        %1762 = vmatprep.subr.bf16.mxu0 0
        %1763 = vmatpush1.bf16.msra.mxu0 %v1570
        %1764 = vmatprep.subr.bf16.mxu0 0
        %1765 = vmatpush1.bf16.msra.mxu0 %v1569
        %1766 = vmatprep.subr.bf16.mxu0 0
        %1767 = vmatpush1.bf16.msra.mxu0 %v1568
        %1768 = vmatprep.subr.bf16.mxu0 0
        %1769 = vmatpush1.bf16.msra.mxu0 %v1567
        %1770 = vmatprep.subr.bf16.mxu0 0
        %1771 = vmatpush1.bf16.msra.mxu0 %v1566
        %1772 = vmatprep.subr.bf16.mxu0 0
        %1773 = vmatpush1.bf16.msra.mxu0 %v1565
        %1774 = vmatprep.subr.bf16.mxu0 0
        %1775 = vmatpush2.bf16.msra.mxu0 0
        %1776 = vmatprep.subr.bf16.mxu0 0
        %1777 = vmatpush2.bf16.msra.mxu0 0
        %1778 = vmatprep.subr.bf16.mxu0 0
        %1779 = vmatpush2.bf16.msra.mxu0 0
        %1780 = vmatprep.subr.bf16.mxu0 0
        %1781 = vmatpush2.bf16.msra.mxu0 0
        %1782 = vmatprep.subr.bf16.mxu0 0
        %1783 = vmatpush2.bf16.msra.mxu0 0
        %1784 = vmatprep.subr.bf16.mxu0 0
        %1785 = vmatpush2.bf16.msra.mxu0 0
        %1786 = vmatprep.subr.bf16.mxu0 0
        %1787 = vmatpush2.bf16.msra.mxu0 0
        %1788 = vmatprep.subr.bf16.mxu0 0
        %1789 = vmatpush2.bf16.msra.mxu0 0
        %1790 = vmatprep.mubr.bf16.mxu0 0
        %1791 = vmatmul.mubr.bf16.gmra.mxu0 %v824
        %v1792 = vpop.f32.mrf.mxu0
        %v1793 = vadd.f32 %v1632, %v1792
        %v1794 = vpop.f32.mrf.mxu0
        %v1795 = vpop.f32.mrf.mxu0
        %v1796 = vadd.f32 %v1635, %v1795
        %v1797 = vpop.f32.mrf.mxu0
        %1798 = vmatprep.mubr.bf16.mxu0 0
        %1799 = vmatmul.mubr.bf16.gmra.mxu0 %v821
        %v1800 = vpop.f32.mrf.mxu0
        %v1801 = vadd.f32 %v1640, %v1800
        %v1802 = vpop.f32.mrf.mxu0
        %v1803 = vpop.f32.mrf.mxu0
        %v1804 = vadd.f32 %v1643, %v1803
        %v1805 = vpop.f32.mrf.mxu0
        %1806 = vmatprep.mubr.bf16.mxu0 0
        %1807 = vmatmul.mubr.bf16.gmra.mxu0 %v827
        %v1808 = vpop.f32.mrf.mxu0
        %v1809 = vadd.f32 %v1648, %v1808
        %v1810 = vpop.f32.mrf.mxu0
        %v1811 = vpop.f32.mrf.mxu0
        %v1812 = vadd.f32 %v1651, %v1811
        %v1813 = vpop.f32.mrf.mxu0
        %1814 = vmatprep.mubr.bf16.mxu0 0
        %1815 = vmatmul.mubr.bf16.gmra.mxu0 %v830
        %v1816 = vpop.f32.mrf.mxu0
        %v1817 = vadd.f32 %v1656, %v1816
        %v1818 = vpop.f32.mrf.mxu0
        %v1819 = vpop.f32.mrf.mxu0
        %v1820 = vadd.f32 %v1659, %v1819
        %v1821 = vpop.f32.mrf.mxu0
        %1822 = vmatprep.mubr.bf16.mxu0 0
        %1823 = vmatmul.mubr.bf16.gmra.mxu0 %v833
        %v1824 = vpop.f32.mrf.mxu0
        %v1825 = vadd.f32 %v1664, %v1824
        %v1826 = vpop.f32.mrf.mxu0
        %v1827 = vpop.f32.mrf.mxu0
        %v1828 = vadd.f32 %v1667, %v1827
        %v1829 = vpop.f32.mrf.mxu0
        %1830 = vmatprep.mubr.bf16.mxu0 0
        %1831 = vmatmul.mubr.bf16.gmra.mxu0 %v836
        %v1832 = vpop.f32.mrf.mxu0
        %v1833 = vadd.f32 %v1672, %v1832
        %v1834 = vpop.f32.mrf.mxu0
        %v1835 = vpop.f32.mrf.mxu0
        %v1836 = vadd.f32 %v1675, %v1835
        %v1837 = vpop.f32.mrf.mxu0
        %1838 = vmatprep.mubr.bf16.mxu0 0
        %1839 = vmatmul.mubr.bf16.gmra.mxu0 %v839
        %v1840 = vpop.f32.mrf.mxu0
        %v1841 = vadd.f32 %v1680, %v1840
        %v1842 = vpop.f32.mrf.mxu0
        %v1843 = vpop.f32.mrf.mxu0
        %v1844 = vadd.f32 %v1683, %v1843
        %v1845 = vpop.f32.mrf.mxu0
        %1846 = vmatprep.mubr.bf16.mxu0 0
        %1847 = vmatmul.mubr.bf16.gmra.mxu0 %v842
        %v1848 = vpop.f32.mrf.mxu0
        %v1849 = vadd.f32 %v1688, %v1848
        %v1850 = vpop.f32.mrf.mxu0
        %v1851 = vpop.f32.mrf.mxu0
        %v1852 = vadd.f32 %v1691, %v1851
        %v1853 = vpop.f32.mrf.mxu0
        %1854 = vmatprep.mubr.bf16.mxu0 0
        %1855 = vmatmul.mubr.bf16.gmra.mxu0 %v845
        %v1856 = vpop.f32.mrf.mxu0
        %v1857 = vadd.f32 %v1696, %v1856
        %v1858 = vpop.f32.mrf.mxu0
        %v1859 = vpop.f32.mrf.mxu0
        %v1860 = vadd.f32 %v1699, %v1859
        %v1861 = vpop.f32.mrf.mxu0
        %1862 = vmatprep.mubr.bf16.mxu0 0
        %1863 = vmatmul.mubr.bf16.gmra.mxu0 %v848
        %v1864 = vpop.f32.mrf.mxu0
        %v1865 = vadd.f32 %v1704, %v1864
        %v1866 = vpop.f32.mrf.mxu0
        %v1867 = vpop.f32.mrf.mxu0
        %v1868 = vadd.f32 %v1707, %v1867
        %v1869 = vpop.f32.mrf.mxu0
        %1870 = vmatprep.mubr.bf16.mxu0 0
        %1871 = vmatmul.mubr.bf16.gmra.mxu0 %v851
        %v1872 = vpop.f32.mrf.mxu0
        %v1873 = vadd.f32 %v1712, %v1872
        %v1874 = vpop.f32.mrf.mxu0
        %v1875 = vpop.f32.mrf.mxu0
        %v1876 = vadd.f32 %v1715, %v1875
        %v1877 = vpop.f32.mrf.mxu0
        %1878 = vmatprep.mubr.bf16.mxu0 0
        %1879 = vmatmul.mubr.bf16.gmra.mxu0 %v854
        %v1880 = vpop.f32.mrf.mxu0
        %v1881 = vadd.f32 %v1720, %v1880
        %v1882 = vpop.f32.mrf.mxu0
        %v1883 = vpop.f32.mrf.mxu0
        %v1884 = vadd.f32 %v1723, %v1883
        %v1885 = vpop.f32.mrf.mxu0
        %1886 = vmatprep.mubr.bf16.mxu0 0
        %1887 = vmatmul.mubr.bf16.gmra.mxu0 %v857
        %v1888 = vpop.f32.mrf.mxu0
        %v1889 = vadd.f32 %v1728, %v1888
        %v1890 = vpop.f32.mrf.mxu0
        %v1891 = vpop.f32.mrf.mxu0
        %v1892 = vadd.f32 %v1731, %v1891
        %v1893 = vpop.f32.mrf.mxu0
        %1894 = vmatprep.mubr.bf16.mxu0 0
        %1895 = vmatmul.mubr.bf16.gmra.mxu0 %v860
        %v1896 = vpop.f32.mrf.mxu0
        %v1897 = vadd.f32 %v1736, %v1896
        %v1898 = vpop.f32.mrf.mxu0
        %v1899 = vpop.f32.mrf.mxu0
        %v1900 = vadd.f32 %v1739, %v1899
        %v1901 = vpop.f32.mrf.mxu0
        %1902 = vmatprep.mubr.bf16.mxu0 0
        %1903 = vmatmul.mubr.bf16.gmra.mxu0 %v863
        %v1904 = vpop.f32.mrf.mxu0
        %v1905 = vadd.f32 %v1744, %v1904
        %v1906 = vpop.f32.mrf.mxu0
        %v1907 = vpop.f32.mrf.mxu0
        %v1908 = vadd.f32 %v1747, %v1907
        %v1909 = vpop.f32.mrf.mxu0
        %1910 = vmatprep.mubr.bf16.mxu0 0
        %1911 = vmatmul.mubr.bf16.gmra.mxu0 %v866
        %v1912 = vpop.f32.mrf.mxu0
        %v1913 = vadd.f32 %v1752, %v1912
        %v1914 = vpop.f32.mrf.mxu0
        %v1915 = vpop.f32.mrf.mxu0
        %v1916 = vadd.f32 %v1755, %v1915
        %v1917 = vpop.f32.mrf.mxu0
        %1918 = vdwg.mxu0
        %v1919 = vadd.f32 %v1278, %v1793
        %v1920 = vadd.f32 %v1281, %v1796
        %v1921 = vadd.f32 %v1286, %v1801
        %v1922 = vadd.f32 %v1289, %v1804
        %v1923 = vadd.f32 %v1294, %v1809
        %v1924 = vadd.f32 %v1297, %v1812
        %v1925 = vadd.f32 %v1302, %v1817
        %v1926 = vadd.f32 %v1305, %v1820
        %v1927 = vadd.f32 %v1310, %v1825
        %v1928 = vadd.f32 %v1313, %v1828
        %v1929 = vadd.f32 %v1318, %v1833
        %v1930 = vadd.f32 %v1321, %v1836
        %v1931 = vadd.f32 %v1326, %v1841
        %v1932 = vadd.f32 %v1329, %v1844
        %v1933 = vadd.f32 %v1334, %v1849
        %v1934 = vadd.f32 %v1337, %v1852
        %v1935 = vadd.f32 %v1342, %v1857
        %v1936 = vadd.f32 %v1345, %v1860
        %v1937 = vadd.f32 %v1350, %v1865
        %v1938 = vadd.f32 %v1353, %v1868
        %v1939 = vadd.f32 %v1358, %v1873
        %v1940 = vadd.f32 %v1361, %v1876
        %v1941 = vadd.f32 %v1366, %v1881
        %v1942 = vadd.f32 %v1369, %v1884
        %v1943 = vadd.f32 %v1374, %v1889
        %v1944 = vadd.f32 %v1377, %v1892
        %v1945 = vadd.f32 %v1382, %v1897
        %v1946 = vadd.f32 %v1385, %v1900
        %v1947 = vadd.f32 %v1390, %v1905
        %v1948 = vadd.f32 %v1393, %v1908
        %v1949 = vadd.f32 %v1398, %v1913
        %v1950 = vadd.f32 %v1401, %v1916
        %s1951 = scalar_lea.vmem [#allocation6], 384
        %v1952 = vld [vmem:[%s1951] sm:$0xf]
        %v1953 = vld [vmem:[%s1951 + $0x4] sm:$0xf]
        %v1954 = vld [vmem:[%s1951 + $0x8] sm:$0xf]
        %v1955 = vld [vmem:[%s1951 + $0xc] sm:$0xf]
        %v1956 = vld [vmem:[%s1951 + $0x10] sm:$0xf]
        %v1957 = vld [vmem:[%s1951 + $0x14] sm:$0xf]
        %v1958 = vld [vmem:[%s1951 + $0x18] sm:$0xf]
        %v1959 = vld [vmem:[%s1951 + $0x1c] sm:$0xf]
        %v1960 = vld [vmem:[%s1951 + $0x20] sm:$0xf]
        %v1961 = vld [vmem:[%s1951 + $0x24] sm:$0xf]
        %v1962 = vld [vmem:[%s1951 + $0x28] sm:$0xf]
        %v1963 = vld [vmem:[%s1951 + $0x2c] sm:$0xf]
        %v1964 = vld [vmem:[%s1951 + $0x30] sm:$0xf]
        %v1965 = vld [vmem:[%s1951 + $0x34] sm:$0xf]
        %v1966 = vld [vmem:[%s1951 + $0x38] sm:$0xf]
        %v1967 = vld [vmem:[%s1951 + $0x3c] sm:$0xf]
        %v1968 = vld [vmem:[%s1951 + $0x40] sm:$0xf]
        %v1969 = vld [vmem:[%s1951 + $0x44] sm:$0xf]
        %v1970 = vld [vmem:[%s1951 + $0x48] sm:$0xf]
        %v1971 = vld [vmem:[%s1951 + $0x4c] sm:$0xf]
        %v1972 = vld [vmem:[%s1951 + $0x50] sm:$0xf]
        %v1973 = vld [vmem:[%s1951 + $0x54] sm:$0xf]
        %v1974 = vld [vmem:[%s1951 + $0x58] sm:$0xf]
        %v1975 = vld [vmem:[%s1951 + $0x5c] sm:$0xf]
        %v1976 = vld [vmem:[%s1951 + $0x60] sm:$0xf]
        %v1977 = vld [vmem:[%s1951 + $0x64] sm:$0xf]
        %v1978 = vld [vmem:[%s1951 + $0x68] sm:$0xf]
        %v1979 = vld [vmem:[%s1951 + $0x6c] sm:$0xf]
        %v1980 = vld [vmem:[%s1951 + $0x70] sm:$0xf]
        %v1981 = vld [vmem:[%s1951 + $0x74] sm:$0xf]
        %v1982 = vld [vmem:[%s1951 + $0x78] sm:$0xf]
        %v1983 = vld [vmem:[%s1951 + $0x7c] sm:$0xf]
        %v1984 = vld [vmem:[%s1951 + $0x80] sm:$0xf]
        %v1985 = vld [vmem:[%s1951 + $0x84] sm:$0xf]
        %v1986 = vld [vmem:[%s1951 + $0x88] sm:$0xf]
        %v1987 = vld [vmem:[%s1951 + $0x8c] sm:$0xf]
        %v1988 = vld [vmem:[%s1951 + $0x90] sm:$0xf]
        %v1989 = vld [vmem:[%s1951 + $0x94] sm:$0xf]
        %v1990 = vld [vmem:[%s1951 + $0x98] sm:$0xf]
        %v1991 = vld [vmem:[%s1951 + $0x9c] sm:$0xf]
        %v1992 = vld [vmem:[%s1951 + $0xa0] sm:$0xf]
        %v1993 = vld [vmem:[%s1951 + $0xa4] sm:$0xf]
        %v1994 = vld [vmem:[%s1951 + $0xa8] sm:$0xf]
        %v1995 = vld [vmem:[%s1951 + $0xac] sm:$0xf]
        %v1996 = vld [vmem:[%s1951 + $0xb0] sm:$0xf]
        %v1997 = vld [vmem:[%s1951 + $0xb4] sm:$0xf]
        %v1998 = vld [vmem:[%s1951 + $0xb8] sm:$0xf]
        %v1999 = vld [vmem:[%s1951 + $0xbc] sm:$0xf]
        %v2048 = vunpack.c.l.b16 %v1952
        %v2049 = vunpack.c.l.b16 %v1953
        %v2050 = vunpack.c.l.b16 %v1954
        %v2051 = vunpack.c.l.b16 %v1955
        %v2052 = vunpack.c.l.b16 %v1956
        %v2053 = vunpack.c.l.b16 %v1957
        %v2054 = vunpack.c.l.b16 %v1958
        %v2055 = vunpack.c.l.b16 %v1959
        %v2056 = vunpack.c.l.b16 %v1960
        %v2057 = vunpack.c.l.b16 %v1961
        %v2058 = vunpack.c.l.b16 %v1962
        %v2059 = vunpack.c.l.b16 %v1963
        %v2060 = vunpack.c.l.b16 %v1964
        %v2061 = vunpack.c.l.b16 %v1965
        %v2062 = vunpack.c.l.b16 %v1966
        %v2063 = vunpack.c.l.b16 %v1967
        %v2064 = vunpack.c.l.b16 %v1968
        %v2065 = vunpack.c.l.b16 %v1969
        %v2066 = vunpack.c.l.b16 %v1970
        %v2067 = vunpack.c.l.b16 %v1971
        %v2068 = vunpack.c.l.b16 %v1972
        %v2069 = vunpack.c.l.b16 %v1973
        %v2070 = vunpack.c.l.b16 %v1974
        %v2071 = vunpack.c.l.b16 %v1975
        %v2072 = vunpack.c.l.b16 %v1976
        %v2073 = vunpack.c.l.b16 %v1977
        %v2074 = vunpack.c.l.b16 %v1978
        %v2075 = vunpack.c.l.b16 %v1979
        %v2076 = vunpack.c.l.b16 %v1980
        %v2077 = vunpack.c.l.b16 %v1981
        %v2078 = vunpack.c.l.b16 %v1982
        %v2079 = vunpack.c.l.b16 %v1983
        %v2080 = vunpack.c.l.b16 %v1984
        %v2081 = vunpack.c.l.b16 %v1985
        %v2082 = vunpack.c.l.b16 %v1986
        %v2083 = vunpack.c.l.b16 %v1987
        %v2084 = vunpack.c.l.b16 %v1988
        %v2085 = vunpack.c.l.b16 %v1989
        %v2086 = vunpack.c.l.b16 %v1990
        %v2087 = vunpack.c.l.b16 %v1991
        %v2088 = vunpack.c.l.b16 %v1992
        %v2089 = vunpack.c.l.b16 %v1993
        %v2090 = vunpack.c.l.b16 %v1994
        %v2091 = vunpack.c.l.b16 %v1995
        %v2092 = vunpack.c.l.b16 %v1996
        %v2093 = vunpack.c.l.b16 %v1997
        %v2094 = vunpack.c.l.b16 %v1998
        %v2095 = vunpack.c.l.b16 %v1999
        %v2096 = vpack.c.b16 %v2049, %v2048
        %v2097 = vpack.c.b16 %v2051, %v2050
        %v2098 = vpack.c.b16 %v2053, %v2052
        %v2099 = vpack.c.b16 %v2055, %v2054
        %v2100 = vpack.c.b16 %v2057, %v2056
        %v2101 = vpack.c.b16 %v2059, %v2058
        %v2102 = vpack.c.b16 %v2061, %v2060
        %v2103 = vpack.c.b16 %v2063, %v2062
        %v2104 = vpack.c.b16 %v2065, %v2064
        %v2105 = vpack.c.b16 %v2067, %v2066
        %v2106 = vpack.c.b16 %v2069, %v2068
        %v2107 = vpack.c.b16 %v2071, %v2070
        %v2108 = vpack.c.b16 %v2073, %v2072
        %v2109 = vpack.c.b16 %v2075, %v2074
        %v2110 = vpack.c.b16 %v2077, %v2076
        %v2111 = vpack.c.b16 %v2079, %v2078
        %v2112 = vpack.c.b16 %v2081, %v2080
        %v2113 = vpack.c.b16 %v2083, %v2082
        %v2114 = vpack.c.b16 %v2085, %v2084
        %v2115 = vpack.c.b16 %v2087, %v2086
        %v2116 = vpack.c.b16 %v2089, %v2088
        %v2117 = vpack.c.b16 %v2091, %v2090
        %v2118 = vpack.c.b16 %v2093, %v2092
        %v2119 = vpack.c.b16 %v2095, %v2094
        %2144 = vmatprep.subr.bf16.mxu0 0
        %2145 = vmatpush1.bf16.msra.mxu0 %v2103
        %2146 = vmatprep.subr.bf16.mxu0 0
        %2147 = vmatpush1.bf16.msra.mxu0 %v2102
        %2148 = vmatprep.subr.bf16.mxu0 0
        %2149 = vmatpush1.bf16.msra.mxu0 %v2101
        %2150 = vmatprep.subr.bf16.mxu0 0
        %2151 = vmatpush1.bf16.msra.mxu0 %v2100
        %2152 = vmatprep.subr.bf16.mxu0 0
        %2153 = vmatpush1.bf16.msra.mxu0 %v2099
        %2154 = vmatprep.subr.bf16.mxu0 0
        %2155 = vmatpush1.bf16.msra.mxu0 %v2098
        %2156 = vmatprep.subr.bf16.mxu0 0
        %2157 = vmatpush1.bf16.msra.mxu0 %v2097
        %2158 = vmatprep.subr.bf16.mxu0 0
        %2159 = vmatpush1.bf16.msra.mxu0 %v2096
        %2160 = vmatprep.subr.bf16.mxu0 0
        %2161 = vmatpush2.bf16.msra.mxu0 %v2111
        %2162 = vmatprep.subr.bf16.mxu0 0
        %2163 = vmatpush2.bf16.msra.mxu0 %v2110
        %2164 = vmatprep.subr.bf16.mxu0 0
        %2165 = vmatpush2.bf16.msra.mxu0 %v2109
        %2166 = vmatprep.subr.bf16.mxu0 0
        %2167 = vmatpush2.bf16.msra.mxu0 %v2108
        %2168 = vmatprep.subr.bf16.mxu0 0
        %2169 = vmatpush2.bf16.msra.mxu0 %v2107
        %2170 = vmatprep.subr.bf16.mxu0 0
        %2171 = vmatpush2.bf16.msra.mxu0 %v2106
        %2172 = vmatprep.subr.bf16.mxu0 0
        %2173 = vmatpush2.bf16.msra.mxu0 %v2105
        %2174 = vmatprep.subr.bf16.mxu0 0
        %2175 = vmatpush2.bf16.msra.mxu0 %v2104
        %2176 = vmatprep.mubr.bf16.mxu0 %v589
        %2177 = vmatmul.mubr.bf16.gmra.mxu0 %v545
        %v2178 = vpop.f32.mrf.mxu0
        %v2179 = vadd.f32 0.0, %v2178
        %v2180 = vpop.f32.mrf.mxu0
        %v2181 = vpop.f32.mrf.mxu0
        %v2182 = vadd.f32 0.0, %v2181
        %v2183 = vpop.f32.mrf.mxu0
        %2184 = vmatprep.mubr.bf16.mxu0 %v613
        %2185 = vmatmul.mubr.bf16.gmra.mxu0 %v547
        %v2186 = vpop.f32.mrf.mxu0
        %v2187 = vadd.f32 0.0, %v2186
        %v2188 = vpop.f32.mrf.mxu0
        %v2189 = vpop.f32.mrf.mxu0
        %v2190 = vadd.f32 0.0, %v2189
        %v2191 = vpop.f32.mrf.mxu0
        %2192 = vmatprep.mubr.bf16.mxu0 %v625
        %2193 = vmatmul.mubr.bf16.gmra.mxu0 %v548
        %v2194 = vpop.f32.mrf.mxu0
        %v2195 = vadd.f32 0.0, %v2194
        %v2196 = vpop.f32.mrf.mxu0
        %v2197 = vpop.f32.mrf.mxu0
        %v2198 = vadd.f32 0.0, %v2197
        %v2199 = vpop.f32.mrf.mxu0
        %2200 = vmatprep.mubr.bf16.mxu0 %v637
        %2201 = vmatmul.mubr.bf16.gmra.mxu0 %v549
        %v2202 = vpop.f32.mrf.mxu0
        %v2203 = vadd.f32 0.0, %v2202
        %v2204 = vpop.f32.mrf.mxu0
        %v2205 = vpop.f32.mrf.mxu0
        %v2206 = vadd.f32 0.0, %v2205
        %v2207 = vpop.f32.mrf.mxu0
        %2208 = vmatprep.mubr.bf16.mxu0 %v649
        %2209 = vmatmul.mubr.bf16.gmra.mxu0 %v550
        %v2210 = vpop.f32.mrf.mxu0
        %v2211 = vadd.f32 0.0, %v2210
        %v2212 = vpop.f32.mrf.mxu0
        %v2213 = vpop.f32.mrf.mxu0
        %v2214 = vadd.f32 0.0, %v2213
        %v2215 = vpop.f32.mrf.mxu0
        %2216 = vmatprep.mubr.bf16.mxu0 %v661
        %2217 = vmatmul.mubr.bf16.gmra.mxu0 %v551
        %v2218 = vpop.f32.mrf.mxu0
        %v2219 = vadd.f32 0.0, %v2218
        %v2220 = vpop.f32.mrf.mxu0
        %v2221 = vpop.f32.mrf.mxu0
        %v2222 = vadd.f32 0.0, %v2221
        %v2223 = vpop.f32.mrf.mxu0
        %2224 = vmatprep.mubr.bf16.mxu0 %v673
        %2225 = vmatmul.mubr.bf16.gmra.mxu0 %v552
        %v2226 = vpop.f32.mrf.mxu0
        %v2227 = vadd.f32 0.0, %v2226
        %v2228 = vpop.f32.mrf.mxu0
        %v2229 = vpop.f32.mrf.mxu0
        %v2230 = vadd.f32 0.0, %v2229
        %v2231 = vpop.f32.mrf.mxu0
        %2232 = vmatprep.mubr.bf16.mxu0 %v685
        %2233 = vmatmul.mubr.bf16.gmra.mxu0 %v553
        %v2234 = vpop.f32.mrf.mxu0
        %v2235 = vadd.f32 0.0, %v2234
        %v2236 = vpop.f32.mrf.mxu0
        %v2237 = vpop.f32.mrf.mxu0
        %v2238 = vadd.f32 0.0, %v2237
        %v2239 = vpop.f32.mrf.mxu0
        %2240 = vmatprep.mubr.bf16.mxu0 %v697
        %2241 = vmatmul.mubr.bf16.gmra.mxu0 %v554
        %v2242 = vpop.f32.mrf.mxu0
        %v2243 = vadd.f32 0.0, %v2242
        %v2244 = vpop.f32.mrf.mxu0
        %v2245 = vpop.f32.mrf.mxu0
        %v2246 = vadd.f32 0.0, %v2245
        %v2247 = vpop.f32.mrf.mxu0
        %2248 = vmatprep.mubr.bf16.mxu0 %v709
        %2249 = vmatmul.mubr.bf16.gmra.mxu0 %v555
        %v2250 = vpop.f32.mrf.mxu0
        %v2251 = vadd.f32 0.0, %v2250
        %v2252 = vpop.f32.mrf.mxu0
        %v2253 = vpop.f32.mrf.mxu0
        %v2254 = vadd.f32 0.0, %v2253
        %v2255 = vpop.f32.mrf.mxu0
        %2256 = vmatprep.mubr.bf16.mxu0 %v721
        %2257 = vmatmul.mubr.bf16.gmra.mxu0 %v556
        %v2258 = vpop.f32.mrf.mxu0
        %v2259 = vadd.f32 0.0, %v2258
        %v2260 = vpop.f32.mrf.mxu0
        %v2261 = vpop.f32.mrf.mxu0
        %v2262 = vadd.f32 0.0, %v2261
        %v2263 = vpop.f32.mrf.mxu0
        %2264 = vmatprep.mubr.bf16.mxu0 %v733
        %2265 = vmatmul.mubr.bf16.gmra.mxu0 %v557
        %v2266 = vpop.f32.mrf.mxu0
        %v2267 = vadd.f32 0.0, %v2266
        %v2268 = vpop.f32.mrf.mxu0
        %v2269 = vpop.f32.mrf.mxu0
        %v2270 = vadd.f32 0.0, %v2269
        %v2271 = vpop.f32.mrf.mxu0
        %2272 = vmatprep.mubr.bf16.mxu0 %v745
        %2273 = vmatmul.mubr.bf16.gmra.mxu0 %v558
        %v2274 = vpop.f32.mrf.mxu0
        %v2275 = vadd.f32 0.0, %v2274
        %v2276 = vpop.f32.mrf.mxu0
        %v2277 = vpop.f32.mrf.mxu0
        %v2278 = vadd.f32 0.0, %v2277
        %v2279 = vpop.f32.mrf.mxu0
        %2280 = vmatprep.mubr.bf16.mxu0 %v757
        %2281 = vmatmul.mubr.bf16.gmra.mxu0 %v559
        %v2282 = vpop.f32.mrf.mxu0
        %v2283 = vadd.f32 0.0, %v2282
        %v2284 = vpop.f32.mrf.mxu0
        %v2285 = vpop.f32.mrf.mxu0
        %v2286 = vadd.f32 0.0, %v2285
        %v2287 = vpop.f32.mrf.mxu0
        %2288 = vmatprep.mubr.bf16.mxu0 %v769
        %2289 = vmatmul.mubr.bf16.gmra.mxu0 %v560
        %v2290 = vpop.f32.mrf.mxu0
        %v2291 = vadd.f32 0.0, %v2290
        %v2292 = vpop.f32.mrf.mxu0
        %v2293 = vpop.f32.mrf.mxu0
        %v2294 = vadd.f32 0.0, %v2293
        %v2295 = vpop.f32.mrf.mxu0
        %2296 = vmatprep.mubr.bf16.mxu0 %v757
        %2297 = vmatmul.mubr.bf16.gmra.mxu0 %v559
        %v2298 = vpop.f32.mrf.mxu0
        %v2299 = vadd.f32 0.0, %v2298
        %v2300 = vpop.f32.mrf.mxu0
        %v2301 = vpop.f32.mrf.mxu0
        %v2302 = vadd.f32 0.0, %v2301
        %v2303 = vpop.f32.mrf.mxu0
        %2304 = vdwg.mxu0
        %2305 = vmatprep.subr.bf16.mxu0 0
        %2306 = vmatpush1.bf16.msra.mxu0 %v2119
        %2307 = vmatprep.subr.bf16.mxu0 0
        %2308 = vmatpush1.bf16.msra.mxu0 %v2118
        %2309 = vmatprep.subr.bf16.mxu0 0
        %2310 = vmatpush1.bf16.msra.mxu0 %v2117
        %2311 = vmatprep.subr.bf16.mxu0 0
        %2312 = vmatpush1.bf16.msra.mxu0 %v2116
        %2313 = vmatprep.subr.bf16.mxu0 0
        %2314 = vmatpush1.bf16.msra.mxu0 %v2115
        %2315 = vmatprep.subr.bf16.mxu0 0
        %2316 = vmatpush1.bf16.msra.mxu0 %v2114
        %2317 = vmatprep.subr.bf16.mxu0 0
        %2318 = vmatpush1.bf16.msra.mxu0 %v2113
        %2319 = vmatprep.subr.bf16.mxu0 0
        %2320 = vmatpush1.bf16.msra.mxu0 %v2112
        %2321 = vmatprep.subr.bf16.mxu0 0
        %2322 = vmatpush2.bf16.msra.mxu0 0
        %2323 = vmatprep.subr.bf16.mxu0 0
        %2324 = vmatpush2.bf16.msra.mxu0 0
        %2325 = vmatprep.subr.bf16.mxu0 0
        %2326 = vmatpush2.bf16.msra.mxu0 0
        %2327 = vmatprep.subr.bf16.mxu0 0
        %2328 = vmatpush2.bf16.msra.mxu0 0
        %2329 = vmatprep.subr.bf16.mxu0 0
        %2330 = vmatpush2.bf16.msra.mxu0 0
        %2331 = vmatprep.subr.bf16.mxu0 0
        %2332 = vmatpush2.bf16.msra.mxu0 0
        %2333 = vmatprep.subr.bf16.mxu0 0
        %2334 = vmatpush2.bf16.msra.mxu0 0
        %2335 = vmatprep.subr.bf16.mxu0 0
        %2336 = vmatpush2.bf16.msra.mxu0 0
        %2337 = vmatprep.mubr.bf16.mxu0 0
        %2338 = vmatmul.mubr.bf16.gmra.mxu0 %v821
        %v2339 = vpop.f32.mrf.mxu0
        %v2340 = vadd.f32 %v2179, %v2339
        %v2341 = vpop.f32.mrf.mxu0
        %v2342 = vpop.f32.mrf.mxu0
        %v2343 = vadd.f32 %v2182, %v2342
        %v2344 = vpop.f32.mrf.mxu0
        %2345 = vmatprep.mubr.bf16.mxu0 0
        %2346 = vmatmul.mubr.bf16.gmra.mxu0 %v827
        %v2347 = vpop.f32.mrf.mxu0
        %v2348 = vadd.f32 %v2187, %v2347
        %v2349 = vpop.f32.mrf.mxu0
        %v2350 = vpop.f32.mrf.mxu0
        %v2351 = vadd.f32 %v2190, %v2350
        %v2352 = vpop.f32.mrf.mxu0
        %2353 = vmatprep.mubr.bf16.mxu0 0
        %2354 = vmatmul.mubr.bf16.gmra.mxu0 %v830
        %v2355 = vpop.f32.mrf.mxu0
        %v2356 = vadd.f32 %v2195, %v2355
        %v2357 = vpop.f32.mrf.mxu0
        %v2358 = vpop.f32.mrf.mxu0
        %v2359 = vadd.f32 %v2198, %v2358
        %v2360 = vpop.f32.mrf.mxu0
        %2361 = vmatprep.mubr.bf16.mxu0 0
        %2362 = vmatmul.mubr.bf16.gmra.mxu0 %v833
        %v2363 = vpop.f32.mrf.mxu0
        %v2364 = vadd.f32 %v2203, %v2363
        %v2365 = vpop.f32.mrf.mxu0
        %v2366 = vpop.f32.mrf.mxu0
        %v2367 = vadd.f32 %v2206, %v2366
        %v2368 = vpop.f32.mrf.mxu0
        %2369 = vmatprep.mubr.bf16.mxu0 0
        %2370 = vmatmul.mubr.bf16.gmra.mxu0 %v836
        %v2371 = vpop.f32.mrf.mxu0
        %v2372 = vadd.f32 %v2211, %v2371
        %v2373 = vpop.f32.mrf.mxu0
        %v2374 = vpop.f32.mrf.mxu0
        %v2375 = vadd.f32 %v2214, %v2374
        %v2376 = vpop.f32.mrf.mxu0
        %2377 = vmatprep.mubr.bf16.mxu0 0
        %2378 = vmatmul.mubr.bf16.gmra.mxu0 %v839
        %v2379 = vpop.f32.mrf.mxu0
        %v2380 = vadd.f32 %v2219, %v2379
        %v2381 = vpop.f32.mrf.mxu0
        %v2382 = vpop.f32.mrf.mxu0
        %v2383 = vadd.f32 %v2222, %v2382
        %v2384 = vpop.f32.mrf.mxu0
        %2385 = vmatprep.mubr.bf16.mxu0 0
        %2386 = vmatmul.mubr.bf16.gmra.mxu0 %v842
        %v2387 = vpop.f32.mrf.mxu0
        %v2388 = vadd.f32 %v2227, %v2387
        %v2389 = vpop.f32.mrf.mxu0
        %v2390 = vpop.f32.mrf.mxu0
        %v2391 = vadd.f32 %v2230, %v2390
        %v2392 = vpop.f32.mrf.mxu0
        %2393 = vmatprep.mubr.bf16.mxu0 0
        %2394 = vmatmul.mubr.bf16.gmra.mxu0 %v845
        %v2395 = vpop.f32.mrf.mxu0
        %v2396 = vadd.f32 %v2235, %v2395
        %v2397 = vpop.f32.mrf.mxu0
        %v2398 = vpop.f32.mrf.mxu0
        %v2399 = vadd.f32 %v2238, %v2398
        %v2400 = vpop.f32.mrf.mxu0
        %2401 = vmatprep.mubr.bf16.mxu0 0
        %2402 = vmatmul.mubr.bf16.gmra.mxu0 %v848
        %v2403 = vpop.f32.mrf.mxu0
        %v2404 = vadd.f32 %v2243, %v2403
        %v2405 = vpop.f32.mrf.mxu0
        %v2406 = vpop.f32.mrf.mxu0
        %v2407 = vadd.f32 %v2246, %v2406
        %v2408 = vpop.f32.mrf.mxu0
        %2409 = vmatprep.mubr.bf16.mxu0 0
        %2410 = vmatmul.mubr.bf16.gmra.mxu0 %v851
        %v2411 = vpop.f32.mrf.mxu0
        %v2412 = vadd.f32 %v2251, %v2411
        %v2413 = vpop.f32.mrf.mxu0
        %v2414 = vpop.f32.mrf.mxu0
        %v2415 = vadd.f32 %v2254, %v2414
        %v2416 = vpop.f32.mrf.mxu0
        %2417 = vmatprep.mubr.bf16.mxu0 0
        %2418 = vmatmul.mubr.bf16.gmra.mxu0 %v854
        %v2419 = vpop.f32.mrf.mxu0
        %v2420 = vadd.f32 %v2259, %v2419
        %v2421 = vpop.f32.mrf.mxu0
        %v2422 = vpop.f32.mrf.mxu0
        %v2423 = vadd.f32 %v2262, %v2422
        %v2424 = vpop.f32.mrf.mxu0
        %2425 = vmatprep.mubr.bf16.mxu0 0
        %2426 = vmatmul.mubr.bf16.gmra.mxu0 %v857
        %v2427 = vpop.f32.mrf.mxu0
        %v2428 = vadd.f32 %v2267, %v2427
        %v2429 = vpop.f32.mrf.mxu0
        %v2430 = vpop.f32.mrf.mxu0
        %v2431 = vadd.f32 %v2270, %v2430
        %v2432 = vpop.f32.mrf.mxu0
        %2433 = vmatprep.mubr.bf16.mxu0 0
        %2434 = vmatmul.mubr.bf16.gmra.mxu0 %v860
        %v2435 = vpop.f32.mrf.mxu0
        %v2436 = vadd.f32 %v2275, %v2435
        %v2437 = vpop.f32.mrf.mxu0
        %v2438 = vpop.f32.mrf.mxu0
        %v2439 = vadd.f32 %v2278, %v2438
        %v2440 = vpop.f32.mrf.mxu0
        %2441 = vmatprep.mubr.bf16.mxu0 0
        %2442 = vmatmul.mubr.bf16.gmra.mxu0 %v863
        %v2443 = vpop.f32.mrf.mxu0
        %v2444 = vadd.f32 %v2283, %v2443
        %v2445 = vpop.f32.mrf.mxu0
        %v2446 = vpop.f32.mrf.mxu0
        %v2447 = vadd.f32 %v2286, %v2446
        %v2448 = vpop.f32.mrf.mxu0
        %2449 = vmatprep.mubr.bf16.mxu0 0
        %2450 = vmatmul.mubr.bf16.gmra.mxu0 %v866
        %v2451 = vpop.f32.mrf.mxu0
        %v2452 = vadd.f32 %v2291, %v2451
        %v2453 = vpop.f32.mrf.mxu0
        %v2454 = vpop.f32.mrf.mxu0
        %v2455 = vadd.f32 %v2294, %v2454
        %v2456 = vpop.f32.mrf.mxu0
        %2457 = vmatprep.mubr.bf16.mxu0 0
        %2458 = vmatmul.mubr.bf16.gmra.mxu0 %v863
        %v2459 = vpop.f32.mrf.mxu0
        %v2460 = vadd.f32 %v2299, %v2459
        %v2461 = vpop.f32.mrf.mxu0
        %v2462 = vpop.f32.mrf.mxu0
        %v2463 = vadd.f32 %v2302, %v2462
        %v2464 = vpop.f32.mrf.mxu0
        %2465 = vdwg.mxu0
        %v2466 = vadd.f32 %v1919, %v2340
        %v2467 = vadd.f32 %v1920, %v2343
        %v2468 = vadd.f32 %v1921, %v2348
        %v2469 = vadd.f32 %v1922, %v2351
        %v2470 = vadd.f32 %v1923, %v2356
        %v2471 = vadd.f32 %v1924, %v2359
        %v2472 = vadd.f32 %v1925, %v2364
        %v2473 = vadd.f32 %v1926, %v2367
        %v2474 = vadd.f32 %v1927, %v2372
        %v2475 = vadd.f32 %v1928, %v2375
        %v2476 = vadd.f32 %v1929, %v2380
        %v2477 = vadd.f32 %v1930, %v2383
        %v2478 = vadd.f32 %v1931, %v2388
        %v2479 = vadd.f32 %v1932, %v2391
        %v2480 = vadd.f32 %v1933, %v2396
        %v2481 = vadd.f32 %v1934, %v2399
        %v2482 = vadd.f32 %v1935, %v2404
        %v2483 = vadd.f32 %v1936, %v2407
        %v2484 = vadd.f32 %v1937, %v2412
        %v2485 = vadd.f32 %v1938, %v2415
        %v2486 = vadd.f32 %v1939, %v2420
        %v2487 = vadd.f32 %v1940, %v2423
        %v2488 = vadd.f32 %v1941, %v2428
        %v2489 = vadd.f32 %v1942, %v2431
        %v2490 = vadd.f32 %v1943, %v2436
        %v2491 = vadd.f32 %v1944, %v2439
        %v2492 = vadd.f32 %v1945, %v2444
        %v2493 = vadd.f32 %v1946, %v2447
        %v2494 = vadd.f32 %v1947, %v2452
        %v2495 = vadd.f32 %v1948, %v2455
        %v2496 = vadd.f32 %v1949, %v2460
        %v2497 = vadd.f32 %v1950, %v2463
        %v2498 = vadd.f32 %v2466, %v2467
        %v2499 = vadd.f32 %v2498, %v2468
        %v2500 = vadd.f32 %v2499, %v2469
        %v2501 = vadd.f32 %v2500, %v2470
        %v2502 = vadd.f32 %v2501, %v2471
        %v2503 = vadd.f32 %v2502, %v2472
        %v2504 = vadd.f32 %v2503, %v2473
        %v2505 = vadd.f32 %v2504, %v2474
        %v2506 = vadd.f32 %v2505, %v2475
        %v2507 = vadd.f32 %v2506, %v2476
        %v2508 = vadd.f32 %v2507, %v2477
        %v2509 = vadd.f32 %v2508, %v2478
        %v2510 = vadd.f32 %v2509, %v2479
        %v2511 = vadd.f32 %v2510, %v2480
        %v2512 = vadd.f32 %v2511, %v2481
        %v2513 = vadd.f32 %v2512, %v2482
        %v2514 = vadd.f32 %v2513, %v2483
        %v2515 = vadd.f32 %v2514, %v2484
        %v2516 = vadd.f32 %v2515, %v2485
        %v2517 = vadd.f32 %v2516, %v2486
        %v2518 = vadd.f32 %v2517, %v2487
        %v2519 = vadd.f32 %v2518, %v2488
        %v2520 = vadd.f32 %v2519, %v2489
        %v2521 = vadd.f32 %v2520, %v2490
        %v2522 = vadd.f32 %v2521, %v2491
        %v2523 = vadd.f32 %v2522, %v2492
        %v2524 = vadd.f32 %v2523, %v2493
        %v2525 = vadd.f32 %v2524, %v2494
        %v2526 = vadd.f32 %v2525, %v2495
        %v2527 = vadd.f32 %v2526, %v2496
        %v2528 = vadd.f32 %v2527, %v2497
        %v2529 = vrot.slane %v2528, 4
        %v2530 = vadd.f32 %v2528, %v2529
        %v2531 = vrot.slane %v2530, 2
        %v2532 = vadd.f32 %v2530, %v2531
        %v2533 = vrot.slane %v2532, 1
        %v2534 = vadd.f32 %v2532, %v2533
        %v2535 = vmul.f32 %v2466, %v2466
        %v2536 = vmul.f32 %v2467, %v2467
        %v2537 = vmul.f32 %v2468, %v2468
        %v2538 = vmul.f32 %v2469, %v2469
        %v2539 = vmul.f32 %v2470, %v2470
        %v2540 = vmul.f32 %v2471, %v2471
        %v2541 = vmul.f32 %v2472, %v2472
        %v2542 = vmul.f32 %v2473, %v2473
        %v2543 = vmul.f32 %v2474, %v2474
        %v2544 = vmul.f32 %v2475, %v2475
        %v2545 = vmul.f32 %v2476, %v2476
        %v2546 = vmul.f32 %v2477, %v2477
        %v2547 = vmul.f32 %v2478, %v2478
        %v2548 = vmul.f32 %v2479, %v2479
        %v2549 = vmul.f32 %v2480, %v2480
        %v2550 = vmul.f32 %v2481, %v2481
        %v2551 = vmul.f32 %v2482, %v2482
        %v2552 = vmul.f32 %v2483, %v2483
        %v2553 = vmul.f32 %v2484, %v2484
        %v2554 = vmul.f32 %v2485, %v2485
        %v2555 = vmul.f32 %v2486, %v2486
        %v2556 = vmul.f32 %v2487, %v2487
        %v2557 = vmul.f32 %v2488, %v2488
        %v2558 = vmul.f32 %v2489, %v2489
        %v2559 = vmul.f32 %v2490, %v2490
        %v2560 = vmul.f32 %v2491, %v2491
        %v2561 = vmul.f32 %v2492, %v2492
        %v2562 = vmul.f32 %v2493, %v2493
        %v2563 = vmul.f32 %v2494, %v2494
        %v2564 = vmul.f32 %v2495, %v2495
        %v2565 = vmul.f32 %v2496, %v2496
        %v2566 = vmul.f32 %v2497, %v2497
        %v2567 = vadd.f32 %v2535, %v2536
        %v2568 = vadd.f32 %v2567, %v2537
        %v2569 = vadd.f32 %v2568, %v2538
        %v2570 = vadd.f32 %v2569, %v2539
        %v2571 = vadd.f32 %v2570, %v2540
        %v2572 = vadd.f32 %v2571, %v2541
        %v2573 = vadd.f32 %v2572, %v2542
        %v2574 = vadd.f32 %v2573, %v2543
        %v2575 = vadd.f32 %v2574, %v2544
        %v2576 = vadd.f32 %v2575, %v2545
        %v2577 = vadd.f32 %v2576, %v2546
        %v2578 = vadd.f32 %v2577, %v2547
        %v2579 = vadd.f32 %v2578, %v2548
        %v2580 = vadd.f32 %v2579, %v2549
        %v2581 = vadd.f32 %v2580, %v2550
        %v2582 = vadd.f32 %v2581, %v2551
        %v2583 = vadd.f32 %v2582, %v2552
        %v2584 = vadd.f32 %v2583, %v2553
        %v2585 = vadd.f32 %v2584, %v2554
        %v2586 = vadd.f32 %v2585, %v2555
        %v2587 = vadd.f32 %v2586, %v2556
        %v2588 = vadd.f32 %v2587, %v2557
        %v2589 = vadd.f32 %v2588, %v2558
        %v2590 = vadd.f32 %v2589, %v2559
        %v2591 = vadd.f32 %v2590, %v2560
        %v2592 = vadd.f32 %v2591, %v2561
        %v2593 = vadd.f32 %v2592, %v2562
        %v2594 = vadd.f32 %v2593, %v2563
        %v2595 = vadd.f32 %v2594, %v2564
        %v2596 = vadd.f32 %v2595, %v2565
        %v2597 = vadd.f32 %v2596, %v2566
        %v2598 = vrot.slane %v2597, 4
        %v2599 = vadd.f32 %v2597, %v2598
        %v2600 = vrot.slane %v2599, 2
        %v2601 = vadd.f32 %v2599, %v2600
        %v2602 = vrot.slane %v2601, 1
        %v2603 = vadd.f32 %v2601, %v2602
        %v2604 = vmul.f32 %v2534, 0.00390625
        %v2605 = vmul.f32 %v2603, 0.00390625
        %v2606 = vmul.f32 %v2604, %v2604
        %v2607 = vsub.f32 %v2605, %v2606
        %v2608 = vmax.f32 %v2607, 0.0
        %v2609 = vsub.f32 %v2466, %v2604
        %v2610 = vsub.f32 %v2467, %v2604
        %v2611 = vsub.f32 %v2468, %v2604
        %v2612 = vsub.f32 %v2469, %v2604
        %v2613 = vsub.f32 %v2470, %v2604
        %v2614 = vsub.f32 %v2471, %v2604
        %v2615 = vsub.f32 %v2472, %v2604
        %v2616 = vsub.f32 %v2473, %v2604
        %v2617 = vsub.f32 %v2474, %v2604
        %v2618 = vsub.f32 %v2475, %v2604
        %v2619 = vsub.f32 %v2476, %v2604
        %v2620 = vsub.f32 %v2477, %v2604
        %v2621 = vsub.f32 %v2478, %v2604
        %v2622 = vsub.f32 %v2479, %v2604
        %v2623 = vsub.f32 %v2480, %v2604
        %v2624 = vsub.f32 %v2481, %v2604
        %v2625 = vsub.f32 %v2482, %v2604
        %v2626 = vsub.f32 %v2483, %v2604
        %v2627 = vsub.f32 %v2484, %v2604
        %v2628 = vsub.f32 %v2485, %v2604
        %v2629 = vsub.f32 %v2486, %v2604
        %v2630 = vsub.f32 %v2487, %v2604
        %v2631 = vsub.f32 %v2488, %v2604
        %v2632 = vsub.f32 %v2489, %v2604
        %v2633 = vsub.f32 %v2490, %v2604
        %v2634 = vsub.f32 %v2491, %v2604
        %v2635 = vsub.f32 %v2492, %v2604
        %v2636 = vsub.f32 %v2493, %v2604
        %v2637 = vsub.f32 %v2494, %v2604
        %v2638 = vsub.f32 %v2495, %v2604
        %v2639 = vsub.f32 %v2496, %v2604
        %v2640 = vsub.f32 %v2497, %v2604
        %v2641 = vadd.f32 %v2608, 1e-05
        %v2642 = vrsqrt.pop %v2641
        %v2643 = vmul.f32 %v2609, %v2642
        %v2644 = vmul.f32 %v2610, %v2642
        %v2645 = vmul.f32 %v2611, %v2642
        %v2646 = vmul.f32 %v2612, %v2642
        %v2647 = vmul.f32 %v2613, %v2642
        %v2648 = vmul.f32 %v2614, %v2642
        %v2649 = vmul.f32 %v2615, %v2642
        %v2650 = vmul.f32 %v2616, %v2642
        %v2651 = vmul.f32 %v2617, %v2642
        %v2652 = vmul.f32 %v2618, %v2642
        %v2653 = vmul.f32 %v2619, %v2642
        %v2654 = vmul.f32 %v2620, %v2642
        %v2655 = vmul.f32 %v2621, %v2642
        %v2656 = vmul.f32 %v2622, %v2642
        %v2657 = vmul.f32 %v2623, %v2642
        %v2658 = vmul.f32 %v2624, %v2642
        %v2659 = vmul.f32 %v2625, %v2642
        %v2660 = vmul.f32 %v2626, %v2642
        %v2661 = vmul.f32 %v2627, %v2642
        %v2662 = vmul.f32 %v2628, %v2642
        %v2663 = vmul.f32 %v2629, %v2642
        %v2664 = vmul.f32 %v2630, %v2642
        %v2665 = vmul.f32 %v2631, %v2642
        %v2666 = vmul.f32 %v2632, %v2642
        %v2667 = vmul.f32 %v2633, %v2642
        %v2668 = vmul.f32 %v2634, %v2642
        %v2669 = vmul.f32 %v2635, %v2642
        %v2670 = vmul.f32 %v2636, %v2642
        %v2671 = vmul.f32 %v2637, %v2642
        %v2672 = vmul.f32 %v2638, %v2642
        %v2673 = vmul.f32 %v2639, %v2642
        %v2674 = vmul.f32 %v2640, %v2642
        %vm2675 = vcmp.ge.f32.partialorder %v2643, 0.0
        %vm2676 = vcmp.ge.f32.partialorder %v2644, 0.0
        %vm2677 = vcmp.ge.f32.partialorder %v2645, 0.0
        %vm2678 = vcmp.ge.f32.partialorder %v2646, 0.0
        %vm2679 = vcmp.ge.f32.partialorder %v2647, 0.0
        %vm2680 = vcmp.ge.f32.partialorder %v2648, 0.0
        %vm2681 = vcmp.ge.f32.partialorder %v2649, 0.0
        %vm2682 = vcmp.ge.f32.partialorder %v2650, 0.0
        %vm2683 = vcmp.ge.f32.partialorder %v2651, 0.0
        %vm2684 = vcmp.ge.f32.partialorder %v2652, 0.0
        %vm2685 = vcmp.ge.f32.partialorder %v2653, 0.0
        %vm2686 = vcmp.ge.f32.partialorder %v2654, 0.0
        %vm2687 = vcmp.ge.f32.partialorder %v2655, 0.0
        %vm2688 = vcmp.ge.f32.partialorder %v2656, 0.0
        %vm2689 = vcmp.ge.f32.partialorder %v2657, 0.0
        %vm2690 = vcmp.ge.f32.partialorder %v2658, 0.0
        %vm2691 = vcmp.ge.f32.partialorder %v2659, 0.0
        %vm2692 = vcmp.ge.f32.partialorder %v2660, 0.0
        %vm2693 = vcmp.ge.f32.partialorder %v2661, 0.0
        %vm2694 = vcmp.ge.f32.partialorder %v2662, 0.0
        %vm2695 = vcmp.ge.f32.partialorder %v2663, 0.0
        %vm2696 = vcmp.ge.f32.partialorder %v2664, 0.0
        %vm2697 = vcmp.ge.f32.partialorder %v2665, 0.0
        %vm2698 = vcmp.ge.f32.partialorder %v2666, 0.0
        %vm2699 = vcmp.ge.f32.partialorder %v2667, 0.0
        %vm2700 = vcmp.ge.f32.partialorder %v2668, 0.0
        %vm2701 = vcmp.ge.f32.partialorder %v2669, 0.0
        %vm2702 = vcmp.ge.f32.partialorder %v2670, 0.0
        %vm2703 = vcmp.ge.f32.partialorder %v2671, 0.0
        %vm2704 = vcmp.ge.f32.partialorder %v2672, 0.0
        %vm2705 = vcmp.ge.f32.partialorder %v2673, 0.0
        %vm2706 = vcmp.ge.f32.partialorder %v2674, 0.0
        %v2707 = vstv %s301
        %v2708 = vmul.f32 %v2707, %v2643
        %v2709 = vmul.f32 %v2707, %v2644
        %v2710 = vmul.f32 %v2707, %v2645
        %v2711 = vmul.f32 %v2707, %v2646
        %v2712 = vmul.f32 %v2707, %v2647
        %v2713 = vmul.f32 %v2707, %v2648
        %v2714 = vmul.f32 %v2707, %v2649
        %v2715 = vmul.f32 %v2707, %v2650
        %v2716 = vmul.f32 %v2707, %v2651
        %v2717 = vmul.f32 %v2707, %v2652
        %v2718 = vmul.f32 %v2707, %v2653
        %v2719 = vmul.f32 %v2707, %v2654
        %v2720 = vmul.f32 %v2707, %v2655
        %v2721 = vmul.f32 %v2707, %v2656
        %v2722 = vmul.f32 %v2707, %v2657
        %v2723 = vmul.f32 %v2707, %v2658
        %v2724 = vmul.f32 %v2707, %v2659
        %v2725 = vmul.f32 %v2707, %v2660
        %v2726 = vmul.f32 %v2707, %v2661
        %v2727 = vmul.f32 %v2707, %v2662
        %v2728 = vmul.f32 %v2707, %v2663
        %v2729 = vmul.f32 %v2707, %v2664
        %v2730 = vmul.f32 %v2707, %v2665
        %v2731 = vmul.f32 %v2707, %v2666
        %v2732 = vmul.f32 %v2707, %v2667
        %v2733 = vmul.f32 %v2707, %v2668
        %v2734 = vmul.f32 %v2707, %v2669
        %v2735 = vmul.f32 %v2707, %v2670
        %v2736 = vmul.f32 %v2707, %v2671
        %v2737 = vmul.f32 %v2707, %v2672
        %v2738 = vmul.f32 %v2707, %v2673
        %v2739 = vmul.f32 %v2707, %v2674
        %v2740 = vsel %vm2675, %v2643, %v2708
        %v2741 = vsel %vm2676, %v2644, %v2709
        %v2742 = vsel %vm2677, %v2645, %v2710
        %v2743 = vsel %vm2678, %v2646, %v2711
        %v2744 = vsel %vm2679, %v2647, %v2712
        %v2745 = vsel %vm2680, %v2648, %v2713
        %v2746 = vsel %vm2681, %v2649, %v2714
        %v2747 = vsel %vm2682, %v2650, %v2715
        %v2748 = vsel %vm2683, %v2651, %v2716
        %v2749 = vsel %vm2684, %v2652, %v2717
        %v2750 = vsel %vm2685, %v2653, %v2718
        %v2751 = vsel %vm2686, %v2654, %v2719
        %v2752 = vsel %vm2687, %v2655, %v2720
        %v2753 = vsel %vm2688, %v2656, %v2721
        %v2754 = vsel %vm2689, %v2657, %v2722
        %v2755 = vsel %vm2690, %v2658, %v2723
        %v2756 = vsel %vm2691, %v2659, %v2724
        %v2757 = vsel %vm2692, %v2660, %v2725
        %v2758 = vsel %vm2693, %v2661, %v2726
        %v2759 = vsel %vm2694, %v2662, %v2727
        %v2760 = vsel %vm2695, %v2663, %v2728
        %v2761 = vsel %vm2696, %v2664, %v2729
        %v2762 = vsel %vm2697, %v2665, %v2730
        %v2763 = vsel %vm2698, %v2666, %v2731
        %v2764 = vsel %vm2699, %v2667, %v2732
        %v2765 = vsel %vm2700, %v2668, %v2733
        %v2766 = vsel %vm2701, %v2669, %v2734
        %v2767 = vsel %vm2702, %v2670, %v2735
        %v2768 = vsel %vm2703, %v2671, %v2736
        %v2769 = vsel %vm2704, %v2672, %v2737
        %v2770 = vsel %vm2705, %v2673, %v2738
        %v2771 = vsel %vm2706, %v2674, %v2739
        %v2772 = vpack.c.bf16 %v2741, %v2740
        %v2773 = vpack.c.bf16 %v2743, %v2742
        %v2774 = vpack.c.bf16 %v2745, %v2744
        %v2775 = vpack.c.bf16 %v2747, %v2746
        %v2776 = vpack.c.bf16 %v2749, %v2748
        %v2777 = vpack.c.bf16 %v2751, %v2750
        %v2778 = vpack.c.bf16 %v2753, %v2752
        %v2779 = vpack.c.bf16 %v2755, %v2754
        %v2780 = vpack.c.bf16 %v2757, %v2756
        %v2781 = vpack.c.bf16 %v2759, %v2758
        %v2782 = vpack.c.bf16 %v2761, %v2760
        %v2783 = vpack.c.bf16 %v2763, %v2762
        %v2784 = vpack.c.bf16 %v2765, %v2764
        %v2785 = vpack.c.bf16 %v2767, %v2766
        %v2786 = vpack.c.bf16 %v2769, %v2768
        %v2787 = vpack.c.bf16 %v2771, %v2770
        %v2789 = vshrl.u32 %v2773, 16
        %v2792 = vshrl.u32 %v2772, 16
        %v2795 = vshrl.u32 %v2774, 16
        %v2798 = vshrl.u32 %v2775, 16
        %v2801 = vshrl.u32 %v2776, 16
        %v2804 = vshrl.u32 %v2777, 16
        %v2807 = vshrl.u32 %v2778, 16
        %v2810 = vshrl.u32 %v2779, 16
        %v2813 = vshrl.u32 %v2780, 16
        %v2816 = vshrl.u32 %v2781, 16
        %v2819 = vshrl.u32 %v2782, 16
        %v2822 = vshrl.u32 %v2783, 16
        %v2825 = vshrl.u32 %v2784, 16
        %v2828 = vshrl.u32 %v2785, 16
        %v2831 = vshrl.u32 %v2786, 16
        %v2834 = vshrl.u32 %v2787, 16
        %v2852 = vrot.slane %v2789, 7
        %v2853 = vshll.u32 %v2773, 16
        %v2855 = vor.u32 %v2852, %v2853
        %v2856 = vrot.slane %v2792, 7
        %v2857 = vshll.u32 %v2772, 16
        %v2859 = vor.u32 %v2856, %v2857
        %v2860 = vrot.slane %v2795, 7
        %v2861 = vshll.u32 %v2774, 16
        %v2863 = vor.u32 %v2860, %v2861
        %v2864 = vrot.slane %v2798, 7
        %v2865 = vshll.u32 %v2775, 16
        %v2867 = vor.u32 %v2864, %v2865
        %v2868 = vrot.slane %v2801, 7
        %v2869 = vshll.u32 %v2776, 16
        %v2871 = vor.u32 %v2868, %v2869
        %v2872 = vrot.slane %v2804, 7
        %v2873 = vshll.u32 %v2777, 16
        %v2875 = vor.u32 %v2872, %v2873
        %v2876 = vrot.slane %v2807, 7
        %v2877 = vshll.u32 %v2778, 16
        %v2879 = vor.u32 %v2876, %v2877
        %v2880 = vrot.slane %v2810, 7
        %v2881 = vshll.u32 %v2779, 16
        %v2883 = vor.u32 %v2880, %v2881
        %v2884 = vrot.slane %v2813, 7
        %v2885 = vshll.u32 %v2780, 16
        %v2887 = vor.u32 %v2884, %v2885
        %v2888 = vrot.slane %v2816, 7
        %v2889 = vshll.u32 %v2781, 16
        %v2891 = vor.u32 %v2888, %v2889
        %v2892 = vrot.slane %v2819, 7
        %v2893 = vshll.u32 %v2782, 16
        %v2895 = vor.u32 %v2892, %v2893
        %v2896 = vrot.slane %v2822, 7
        %v2897 = vshll.u32 %v2783, 16
        %v2899 = vor.u32 %v2896, %v2897
        %v2900 = vrot.slane %v2825, 7
        %v2901 = vshll.u32 %v2784, 16
        %v2903 = vor.u32 %v2900, %v2901
        %v2904 = vrot.slane %v2828, 7
        %v2905 = vshll.u32 %v2785, 16
        %v2907 = vor.u32 %v2904, %v2905
        %v2908 = vrot.slane %v2831, 7
        %v2909 = vshll.u32 %v2786, 16
        %v2911 = vor.u32 %v2908, %v2909
        %v2912 = vrot.slane %v2834, 7
        %v2913 = vshll.u32 %v2787, 16
        %v2915 = vor.u32 %v2912, %v2913
        %v2948 = vrot.slane %v2853, 7
        %v2949 = vrot.slane %v2857, 7
        %v2950 = vrot.slane %v2861, 7
        %v2951 = vrot.slane %v2865, 7
        %v2952 = vrot.slane %v2869, 7
        %v2953 = vrot.slane %v2873, 7
        %v2954 = vrot.slane %v2877, 7
        %v2955 = vrot.slane %v2881, 7
        %v2956 = vrot.slane %v2885, 7
        %v2957 = vrot.slane %v2889, 7
        %v2958 = vrot.slane %v2893, 7
        %v2959 = vrot.slane %v2897, 7
        %v2960 = vrot.slane %v2901, 7
        %v2961 = vrot.slane %v2905, 7
        %v2962 = vrot.slane %v2909, 7
        %v2963 = vrot.slane %v2913, 7
        %v2980 = vsel %vm544, %v2789, %v2855
        %v2981 = vsel %vm544, %v2792, %v2859
        %v2982 = vsel %vm544, %v2795, %v2863
        %v2983 = vsel %vm544, %v2798, %v2867
        %v2984 = vsel %vm544, %v2801, %v2871
        %v2985 = vsel %vm544, %v2804, %v2875
        %v2986 = vsel %vm544, %v2807, %v2879
        %v2987 = vsel %vm544, %v2810, %v2883
        %v2988 = vsel %vm544, %v2813, %v2887
        %v2989 = vsel %vm544, %v2816, %v2891
        %v2990 = vsel %vm544, %v2819, %v2895
        %v2991 = vsel %vm544, %v2822, %v2899
        %v2992 = vsel %vm544, %v2825, %v2903
        %v2993 = vsel %vm544, %v2828, %v2907
        %v2994 = vsel %vm544, %v2831, %v2911
        %v2995 = vsel %vm544, %v2834, %v2915
        %v2996 = vsel %vm544, %v2852, %v2948
        %v2997 = vsel %vm544, %v2856, %v2949
        %v2998 = vsel %vm544, %v2860, %v2950
        %v2999 = vsel %vm544, %v2864, %v2951
        %v3000 = vsel %vm544, %v2868, %v2952
        %v3001 = vsel %vm544, %v2872, %v2953
        %v3002 = vsel %vm544, %v2876, %v2954
        %v3003 = vsel %vm544, %v2880, %v2955
        %v3004 = vsel %vm544, %v2884, %v2956
        %v3005 = vsel %vm544, %v2888, %v2957
        %v3006 = vsel %vm544, %v2892, %v2958
        %v3007 = vsel %vm544, %v2896, %v2959
        %v3008 = vsel %vm544, %v2900, %v2960
        %v3009 = vsel %vm544, %v2904, %v2961
        %v3010 = vsel %vm544, %v2908, %v2962
        %v3011 = vsel %vm544, %v2912, %v2963
        %v3013 = vshrl.u32 %v2980, 16
        %v3015 = vshll.u32 %v2980, 16
        %v3017 = vrot.slane %v3015, 1
        %v3018 = vor.u32 %v3013, %v3017
        %v3020 = vshll.u32 %v2996, 16
        %v3022 = vrot.slane %v3020, 1
        %v3023 = vsel %vm577, %v3018, %v3022
        %v3025 = vshrl.u32 %v2981, 16
        %v3027 = vshll.u32 %v2981, 16
        %v3029 = vrot.slane %v3027, 1
        %v3030 = vor.u32 %v3025, %v3029
        %v3032 = vshll.u32 %v2997, 16
        %v3034 = vrot.slane %v3032, 1
        %v3035 = vsel %vm577, %v3030, %v3034
        %v3037 = vshrl.u32 %v2982, 16
        %v3039 = vshll.u32 %v2982, 16
        %v3041 = vrot.slane %v3039, 1
        %v3042 = vor.u32 %v3037, %v3041
        %v3044 = vshll.u32 %v2998, 16
        %v3046 = vrot.slane %v3044, 1
        %v3047 = vsel %vm577, %v3042, %v3046
        %v3049 = vshrl.u32 %v2983, 16
        %v3051 = vshll.u32 %v2983, 16
        %v3053 = vrot.slane %v3051, 1
        %v3054 = vor.u32 %v3049, %v3053
        %v3056 = vshll.u32 %v2999, 16
        %v3058 = vrot.slane %v3056, 1
        %v3059 = vsel %vm577, %v3054, %v3058
        %v3061 = vshrl.u32 %v2984, 16
        %v3063 = vshll.u32 %v2984, 16
        %v3065 = vrot.slane %v3063, 1
        %v3066 = vor.u32 %v3061, %v3065
        %v3068 = vshll.u32 %v3000, 16
        %v3070 = vrot.slane %v3068, 1
        %v3071 = vsel %vm577, %v3066, %v3070
        %v3073 = vshrl.u32 %v2985, 16
        %v3075 = vshll.u32 %v2985, 16
        %v3077 = vrot.slane %v3075, 1
        %v3078 = vor.u32 %v3073, %v3077
        %v3080 = vshll.u32 %v3001, 16
        %v3082 = vrot.slane %v3080, 1
        %v3083 = vsel %vm577, %v3078, %v3082
        %v3085 = vshrl.u32 %v2986, 16
        %v3087 = vshll.u32 %v2986, 16
        %v3089 = vrot.slane %v3087, 1
        %v3090 = vor.u32 %v3085, %v3089
        %v3092 = vshll.u32 %v3002, 16
        %v3094 = vrot.slane %v3092, 1
        %v3095 = vsel %vm577, %v3090, %v3094
        %v3097 = vshrl.u32 %v2987, 16
        %v3099 = vshll.u32 %v2987, 16
        %v3101 = vrot.slane %v3099, 1
        %v3102 = vor.u32 %v3097, %v3101
        %v3104 = vshll.u32 %v3003, 16
        %v3106 = vrot.slane %v3104, 1
        %v3107 = vsel %vm577, %v3102, %v3106
        %v3109 = vshrl.u32 %v2988, 16
        %v3111 = vshll.u32 %v2988, 16
        %v3113 = vrot.slane %v3111, 1
        %v3114 = vor.u32 %v3109, %v3113
        %v3116 = vshll.u32 %v3004, 16
        %v3118 = vrot.slane %v3116, 1
        %v3119 = vsel %vm577, %v3114, %v3118
        %v3121 = vshrl.u32 %v2989, 16
        %v3123 = vshll.u32 %v2989, 16
        %v3125 = vrot.slane %v3123, 1
        %v3126 = vor.u32 %v3121, %v3125
        %v3128 = vshll.u32 %v3005, 16
        %v3130 = vrot.slane %v3128, 1
        %v3131 = vsel %vm577, %v3126, %v3130
        %v3133 = vshrl.u32 %v2990, 16
        %v3135 = vshll.u32 %v2990, 16
        %v3137 = vrot.slane %v3135, 1
        %v3138 = vor.u32 %v3133, %v3137
        %v3140 = vshll.u32 %v3006, 16
        %v3142 = vrot.slane %v3140, 1
        %v3143 = vsel %vm577, %v3138, %v3142
        %v3145 = vshrl.u32 %v2991, 16
        %v3147 = vshll.u32 %v2991, 16
        %v3149 = vrot.slane %v3147, 1
        %v3150 = vor.u32 %v3145, %v3149
        %v3152 = vshll.u32 %v3007, 16
        %v3154 = vrot.slane %v3152, 1
        %v3155 = vsel %vm577, %v3150, %v3154
        %v3157 = vshrl.u32 %v2992, 16
        %v3159 = vshll.u32 %v2992, 16
        %v3161 = vrot.slane %v3159, 1
        %v3162 = vor.u32 %v3157, %v3161
        %v3164 = vshll.u32 %v3008, 16
        %v3166 = vrot.slane %v3164, 1
        %v3167 = vsel %vm577, %v3162, %v3166
        %v3169 = vshrl.u32 %v2993, 16
        %v3171 = vshll.u32 %v2993, 16
        %v3173 = vrot.slane %v3171, 1
        %v3174 = vor.u32 %v3169, %v3173
        %v3176 = vshll.u32 %v3009, 16
        %v3178 = vrot.slane %v3176, 1
        %v3179 = vsel %vm577, %v3174, %v3178
        %v3181 = vshrl.u32 %v2994, 16
        %v3183 = vshll.u32 %v2994, 16
        %v3185 = vrot.slane %v3183, 1
        %v3186 = vor.u32 %v3181, %v3185
        %v3188 = vshll.u32 %v3010, 16
        %v3190 = vrot.slane %v3188, 1
        %v3191 = vsel %vm577, %v3186, %v3190
        %v3193 = vshrl.u32 %v2995, 16
        %v3195 = vshll.u32 %v2995, 16
        %v3197 = vrot.slane %v3195, 1
        %v3198 = vor.u32 %v3193, %v3197
        %v3200 = vshll.u32 %v3011, 16
        %v3202 = vrot.slane %v3200, 1
        %v3203 = vsel %vm577, %v3198, %v3202
        %v3252 = vrot.slane %v2980, 1
        %v3253 = vrot.slane %v2996, 1
        %v3254 = vsel %vm818, %v3252, %v3253
        %v3255 = vrot.slane %v2981, 1
        %v3256 = vrot.slane %v2997, 1
        %v3257 = vsel %vm818, %v3255, %v3256
        %v3258 = vrot.slane %v2982, 1
        %v3259 = vrot.slane %v2998, 1
        %v3260 = vsel %vm818, %v3258, %v3259
        %v3261 = vrot.slane %v2983, 1
        %v3262 = vrot.slane %v2999, 1
        %v3263 = vsel %vm818, %v3261, %v3262
        %v3264 = vrot.slane %v2984, 1
        %v3265 = vrot.slane %v3000, 1
        %v3266 = vsel %vm818, %v3264, %v3265
        %v3267 = vrot.slane %v2985, 1
        %v3268 = vrot.slane %v3001, 1
        %v3269 = vsel %vm818, %v3267, %v3268
        %v3270 = vrot.slane %v2986, 1
        %v3271 = vrot.slane %v3002, 1
        %v3272 = vsel %vm818, %v3270, %v3271
        %v3273 = vrot.slane %v2987, 1
        %v3274 = vrot.slane %v3003, 1
        %v3275 = vsel %vm818, %v3273, %v3274
        %v3276 = vrot.slane %v2988, 1
        %v3277 = vrot.slane %v3004, 1
        %v3278 = vsel %vm818, %v3276, %v3277
        %v3279 = vrot.slane %v2989, 1
        %v3280 = vrot.slane %v3005, 1
        %v3281 = vsel %vm818, %v3279, %v3280
        %v3282 = vrot.slane %v2990, 1
        %v3283 = vrot.slane %v3006, 1
        %v3284 = vsel %vm818, %v3282, %v3283
        %v3285 = vrot.slane %v2991, 1
        %v3286 = vrot.slane %v3007, 1
        %v3287 = vsel %vm818, %v3285, %v3286
        %v3288 = vrot.slane %v2992, 1
        %v3289 = vrot.slane %v3008, 1
        %v3290 = vsel %vm818, %v3288, %v3289
        %v3291 = vrot.slane %v2993, 1
        %v3292 = vrot.slane %v3009, 1
        %v3293 = vsel %vm818, %v3291, %v3292
        %v3294 = vrot.slane %v2994, 1
        %v3295 = vrot.slane %v3010, 1
        %v3296 = vsel %vm818, %v3294, %v3295
        %v3297 = vrot.slane %v2995, 1
        %v3298 = vrot.slane %v3011, 1
        %v3299 = vsel %vm818, %v3297, %v3298
        %v3316 = vld [vmem:[#allocation8] sm:$0xf]
        %v3317 = vld [vmem:[#allocation8 + $0x4] sm:$0xf]
        %v3318 = vld [vmem:[#allocation8 + $0x8] sm:$0xf]
        %v3319 = vld [vmem:[#allocation8 + $0xc] sm:$0xf]
        %v3320 = vld [vmem:[#allocation8 + $0x10] sm:$0xf]
        %v3321 = vld [vmem:[#allocation8 + $0x14] sm:$0xf]
        %v3322 = vld [vmem:[#allocation8 + $0x18] sm:$0xf]
        %v3323 = vld [vmem:[#allocation8 + $0x1c] sm:$0xf]
        %v3324 = vld [vmem:[#allocation8 + $0x20] sm:$0xf]
        %v3325 = vld [vmem:[#allocation8 + $0x24] sm:$0xf]
        %v3326 = vld [vmem:[#allocation8 + $0x28] sm:$0xf]
        %v3327 = vld [vmem:[#allocation8 + $0x2c] sm:$0xf]
        %v3328 = vld [vmem:[#allocation8 + $0x30] sm:$0xf]
        %v3329 = vld [vmem:[#allocation8 + $0x34] sm:$0xf]
        %v3330 = vld [vmem:[#allocation8 + $0x38] sm:$0xf]
        %v3331 = vld [vmem:[#allocation8 + $0x3c] sm:$0xf]
        %v3332 = vld [vmem:[#allocation8 + $0x40] sm:$0xf]
        %v3333 = vld [vmem:[#allocation8 + $0x44] sm:$0xf]
        %v3334 = vld [vmem:[#allocation8 + $0x48] sm:$0xf]
        %v3335 = vld [vmem:[#allocation8 + $0x4c] sm:$0xf]
        %v3336 = vld [vmem:[#allocation8 + $0x50] sm:$0xf]
        %v3337 = vld [vmem:[#allocation8 + $0x54] sm:$0xf]
        %v3338 = vld [vmem:[#allocation8 + $0x58] sm:$0xf]
        %v3339 = vld [vmem:[#allocation8 + $0x5c] sm:$0xf]
        %v3340 = vld [vmem:[#allocation8 + $0x60] sm:$0xf]
        %v3341 = vld [vmem:[#allocation8 + $0x64] sm:$0xf]
        %v3342 = vld [vmem:[#allocation8 + $0x68] sm:$0xf]
        %v3343 = vld [vmem:[#allocation8 + $0x6c] sm:$0xf]
        %v3344 = vld [vmem:[#allocation8 + $0x70] sm:$0xf]
        %v3345 = vld [vmem:[#allocation8 + $0x74] sm:$0xf]
        %v3346 = vld [vmem:[#allocation8 + $0x78] sm:$0xf]
        %v3347 = vld [vmem:[#allocation8 + $0x7c] sm:$0xf]
        %v3348 = vld [vmem:[#allocation8 + $0x80] sm:$0xf]
        %v3349 = vld [vmem:[#allocation8 + $0x84] sm:$0xf]
        %v3350 = vld [vmem:[#allocation8 + $0x88] sm:$0xf]
        %v3351 = vld [vmem:[#allocation8 + $0x8c] sm:$0xf]
        %v3352 = vld [vmem:[#allocation8 + $0x90] sm:$0xf]
        %v3353 = vld [vmem:[#allocation8 + $0x94] sm:$0xf]
        %v3354 = vld [vmem:[#allocation8 + $0x98] sm:$0xf]
        %v3355 = vld [vmem:[#allocation8 + $0x9c] sm:$0xf]
        %v3356 = vld [vmem:[#allocation8 + $0xa0] sm:$0xf]
        %v3357 = vld [vmem:[#allocation8 + $0xa4] sm:$0xf]
        %v3358 = vld [vmem:[#allocation8 + $0xa8] sm:$0xf]
        %v3359 = vld [vmem:[#allocation8 + $0xac] sm:$0xf]
        %v3360 = vld [vmem:[#allocation8 + $0xb0] sm:$0xf]
        %v3361 = vld [vmem:[#allocation8 + $0xb4] sm:$0xf]
        %v3362 = vld [vmem:[#allocation8 + $0xb8] sm:$0xf]
        %v3363 = vld [vmem:[#allocation8 + $0xbc] sm:$0xf]
        %v3364 = vld [vmem:[%s5] sm:$0x1]
        %v3366 = vlaneseq
        %v3367 = vshrl.u32 %v3366, 7
        %v3368 = vsub.s32 0, %v3367
        %v3369 = vrot.slane %v3364, %v3368
        %v3419 = vunpack.c.l.b16 %v3316
        %v3420 = vunpack.c.l.b16 %v3317
        %v3421 = vunpack.c.l.b16 %v3318
        %v3422 = vunpack.c.l.b16 %v3319
        %v3423 = vunpack.c.l.b16 %v3320
        %v3424 = vunpack.c.l.b16 %v3321
        %v3425 = vunpack.c.l.b16 %v3322
        %v3426 = vunpack.c.l.b16 %v3323
        %v3427 = vunpack.c.l.b16 %v3324
        %v3428 = vunpack.c.l.b16 %v3325
        %v3429 = vunpack.c.l.b16 %v3326
        %v3430 = vunpack.c.l.b16 %v3327
        %v3431 = vunpack.c.l.b16 %v3328
        %v3432 = vunpack.c.l.b16 %v3329
        %v3433 = vunpack.c.l.b16 %v3330
        %v3434 = vunpack.c.l.b16 %v3331
        %v3435 = vunpack.c.l.b16 %v3332
        %v3436 = vunpack.c.l.b16 %v3333
        %v3437 = vunpack.c.l.b16 %v3334
        %v3438 = vunpack.c.l.b16 %v3335
        %v3439 = vunpack.c.l.b16 %v3336
        %v3440 = vunpack.c.l.b16 %v3337
        %v3441 = vunpack.c.l.b16 %v3338
        %v3442 = vunpack.c.l.b16 %v3339
        %v3443 = vunpack.c.l.b16 %v3340
        %v3444 = vunpack.c.l.b16 %v3341
        %v3445 = vunpack.c.l.b16 %v3342
        %v3446 = vunpack.c.l.b16 %v3343
        %v3447 = vunpack.c.l.b16 %v3344
        %v3448 = vunpack.c.l.b16 %v3345
        %v3449 = vunpack.c.l.b16 %v3346
        %v3450 = vunpack.c.l.b16 %v3347
        %v3451 = vunpack.c.l.b16 %v3348
        %v3452 = vunpack.c.l.b16 %v3349
        %v3453 = vunpack.c.l.b16 %v3350
        %v3454 = vunpack.c.l.b16 %v3351
        %v3455 = vunpack.c.l.b16 %v3352
        %v3456 = vunpack.c.l.b16 %v3353
        %v3457 = vunpack.c.l.b16 %v3354
        %v3458 = vunpack.c.l.b16 %v3355
        %v3459 = vunpack.c.l.b16 %v3356
        %v3460 = vunpack.c.l.b16 %v3357
        %v3461 = vunpack.c.l.b16 %v3358
        %v3462 = vunpack.c.l.b16 %v3359
        %v3463 = vunpack.c.l.b16 %v3360
        %v3464 = vunpack.c.l.b16 %v3361
        %v3465 = vunpack.c.l.b16 %v3362
        %v3466 = vunpack.c.l.b16 %v3363
        %v3467 = vpack.c.b16 %v3420, %v3419
        %v3468 = vpack.c.b16 %v3422, %v3421
        %v3469 = vpack.c.b16 %v3424, %v3423
        %v3470 = vpack.c.b16 %v3426, %v3425
        %v3471 = vpack.c.b16 %v3428, %v3427
        %v3472 = vpack.c.b16 %v3430, %v3429
        %v3473 = vpack.c.b16 %v3432, %v3431
        %v3474 = vpack.c.b16 %v3434, %v3433
        %v3475 = vpack.c.b16 %v3436, %v3435
        %v3476 = vpack.c.b16 %v3438, %v3437
        %v3477 = vpack.c.b16 %v3440, %v3439
        %v3478 = vpack.c.b16 %v3442, %v3441
        %v3479 = vpack.c.b16 %v3444, %v3443
        %v3480 = vpack.c.b16 %v3446, %v3445
        %v3481 = vpack.c.b16 %v3448, %v3447
        %v3482 = vpack.c.b16 %v3450, %v3449
        %v3483 = vpack.c.b16 %v3452, %v3451
        %v3484 = vpack.c.b16 %v3454, %v3453
        %v3485 = vpack.c.b16 %v3456, %v3455
        %v3486 = vpack.c.b16 %v3458, %v3457
        %v3487 = vpack.c.b16 %v3460, %v3459
        %v3488 = vpack.c.b16 %v3462, %v3461
        %v3489 = vpack.c.b16 %v3464, %v3463
        %v3490 = vpack.c.b16 %v3466, %v3465
        %3515 = vmatprep.subr.bf16.mxu0 0
        %3516 = vmatpush1.bf16.msra.mxu0 %v3474
        %3517 = vmatprep.subr.bf16.mxu0 0
        %3518 = vmatpush1.bf16.msra.mxu0 %v3473
        %3519 = vmatprep.subr.bf16.mxu0 0
        %3520 = vmatpush1.bf16.msra.mxu0 %v3472
        %3521 = vmatprep.subr.bf16.mxu0 0
        %3522 = vmatpush1.bf16.msra.mxu0 %v3471
        %3523 = vmatprep.subr.bf16.mxu0 0
        %3524 = vmatpush1.bf16.msra.mxu0 %v3470
        %3525 = vmatprep.subr.bf16.mxu0 0
        %3526 = vmatpush1.bf16.msra.mxu0 %v3469
        %3527 = vmatprep.subr.bf16.mxu0 0
        %3528 = vmatpush1.bf16.msra.mxu0 %v3468
        %3529 = vmatprep.subr.bf16.mxu0 0
        %3530 = vmatpush1.bf16.msra.mxu0 %v3467
        %3531 = vmatprep.subr.bf16.mxu0 0
        %3532 = vmatpush2.bf16.msra.mxu0 %v3482
        %3533 = vmatprep.subr.bf16.mxu0 0
        %3534 = vmatpush2.bf16.msra.mxu0 %v3481
        %3535 = vmatprep.subr.bf16.mxu0 0
        %3536 = vmatpush2.bf16.msra.mxu0 %v3480
        %3537 = vmatprep.subr.bf16.mxu0 0
        %3538 = vmatpush2.bf16.msra.mxu0 %v3479
        %3539 = vmatprep.subr.bf16.mxu0 0
        %3540 = vmatpush2.bf16.msra.mxu0 %v3478
        %3541 = vmatprep.subr.bf16.mxu0 0
        %3542 = vmatpush2.bf16.msra.mxu0 %v3477
        %3543 = vmatprep.subr.bf16.mxu0 0
        %3544 = vmatpush2.bf16.msra.mxu0 %v3476
        %3545 = vmatprep.subr.bf16.mxu0 0
        %3546 = vmatpush2.bf16.msra.mxu0 %v3475
        %3547 = vmatprep.mubr.bf16.mxu0 %v3023
        %3548 = vmatmul.mubr.bf16.gmra.mxu0 %v2980
        %v3549 = vpop.f32.mrf.mxu0
        %v3550 = vadd.f32 %v3369, %v3549
        %v3551 = vpop.f32.mrf.mxu0
        %v3552 = vpop.f32.mrf.mxu0
        %v3553 = vadd.f32 %v3369, %v3552
        %v3554 = vpop.f32.mrf.mxu0
        %3555 = vmatprep.mubr.bf16.mxu0 %v3035
        %3556 = vmatmul.mubr.bf16.gmra.mxu0 %v2981
        %v3557 = vpop.f32.mrf.mxu0
        %v3558 = vadd.f32 %v3369, %v3557
        %v3559 = vpop.f32.mrf.mxu0
        %v3560 = vpop.f32.mrf.mxu0
        %v3561 = vadd.f32 %v3369, %v3560
        %v3562 = vpop.f32.mrf.mxu0
        %3563 = vmatprep.mubr.bf16.mxu0 %v3023
        %3564 = vmatmul.mubr.bf16.gmra.mxu0 %v2980
        %v3565 = vpop.f32.mrf.mxu0
        %v3566 = vadd.f32 %v3369, %v3565
        %v3567 = vpop.f32.mrf.mxu0
        %v3568 = vpop.f32.mrf.mxu0
        %v3569 = vadd.f32 %v3369, %v3568
        %v3570 = vpop.f32.mrf.mxu0
        %3571 = vmatprep.mubr.bf16.mxu0 %v3047
        %3572 = vmatmul.mubr.bf16.gmra.mxu0 %v2982
        %v3573 = vpop.f32.mrf.mxu0
        %v3574 = vadd.f32 %v3369, %v3573
        %v3575 = vpop.f32.mrf.mxu0
        %v3576 = vpop.f32.mrf.mxu0
        %v3577 = vadd.f32 %v3369, %v3576
        %v3578 = vpop.f32.mrf.mxu0
        %3579 = vmatprep.mubr.bf16.mxu0 %v3059
        %3580 = vmatmul.mubr.bf16.gmra.mxu0 %v2983
        %v3581 = vpop.f32.mrf.mxu0
        %v3582 = vadd.f32 %v3369, %v3581
        %v3583 = vpop.f32.mrf.mxu0
        %v3584 = vpop.f32.mrf.mxu0
        %v3585 = vadd.f32 %v3369, %v3584
        %v3586 = vpop.f32.mrf.mxu0
        %3587 = vmatprep.mubr.bf16.mxu0 %v3071
        %3588 = vmatmul.mubr.bf16.gmra.mxu0 %v2984
        %v3589 = vpop.f32.mrf.mxu0
        %v3590 = vadd.f32 %v3369, %v3589
        %v3591 = vpop.f32.mrf.mxu0
        %v3592 = vpop.f32.mrf.mxu0
        %v3593 = vadd.f32 %v3369, %v3592
        %v3594 = vpop.f32.mrf.mxu0
        %3595 = vmatprep.mubr.bf16.mxu0 %v3083
        %3596 = vmatmul.mubr.bf16.gmra.mxu0 %v2985
        %v3597 = vpop.f32.mrf.mxu0
        %v3598 = vadd.f32 %v3369, %v3597
        %v3599 = vpop.f32.mrf.mxu0
        %v3600 = vpop.f32.mrf.mxu0
        %v3601 = vadd.f32 %v3369, %v3600
        %v3602 = vpop.f32.mrf.mxu0
        %3603 = vmatprep.mubr.bf16.mxu0 %v3095
        %3604 = vmatmul.mubr.bf16.gmra.mxu0 %v2986
        %v3605 = vpop.f32.mrf.mxu0
        %v3606 = vadd.f32 %v3369, %v3605
        %v3607 = vpop.f32.mrf.mxu0
        %v3608 = vpop.f32.mrf.mxu0
        %v3609 = vadd.f32 %v3369, %v3608
        %v3610 = vpop.f32.mrf.mxu0
        %3611 = vmatprep.mubr.bf16.mxu0 %v3107
        %3612 = vmatmul.mubr.bf16.gmra.mxu0 %v2987
        %v3613 = vpop.f32.mrf.mxu0
        %v3614 = vadd.f32 %v3369, %v3613
        %v3615 = vpop.f32.mrf.mxu0
        %v3616 = vpop.f32.mrf.mxu0
        %v3617 = vadd.f32 %v3369, %v3616
        %v3618 = vpop.f32.mrf.mxu0
        %3619 = vmatprep.mubr.bf16.mxu0 %v3119
        %3620 = vmatmul.mubr.bf16.gmra.mxu0 %v2988
        %v3621 = vpop.f32.mrf.mxu0
        %v3622 = vadd.f32 %v3369, %v3621
        %v3623 = vpop.f32.mrf.mxu0
        %v3624 = vpop.f32.mrf.mxu0
        %v3625 = vadd.f32 %v3369, %v3624
        %v3626 = vpop.f32.mrf.mxu0
        %3627 = vmatprep.mubr.bf16.mxu0 %v3131
        %3628 = vmatmul.mubr.bf16.gmra.mxu0 %v2989
        %v3629 = vpop.f32.mrf.mxu0
        %v3630 = vadd.f32 %v3369, %v3629
        %v3631 = vpop.f32.mrf.mxu0
        %v3632 = vpop.f32.mrf.mxu0
        %v3633 = vadd.f32 %v3369, %v3632
        %v3634 = vpop.f32.mrf.mxu0
        %3635 = vmatprep.mubr.bf16.mxu0 %v3143
        %3636 = vmatmul.mubr.bf16.gmra.mxu0 %v2990
        %v3637 = vpop.f32.mrf.mxu0
        %v3638 = vadd.f32 %v3369, %v3637
        %v3639 = vpop.f32.mrf.mxu0
        %v3640 = vpop.f32.mrf.mxu0
        %v3641 = vadd.f32 %v3369, %v3640
        %v3642 = vpop.f32.mrf.mxu0
        %3643 = vmatprep.mubr.bf16.mxu0 %v3155
        %3644 = vmatmul.mubr.bf16.gmra.mxu0 %v2991
        %v3645 = vpop.f32.mrf.mxu0
        %v3646 = vadd.f32 %v3369, %v3645
        %v3647 = vpop.f32.mrf.mxu0
        %v3648 = vpop.f32.mrf.mxu0
        %v3649 = vadd.f32 %v3369, %v3648
        %v3650 = vpop.f32.mrf.mxu0
        %3651 = vmatprep.mubr.bf16.mxu0 %v3167
        %3652 = vmatmul.mubr.bf16.gmra.mxu0 %v2992
        %v3653 = vpop.f32.mrf.mxu0
        %v3654 = vadd.f32 %v3369, %v3653
        %v3655 = vpop.f32.mrf.mxu0
        %v3656 = vpop.f32.mrf.mxu0
        %v3657 = vadd.f32 %v3369, %v3656
        %v3658 = vpop.f32.mrf.mxu0
        %3659 = vmatprep.mubr.bf16.mxu0 %v3179
        %3660 = vmatmul.mubr.bf16.gmra.mxu0 %v2993
        %v3661 = vpop.f32.mrf.mxu0
        %v3662 = vadd.f32 %v3369, %v3661
        %v3663 = vpop.f32.mrf.mxu0
        %v3664 = vpop.f32.mrf.mxu0
        %v3665 = vadd.f32 %v3369, %v3664
        %v3666 = vpop.f32.mrf.mxu0
        %3667 = vmatprep.mubr.bf16.mxu0 %v3191
        %3668 = vmatmul.mubr.bf16.gmra.mxu0 %v2994
        %v3669 = vpop.f32.mrf.mxu0
        %v3670 = vadd.f32 %v3369, %v3669
        %v3671 = vpop.f32.mrf.mxu0
        %v3672 = vpop.f32.mrf.mxu0
        %v3673 = vadd.f32 %v3369, %v3672
        %v3674 = vpop.f32.mrf.mxu0
        %3675 = vdwg.mxu0
        %3676 = vmatprep.subr.bf16.mxu0 0
        %3677 = vmatpush1.bf16.msra.mxu0 %v3490
        %3678 = vmatprep.subr.bf16.mxu0 0
        %3679 = vmatpush1.bf16.msra.mxu0 %v3489
        %3680 = vmatprep.subr.bf16.mxu0 0
        %3681 = vmatpush1.bf16.msra.mxu0 %v3488
        %3682 = vmatprep.subr.bf16.mxu0 0
        %3683 = vmatpush1.bf16.msra.mxu0 %v3487
        %3684 = vmatprep.subr.bf16.mxu0 0
        %3685 = vmatpush1.bf16.msra.mxu0 %v3486
        %3686 = vmatprep.subr.bf16.mxu0 0
        %3687 = vmatpush1.bf16.msra.mxu0 %v3485
        %3688 = vmatprep.subr.bf16.mxu0 0
        %3689 = vmatpush1.bf16.msra.mxu0 %v3484
        %3690 = vmatprep.subr.bf16.mxu0 0
        %3691 = vmatpush1.bf16.msra.mxu0 %v3483
        %3692 = vmatprep.subr.bf16.mxu0 0
        %3693 = vmatpush2.bf16.msra.mxu0 0
        %3694 = vmatprep.subr.bf16.mxu0 0
        %3695 = vmatpush2.bf16.msra.mxu0 0
        %3696 = vmatprep.subr.bf16.mxu0 0
        %3697 = vmatpush2.bf16.msra.mxu0 0
        %3698 = vmatprep.subr.bf16.mxu0 0
        %3699 = vmatpush2.bf16.msra.mxu0 0
        %3700 = vmatprep.subr.bf16.mxu0 0
        %3701 = vmatpush2.bf16.msra.mxu0 0
        %3702 = vmatprep.subr.bf16.mxu0 0
        %3703 = vmatpush2.bf16.msra.mxu0 0
        %3704 = vmatprep.subr.bf16.mxu0 0
        %3705 = vmatpush2.bf16.msra.mxu0 0
        %3706 = vmatprep.subr.bf16.mxu0 0
        %3707 = vmatpush2.bf16.msra.mxu0 0
        %3708 = vmatprep.mubr.bf16.mxu0 0
        %3709 = vmatmul.mubr.bf16.gmra.mxu0 %v3254
        %v3710 = vpop.f32.mrf.mxu0
        %v3711 = vadd.f32 %v3550, %v3710
        %v3712 = vpop.f32.mrf.mxu0
        %v3713 = vpop.f32.mrf.mxu0
        %v3714 = vadd.f32 %v3553, %v3713
        %v3715 = vpop.f32.mrf.mxu0
        %3716 = vmatprep.mubr.bf16.mxu0 0
        %3717 = vmatmul.mubr.bf16.gmra.mxu0 %v3257
        %v3718 = vpop.f32.mrf.mxu0
        %v3719 = vadd.f32 %v3558, %v3718
        %v3720 = vpop.f32.mrf.mxu0
        %v3721 = vpop.f32.mrf.mxu0
        %v3722 = vadd.f32 %v3561, %v3721
        %v3723 = vpop.f32.mrf.mxu0
        %3724 = vmatprep.mubr.bf16.mxu0 0
        %3725 = vmatmul.mubr.bf16.gmra.mxu0 %v3254
        %v3726 = vpop.f32.mrf.mxu0
        %v3727 = vadd.f32 %v3566, %v3726
        %v3728 = vpop.f32.mrf.mxu0
        %v3729 = vpop.f32.mrf.mxu0
        %v3730 = vadd.f32 %v3569, %v3729
        %v3731 = vpop.f32.mrf.mxu0
        %3732 = vmatprep.mubr.bf16.mxu0 0
        %3733 = vmatmul.mubr.bf16.gmra.mxu0 %v3260
        %v3734 = vpop.f32.mrf.mxu0
        %v3735 = vadd.f32 %v3574, %v3734
        %v3736 = vpop.f32.mrf.mxu0
        %v3737 = vpop.f32.mrf.mxu0
        %v3738 = vadd.f32 %v3577, %v3737
        %v3739 = vpop.f32.mrf.mxu0
        %3740 = vmatprep.mubr.bf16.mxu0 0
        %3741 = vmatmul.mubr.bf16.gmra.mxu0 %v3263
        %v3742 = vpop.f32.mrf.mxu0
        %v3743 = vadd.f32 %v3582, %v3742
        %v3744 = vpop.f32.mrf.mxu0
        %v3745 = vpop.f32.mrf.mxu0
        %v3746 = vadd.f32 %v3585, %v3745
        %v3747 = vpop.f32.mrf.mxu0
        %3748 = vmatprep.mubr.bf16.mxu0 0
        %3749 = vmatmul.mubr.bf16.gmra.mxu0 %v3266
        %v3750 = vpop.f32.mrf.mxu0
        %v3751 = vadd.f32 %v3590, %v3750
        %v3752 = vpop.f32.mrf.mxu0
        %v3753 = vpop.f32.mrf.mxu0
        %v3754 = vadd.f32 %v3593, %v3753
        %v3755 = vpop.f32.mrf.mxu0
        %3756 = vmatprep.mubr.bf16.mxu0 0
        %3757 = vmatmul.mubr.bf16.gmra.mxu0 %v3269
        %v3758 = vpop.f32.mrf.mxu0
        %v3759 = vadd.f32 %v3598, %v3758
        %v3760 = vpop.f32.mrf.mxu0
        %v3761 = vpop.f32.mrf.mxu0
        %v3762 = vadd.f32 %v3601, %v3761
        %v3763 = vpop.f32.mrf.mxu0
        %3764 = vmatprep.mubr.bf16.mxu0 0
        %3765 = vmatmul.mubr.bf16.gmra.mxu0 %v3272
        %v3766 = vpop.f32.mrf.mxu0
        %v3767 = vadd.f32 %v3606, %v3766
        %v3768 = vpop.f32.mrf.mxu0
        %v3769 = vpop.f32.mrf.mxu0
        %v3770 = vadd.f32 %v3609, %v3769
        %v3771 = vpop.f32.mrf.mxu0
        %3772 = vmatprep.mubr.bf16.mxu0 0
        %3773 = vmatmul.mubr.bf16.gmra.mxu0 %v3275
        %v3774 = vpop.f32.mrf.mxu0
        %v3775 = vadd.f32 %v3614, %v3774
        %v3776 = vpop.f32.mrf.mxu0
        %v3777 = vpop.f32.mrf.mxu0
        %v3778 = vadd.f32 %v3617, %v3777
        %v3779 = vpop.f32.mrf.mxu0
        %3780 = vmatprep.mubr.bf16.mxu0 0
        %3781 = vmatmul.mubr.bf16.gmra.mxu0 %v3278
        %v3782 = vpop.f32.mrf.mxu0
        %v3783 = vadd.f32 %v3622, %v3782
        %v3784 = vpop.f32.mrf.mxu0
        %v3785 = vpop.f32.mrf.mxu0
        %v3786 = vadd.f32 %v3625, %v3785
        %v3787 = vpop.f32.mrf.mxu0
        %3788 = vmatprep.mubr.bf16.mxu0 0
        %3789 = vmatmul.mubr.bf16.gmra.mxu0 %v3281
        %v3790 = vpop.f32.mrf.mxu0
        %v3791 = vadd.f32 %v3630, %v3790
        %v3792 = vpop.f32.mrf.mxu0
        %v3793 = vpop.f32.mrf.mxu0
        %v3794 = vadd.f32 %v3633, %v3793
        %v3795 = vpop.f32.mrf.mxu0
        %3796 = vmatprep.mubr.bf16.mxu0 0
        %3797 = vmatmul.mubr.bf16.gmra.mxu0 %v3284
        %v3798 = vpop.f32.mrf.mxu0
        %v3799 = vadd.f32 %v3638, %v3798
        %v3800 = vpop.f32.mrf.mxu0
        %v3801 = vpop.f32.mrf.mxu0
        %v3802 = vadd.f32 %v3641, %v3801
        %v3803 = vpop.f32.mrf.mxu0
        %3804 = vmatprep.mubr.bf16.mxu0 0
        %3805 = vmatmul.mubr.bf16.gmra.mxu0 %v3287
        %v3806 = vpop.f32.mrf.mxu0
        %v3807 = vadd.f32 %v3646, %v3806
        %v3808 = vpop.f32.mrf.mxu0
        %v3809 = vpop.f32.mrf.mxu0
        %v3810 = vadd.f32 %v3649, %v3809
        %v3811 = vpop.f32.mrf.mxu0
        %3812 = vmatprep.mubr.bf16.mxu0 0
        %3813 = vmatmul.mubr.bf16.gmra.mxu0 %v3290
        %v3814 = vpop.f32.mrf.mxu0
        %v3815 = vadd.f32 %v3654, %v3814
        %v3816 = vpop.f32.mrf.mxu0
        %v3817 = vpop.f32.mrf.mxu0
        %v3818 = vadd.f32 %v3657, %v3817
        %v3819 = vpop.f32.mrf.mxu0
        %3820 = vmatprep.mubr.bf16.mxu0 0
        %3821 = vmatmul.mubr.bf16.gmra.mxu0 %v3293
        %v3822 = vpop.f32.mrf.mxu0
        %v3823 = vadd.f32 %v3662, %v3822
        %v3824 = vpop.f32.mrf.mxu0
        %v3825 = vpop.f32.mrf.mxu0
        %v3826 = vadd.f32 %v3665, %v3825
        %v3827 = vpop.f32.mrf.mxu0
        %3828 = vmatprep.mubr.bf16.mxu0 0
        %3829 = vmatmul.mubr.bf16.gmra.mxu0 %v3296
        %v3830 = vpop.f32.mrf.mxu0
        %v3831 = vadd.f32 %v3670, %v3830
        %v3832 = vpop.f32.mrf.mxu0
        %v3833 = vpop.f32.mrf.mxu0
        %v3834 = vadd.f32 %v3673, %v3833
        %v3835 = vpop.f32.mrf.mxu0
        %3836 = vdwg.mxu0
        %s3837 = scalar_lea.vmem [#allocation8], 192
        %v3838 = vld [vmem:[%s3837] sm:$0xf]
        %v3839 = vld [vmem:[%s3837 + $0x4] sm:$0xf]
        %v3840 = vld [vmem:[%s3837 + $0x8] sm:$0xf]
        %v3841 = vld [vmem:[%s3837 + $0xc] sm:$0xf]
        %v3842 = vld [vmem:[%s3837 + $0x10] sm:$0xf]
        %v3843 = vld [vmem:[%s3837 + $0x14] sm:$0xf]
        %v3844 = vld [vmem:[%s3837 + $0x18] sm:$0xf]
        %v3845 = vld [vmem:[%s3837 + $0x1c] sm:$0xf]
        %v3846 = vld [vmem:[%s3837 + $0x20] sm:$0xf]
        %v3847 = vld [vmem:[%s3837 + $0x24] sm:$0xf]
        %v3848 = vld [vmem:[%s3837 + $0x28] sm:$0xf]
        %v3849 = vld [vmem:[%s3837 + $0x2c] sm:$0xf]
        %v3850 = vld [vmem:[%s3837 + $0x30] sm:$0xf]
        %v3851 = vld [vmem:[%s3837 + $0x34] sm:$0xf]
        %v3852 = vld [vmem:[%s3837 + $0x38] sm:$0xf]
        %v3853 = vld [vmem:[%s3837 + $0x3c] sm:$0xf]
        %v3854 = vld [vmem:[%s3837 + $0x40] sm:$0xf]
        %v3855 = vld [vmem:[%s3837 + $0x44] sm:$0xf]
        %v3856 = vld [vmem:[%s3837 + $0x48] sm:$0xf]
        %v3857 = vld [vmem:[%s3837 + $0x4c] sm:$0xf]
        %v3858 = vld [vmem:[%s3837 + $0x50] sm:$0xf]
        %v3859 = vld [vmem:[%s3837 + $0x54] sm:$0xf]
        %v3860 = vld [vmem:[%s3837 + $0x58] sm:$0xf]
        %v3861 = vld [vmem:[%s3837 + $0x5c] sm:$0xf]
        %v3862 = vld [vmem:[%s3837 + $0x60] sm:$0xf]
        %v3863 = vld [vmem:[%s3837 + $0x64] sm:$0xf]
        %v3864 = vld [vmem:[%s3837 + $0x68] sm:$0xf]
        %v3865 = vld [vmem:[%s3837 + $0x6c] sm:$0xf]
        %v3866 = vld [vmem:[%s3837 + $0x70] sm:$0xf]
        %v3867 = vld [vmem:[%s3837 + $0x74] sm:$0xf]
        %v3868 = vld [vmem:[%s3837 + $0x78] sm:$0xf]
        %v3869 = vld [vmem:[%s3837 + $0x7c] sm:$0xf]
        %v3870 = vld [vmem:[%s3837 + $0x80] sm:$0xf]
        %v3871 = vld [vmem:[%s3837 + $0x84] sm:$0xf]
        %v3872 = vld [vmem:[%s3837 + $0x88] sm:$0xf]
        %v3873 = vld [vmem:[%s3837 + $0x8c] sm:$0xf]
        %v3874 = vld [vmem:[%s3837 + $0x90] sm:$0xf]
        %v3875 = vld [vmem:[%s3837 + $0x94] sm:$0xf]
        %v3876 = vld [vmem:[%s3837 + $0x98] sm:$0xf]
        %v3877 = vld [vmem:[%s3837 + $0x9c] sm:$0xf]
        %v3878 = vld [vmem:[%s3837 + $0xa0] sm:$0xf]
        %v3879 = vld [vmem:[%s3837 + $0xa4] sm:$0xf]
        %v3880 = vld [vmem:[%s3837 + $0xa8] sm:$0xf]
        %v3881 = vld [vmem:[%s3837 + $0xac] sm:$0xf]
        %v3882 = vld [vmem:[%s3837 + $0xb0] sm:$0xf]
        %v3883 = vld [vmem:[%s3837 + $0xb4] sm:$0xf]
        %v3884 = vld [vmem:[%s3837 + $0xb8] sm:$0xf]
        %v3885 = vld [vmem:[%s3837 + $0xbc] sm:$0xf]
        %v3934 = vunpack.c.l.b16 %v3838
        %v3935 = vunpack.c.l.b16 %v3839
        %v3936 = vunpack.c.l.b16 %v3840
        %v3937 = vunpack.c.l.b16 %v3841
        %v3938 = vunpack.c.l.b16 %v3842
        %v3939 = vunpack.c.l.b16 %v3843
        %v3940 = vunpack.c.l.b16 %v3844
        %v3941 = vunpack.c.l.b16 %v3845
        %v3942 = vunpack.c.l.b16 %v3846
        %v3943 = vunpack.c.l.b16 %v3847
        %v3944 = vunpack.c.l.b16 %v3848
        %v3945 = vunpack.c.l.b16 %v3849
        %v3946 = vunpack.c.l.b16 %v3850
        %v3947 = vunpack.c.l.b16 %v3851
        %v3948 = vunpack.c.l.b16 %v3852
        %v3949 = vunpack.c.l.b16 %v3853
        %v3950 = vunpack.c.l.b16 %v3854
        %v3951 = vunpack.c.l.b16 %v3855
        %v3952 = vunpack.c.l.b16 %v3856
        %v3953 = vunpack.c.l.b16 %v3857
        %v3954 = vunpack.c.l.b16 %v3858
        %v3955 = vunpack.c.l.b16 %v3859
        %v3956 = vunpack.c.l.b16 %v3860
        %v3957 = vunpack.c.l.b16 %v3861
        %v3958 = vunpack.c.l.b16 %v3862
        %v3959 = vunpack.c.l.b16 %v3863
        %v3960 = vunpack.c.l.b16 %v3864
        %v3961 = vunpack.c.l.b16 %v3865
        %v3962 = vunpack.c.l.b16 %v3866
        %v3963 = vunpack.c.l.b16 %v3867
        %v3964 = vunpack.c.l.b16 %v3868
        %v3965 = vunpack.c.l.b16 %v3869
        %v3966 = vunpack.c.l.b16 %v3870
        %v3967 = vunpack.c.l.b16 %v3871
        %v3968 = vunpack.c.l.b16 %v3872
        %v3969 = vunpack.c.l.b16 %v3873
        %v3970 = vunpack.c.l.b16 %v3874
        %v3971 = vunpack.c.l.b16 %v3875
        %v3972 = vunpack.c.l.b16 %v3876
        %v3973 = vunpack.c.l.b16 %v3877
        %v3974 = vunpack.c.l.b16 %v3878
        %v3975 = vunpack.c.l.b16 %v3879
        %v3976 = vunpack.c.l.b16 %v3880
        %v3977 = vunpack.c.l.b16 %v3881
        %v3978 = vunpack.c.l.b16 %v3882
        %v3979 = vunpack.c.l.b16 %v3883
        %v3980 = vunpack.c.l.b16 %v3884
        %v3981 = vunpack.c.l.b16 %v3885
        %v3982 = vpack.c.b16 %v3935, %v3934
        %v3983 = vpack.c.b16 %v3937, %v3936
        %v3984 = vpack.c.b16 %v3939, %v3938
        %v3985 = vpack.c.b16 %v3941, %v3940
        %v3986 = vpack.c.b16 %v3943, %v3942
        %v3987 = vpack.c.b16 %v3945, %v3944
        %v3988 = vpack.c.b16 %v3947, %v3946
        %v3989 = vpack.c.b16 %v3949, %v3948
        %v3990 = vpack.c.b16 %v3951, %v3950
        %v3991 = vpack.c.b16 %v3953, %v3952
        %v3992 = vpack.c.b16 %v3955, %v3954
        %v3993 = vpack.c.b16 %v3957, %v3956
        %v3994 = vpack.c.b16 %v3959, %v3958
        %v3995 = vpack.c.b16 %v3961, %v3960
        %v3996 = vpack.c.b16 %v3963, %v3962
        %v3997 = vpack.c.b16 %v3965, %v3964
        %v3998 = vpack.c.b16 %v3967, %v3966
        %v3999 = vpack.c.b16 %v3969, %v3968
        %v4000 = vpack.c.b16 %v3971, %v3970
        %v4001 = vpack.c.b16 %v3973, %v3972
        %v4002 = vpack.c.b16 %v3975, %v3974
        %v4003 = vpack.c.b16 %v3977, %v3976
        %v4004 = vpack.c.b16 %v3979, %v3978
        %v4005 = vpack.c.b16 %v3981, %v3980
        %4030 = vmatprep.subr.bf16.mxu0 0
        %4031 = vmatpush1.bf16.msra.mxu0 %v3989
        %4032 = vmatprep.subr.bf16.mxu0 0
        %4033 = vmatpush1.bf16.msra.mxu0 %v3988
        %4034 = vmatprep.subr.bf16.mxu0 0
        %4035 = vmatpush1.bf16.msra.mxu0 %v3987
        %4036 = vmatprep.subr.bf16.mxu0 0
        %4037 = vmatpush1.bf16.msra.mxu0 %v3986
        %4038 = vmatprep.subr.bf16.mxu0 0
        %4039 = vmatpush1.bf16.msra.mxu0 %v3985
        %4040 = vmatprep.subr.bf16.mxu0 0
        %4041 = vmatpush1.bf16.msra.mxu0 %v3984
        %4042 = vmatprep.subr.bf16.mxu0 0
        %4043 = vmatpush1.bf16.msra.mxu0 %v3983
        %4044 = vmatprep.subr.bf16.mxu0 0
        %4045 = vmatpush1.bf16.msra.mxu0 %v3982
        %4046 = vmatprep.subr.bf16.mxu0 0
        %4047 = vmatpush2.bf16.msra.mxu0 %v3997
        %4048 = vmatprep.subr.bf16.mxu0 0
        %4049 = vmatpush2.bf16.msra.mxu0 %v3996
        %4050 = vmatprep.subr.bf16.mxu0 0
        %4051 = vmatpush2.bf16.msra.mxu0 %v3995
        %4052 = vmatprep.subr.bf16.mxu0 0
        %4053 = vmatpush2.bf16.msra.mxu0 %v3994
        %4054 = vmatprep.subr.bf16.mxu0 0
        %4055 = vmatpush2.bf16.msra.mxu0 %v3993
        %4056 = vmatprep.subr.bf16.mxu0 0
        %4057 = vmatpush2.bf16.msra.mxu0 %v3992
        %4058 = vmatprep.subr.bf16.mxu0 0
        %4059 = vmatpush2.bf16.msra.mxu0 %v3991
        %4060 = vmatprep.subr.bf16.mxu0 0
        %4061 = vmatpush2.bf16.msra.mxu0 %v3990
        %4062 = vmatprep.mubr.bf16.mxu0 %v3035
        %4063 = vmatmul.mubr.bf16.gmra.mxu0 %v2981
        %v4064 = vpop.f32.mrf.mxu0
        %v4065 = vadd.f32 0.0, %v4064
        %v4066 = vpop.f32.mrf.mxu0
        %v4067 = vpop.f32.mrf.mxu0
        %v4068 = vadd.f32 0.0, %v4067
        %v4069 = vpop.f32.mrf.mxu0
        %4070 = vmatprep.mubr.bf16.mxu0 %v3023
        %4071 = vmatmul.mubr.bf16.gmra.mxu0 %v2980
        %v4072 = vpop.f32.mrf.mxu0
        %v4073 = vadd.f32 0.0, %v4072
        %v4074 = vpop.f32.mrf.mxu0
        %v4075 = vpop.f32.mrf.mxu0
        %v4076 = vadd.f32 0.0, %v4075
        %v4077 = vpop.f32.mrf.mxu0
        %4078 = vmatprep.mubr.bf16.mxu0 %v3047
        %4079 = vmatmul.mubr.bf16.gmra.mxu0 %v2982
        %v4080 = vpop.f32.mrf.mxu0
        %v4081 = vadd.f32 0.0, %v4080
        %v4082 = vpop.f32.mrf.mxu0
        %v4083 = vpop.f32.mrf.mxu0
        %v4084 = vadd.f32 0.0, %v4083
        %v4085 = vpop.f32.mrf.mxu0
        %4086 = vmatprep.mubr.bf16.mxu0 %v3059
        %4087 = vmatmul.mubr.bf16.gmra.mxu0 %v2983
        %v4088 = vpop.f32.mrf.mxu0
        %v4089 = vadd.f32 0.0, %v4088
        %v4090 = vpop.f32.mrf.mxu0
        %v4091 = vpop.f32.mrf.mxu0
        %v4092 = vadd.f32 0.0, %v4091
        %v4093 = vpop.f32.mrf.mxu0
        %4094 = vmatprep.mubr.bf16.mxu0 %v3071
        %4095 = vmatmul.mubr.bf16.gmra.mxu0 %v2984
        %v4096 = vpop.f32.mrf.mxu0
        %v4097 = vadd.f32 0.0, %v4096
        %v4098 = vpop.f32.mrf.mxu0
        %v4099 = vpop.f32.mrf.mxu0
        %v4100 = vadd.f32 0.0, %v4099
        %v4101 = vpop.f32.mrf.mxu0
        %4102 = vmatprep.mubr.bf16.mxu0 %v3083
        %4103 = vmatmul.mubr.bf16.gmra.mxu0 %v2985
        %v4104 = vpop.f32.mrf.mxu0
        %v4105 = vadd.f32 0.0, %v4104
        %v4106 = vpop.f32.mrf.mxu0
        %v4107 = vpop.f32.mrf.mxu0
        %v4108 = vadd.f32 0.0, %v4107
        %v4109 = vpop.f32.mrf.mxu0
        %4110 = vmatprep.mubr.bf16.mxu0 %v3095
        %4111 = vmatmul.mubr.bf16.gmra.mxu0 %v2986
        %v4112 = vpop.f32.mrf.mxu0
        %v4113 = vadd.f32 0.0, %v4112
        %v4114 = vpop.f32.mrf.mxu0
        %v4115 = vpop.f32.mrf.mxu0
        %v4116 = vadd.f32 0.0, %v4115
        %v4117 = vpop.f32.mrf.mxu0
        %4118 = vmatprep.mubr.bf16.mxu0 %v3107
        %4119 = vmatmul.mubr.bf16.gmra.mxu0 %v2987
        %v4120 = vpop.f32.mrf.mxu0
        %v4121 = vadd.f32 0.0, %v4120
        %v4122 = vpop.f32.mrf.mxu0
        %v4123 = vpop.f32.mrf.mxu0
        %v4124 = vadd.f32 0.0, %v4123
        %v4125 = vpop.f32.mrf.mxu0
        %4126 = vmatprep.mubr.bf16.mxu0 %v3119
        %4127 = vmatmul.mubr.bf16.gmra.mxu0 %v2988
        %v4128 = vpop.f32.mrf.mxu0
        %v4129 = vadd.f32 0.0, %v4128
        %v4130 = vpop.f32.mrf.mxu0
        %v4131 = vpop.f32.mrf.mxu0
        %v4132 = vadd.f32 0.0, %v4131
        %v4133 = vpop.f32.mrf.mxu0
        %4134 = vmatprep.mubr.bf16.mxu0 %v3131
        %4135 = vmatmul.mubr.bf16.gmra.mxu0 %v2989
        %v4136 = vpop.f32.mrf.mxu0
        %v4137 = vadd.f32 0.0, %v4136
        %v4138 = vpop.f32.mrf.mxu0
        %v4139 = vpop.f32.mrf.mxu0
        %v4140 = vadd.f32 0.0, %v4139
        %v4141 = vpop.f32.mrf.mxu0
        %4142 = vmatprep.mubr.bf16.mxu0 %v3143
        %4143 = vmatmul.mubr.bf16.gmra.mxu0 %v2990
        %v4144 = vpop.f32.mrf.mxu0
        %v4145 = vadd.f32 0.0, %v4144
        %v4146 = vpop.f32.mrf.mxu0
        %v4147 = vpop.f32.mrf.mxu0
        %v4148 = vadd.f32 0.0, %v4147
        %v4149 = vpop.f32.mrf.mxu0
        %4150 = vmatprep.mubr.bf16.mxu0 %v3155
        %4151 = vmatmul.mubr.bf16.gmra.mxu0 %v2991
        %v4152 = vpop.f32.mrf.mxu0
        %v4153 = vadd.f32 0.0, %v4152
        %v4154 = vpop.f32.mrf.mxu0
        %v4155 = vpop.f32.mrf.mxu0
        %v4156 = vadd.f32 0.0, %v4155
        %v4157 = vpop.f32.mrf.mxu0
        %4158 = vmatprep.mubr.bf16.mxu0 %v3167
        %4159 = vmatmul.mubr.bf16.gmra.mxu0 %v2992
        %v4160 = vpop.f32.mrf.mxu0
        %v4161 = vadd.f32 0.0, %v4160
        %v4162 = vpop.f32.mrf.mxu0
        %v4163 = vpop.f32.mrf.mxu0
        %v4164 = vadd.f32 0.0, %v4163
        %v4165 = vpop.f32.mrf.mxu0
        %4166 = vmatprep.mubr.bf16.mxu0 %v3179
        %4167 = vmatmul.mubr.bf16.gmra.mxu0 %v2993
        %v4168 = vpop.f32.mrf.mxu0
        %v4169 = vadd.f32 0.0, %v4168
        %v4170 = vpop.f32.mrf.mxu0
        %v4171 = vpop.f32.mrf.mxu0
        %v4172 = vadd.f32 0.0, %v4171
        %v4173 = vpop.f32.mrf.mxu0
        %4174 = vmatprep.mubr.bf16.mxu0 %v3191
        %4175 = vmatmul.mubr.bf16.gmra.mxu0 %v2994
        %v4176 = vpop.f32.mrf.mxu0
        %v4177 = vadd.f32 0.0, %v4176
        %v4178 = vpop.f32.mrf.mxu0
        %v4179 = vpop.f32.mrf.mxu0
        %v4180 = vadd.f32 0.0, %v4179
        %v4181 = vpop.f32.mrf.mxu0
        %4182 = vmatprep.mubr.bf16.mxu0 %v3203
        %4183 = vmatmul.mubr.bf16.gmra.mxu0 %v2995
        %v4184 = vpop.f32.mrf.mxu0
        %v4185 = vadd.f32 0.0, %v4184
        %v4186 = vpop.f32.mrf.mxu0
        %v4187 = vpop.f32.mrf.mxu0
        %v4188 = vadd.f32 0.0, %v4187
        %v4189 = vpop.f32.mrf.mxu0
        %4190 = vdwg.mxu0
        %4191 = vmatprep.subr.bf16.mxu0 0
        %4192 = vmatpush1.bf16.msra.mxu0 %v4005
        %4193 = vmatprep.subr.bf16.mxu0 0
        %4194 = vmatpush1.bf16.msra.mxu0 %v4004
        %4195 = vmatprep.subr.bf16.mxu0 0
        %4196 = vmatpush1.bf16.msra.mxu0 %v4003
        %4197 = vmatprep.subr.bf16.mxu0 0
        %4198 = vmatpush1.bf16.msra.mxu0 %v4002
        %4199 = vmatprep.subr.bf16.mxu0 0
        %4200 = vmatpush1.bf16.msra.mxu0 %v4001
        %4201 = vmatprep.subr.bf16.mxu0 0
        %4202 = vmatpush1.bf16.msra.mxu0 %v4000
        %4203 = vmatprep.subr.bf16.mxu0 0
        %4204 = vmatpush1.bf16.msra.mxu0 %v3999
        %4205 = vmatprep.subr.bf16.mxu0 0
        %4206 = vmatpush1.bf16.msra.mxu0 %v3998
        %4207 = vmatprep.subr.bf16.mxu0 0
        %4208 = vmatpush2.bf16.msra.mxu0 0
        %4209 = vmatprep.subr.bf16.mxu0 0
        %4210 = vmatpush2.bf16.msra.mxu0 0
        %4211 = vmatprep.subr.bf16.mxu0 0
        %4212 = vmatpush2.bf16.msra.mxu0 0
        %4213 = vmatprep.subr.bf16.mxu0 0
        %4214 = vmatpush2.bf16.msra.mxu0 0
        %4215 = vmatprep.subr.bf16.mxu0 0
        %4216 = vmatpush2.bf16.msra.mxu0 0
        %4217 = vmatprep.subr.bf16.mxu0 0
        %4218 = vmatpush2.bf16.msra.mxu0 0
        %4219 = vmatprep.subr.bf16.mxu0 0
        %4220 = vmatpush2.bf16.msra.mxu0 0
        %4221 = vmatprep.subr.bf16.mxu0 0
        %4222 = vmatpush2.bf16.msra.mxu0 0
        %4223 = vmatprep.mubr.bf16.mxu0 0
        %4224 = vmatmul.mubr.bf16.gmra.mxu0 %v3257
        %v4225 = vpop.f32.mrf.mxu0
        %v4226 = vadd.f32 %v4065, %v4225
        %v4227 = vpop.f32.mrf.mxu0
        %v4228 = vpop.f32.mrf.mxu0
        %v4229 = vadd.f32 %v4068, %v4228
        %v4230 = vpop.f32.mrf.mxu0
        %4231 = vmatprep.mubr.bf16.mxu0 0
        %4232 = vmatmul.mubr.bf16.gmra.mxu0 %v3254
        %v4233 = vpop.f32.mrf.mxu0
        %v4234 = vadd.f32 %v4073, %v4233
        %v4235 = vpop.f32.mrf.mxu0
        %v4236 = vpop.f32.mrf.mxu0
        %v4237 = vadd.f32 %v4076, %v4236
        %v4238 = vpop.f32.mrf.mxu0
        %4239 = vmatprep.mubr.bf16.mxu0 0
        %4240 = vmatmul.mubr.bf16.gmra.mxu0 %v3260
        %v4241 = vpop.f32.mrf.mxu0
        %v4242 = vadd.f32 %v4081, %v4241
        %v4243 = vpop.f32.mrf.mxu0
        %v4244 = vpop.f32.mrf.mxu0
        %v4245 = vadd.f32 %v4084, %v4244
        %v4246 = vpop.f32.mrf.mxu0
        %4247 = vmatprep.mubr.bf16.mxu0 0
        %4248 = vmatmul.mubr.bf16.gmra.mxu0 %v3263
        %v4249 = vpop.f32.mrf.mxu0
        %v4250 = vadd.f32 %v4089, %v4249
        %v4251 = vpop.f32.mrf.mxu0
        %v4252 = vpop.f32.mrf.mxu0
        %v4253 = vadd.f32 %v4092, %v4252
        %v4254 = vpop.f32.mrf.mxu0
        %4255 = vmatprep.mubr.bf16.mxu0 0
        %4256 = vmatmul.mubr.bf16.gmra.mxu0 %v3266
        %v4257 = vpop.f32.mrf.mxu0
        %v4258 = vadd.f32 %v4097, %v4257
        %v4259 = vpop.f32.mrf.mxu0
        %v4260 = vpop.f32.mrf.mxu0
        %v4261 = vadd.f32 %v4100, %v4260
        %v4262 = vpop.f32.mrf.mxu0
        %4263 = vmatprep.mubr.bf16.mxu0 0
        %4264 = vmatmul.mubr.bf16.gmra.mxu0 %v3269
        %v4265 = vpop.f32.mrf.mxu0
        %v4266 = vadd.f32 %v4105, %v4265
        %v4267 = vpop.f32.mrf.mxu0
        %v4268 = vpop.f32.mrf.mxu0
        %v4269 = vadd.f32 %v4108, %v4268
        %v4270 = vpop.f32.mrf.mxu0
        %4271 = vmatprep.mubr.bf16.mxu0 0
        %4272 = vmatmul.mubr.bf16.gmra.mxu0 %v3272
        %v4273 = vpop.f32.mrf.mxu0
        %v4274 = vadd.f32 %v4113, %v4273
        %v4275 = vpop.f32.mrf.mxu0
        %v4276 = vpop.f32.mrf.mxu0
        %v4277 = vadd.f32 %v4116, %v4276
        %v4278 = vpop.f32.mrf.mxu0
        %4279 = vmatprep.mubr.bf16.mxu0 0
        %4280 = vmatmul.mubr.bf16.gmra.mxu0 %v3275
        %v4281 = vpop.f32.mrf.mxu0
        %v4282 = vadd.f32 %v4121, %v4281
        %v4283 = vpop.f32.mrf.mxu0
        %v4284 = vpop.f32.mrf.mxu0
        %v4285 = vadd.f32 %v4124, %v4284
        %v4286 = vpop.f32.mrf.mxu0
        %4287 = vmatprep.mubr.bf16.mxu0 0
        %4288 = vmatmul.mubr.bf16.gmra.mxu0 %v3278
        %v4289 = vpop.f32.mrf.mxu0
        %v4290 = vadd.f32 %v4129, %v4289
        %v4291 = vpop.f32.mrf.mxu0
        %v4292 = vpop.f32.mrf.mxu0
        %v4293 = vadd.f32 %v4132, %v4292
        %v4294 = vpop.f32.mrf.mxu0
        %4295 = vmatprep.mubr.bf16.mxu0 0
        %4296 = vmatmul.mubr.bf16.gmra.mxu0 %v3281
        %v4297 = vpop.f32.mrf.mxu0
        %v4298 = vadd.f32 %v4137, %v4297
        %v4299 = vpop.f32.mrf.mxu0
        %v4300 = vpop.f32.mrf.mxu0
        %v4301 = vadd.f32 %v4140, %v4300
        %v4302 = vpop.f32.mrf.mxu0
        %4303 = vmatprep.mubr.bf16.mxu0 0
        %4304 = vmatmul.mubr.bf16.gmra.mxu0 %v3284
        %v4305 = vpop.f32.mrf.mxu0
        %v4306 = vadd.f32 %v4145, %v4305
        %v4307 = vpop.f32.mrf.mxu0
        %v4308 = vpop.f32.mrf.mxu0
        %v4309 = vadd.f32 %v4148, %v4308
        %v4310 = vpop.f32.mrf.mxu0
        %4311 = vmatprep.mubr.bf16.mxu0 0
        %4312 = vmatmul.mubr.bf16.gmra.mxu0 %v3287
        %v4313 = vpop.f32.mrf.mxu0
        %v4314 = vadd.f32 %v4153, %v4313
        %v4315 = vpop.f32.mrf.mxu0
        %v4316 = vpop.f32.mrf.mxu0
        %v4317 = vadd.f32 %v4156, %v4316
        %v4318 = vpop.f32.mrf.mxu0
        %4319 = vmatprep.mubr.bf16.mxu0 0
        %4320 = vmatmul.mubr.bf16.gmra.mxu0 %v3290
        %v4321 = vpop.f32.mrf.mxu0
        %v4322 = vadd.f32 %v4161, %v4321
        %v4323 = vpop.f32.mrf.mxu0
        %v4324 = vpop.f32.mrf.mxu0
        %v4325 = vadd.f32 %v4164, %v4324
        %v4326 = vpop.f32.mrf.mxu0
        %4327 = vmatprep.mubr.bf16.mxu0 0
        %4328 = vmatmul.mubr.bf16.gmra.mxu0 %v3293
        %v4329 = vpop.f32.mrf.mxu0
        %v4330 = vadd.f32 %v4169, %v4329
        %v4331 = vpop.f32.mrf.mxu0
        %v4332 = vpop.f32.mrf.mxu0
        %v4333 = vadd.f32 %v4172, %v4332
        %v4334 = vpop.f32.mrf.mxu0
        %4335 = vmatprep.mubr.bf16.mxu0 0
        %4336 = vmatmul.mubr.bf16.gmra.mxu0 %v3296
        %v4337 = vpop.f32.mrf.mxu0
        %v4338 = vadd.f32 %v4177, %v4337
        %v4339 = vpop.f32.mrf.mxu0
        %v4340 = vpop.f32.mrf.mxu0
        %v4341 = vadd.f32 %v4180, %v4340
        %v4342 = vpop.f32.mrf.mxu0
        %4343 = vmatprep.mubr.bf16.mxu0 0
        %4344 = vmatmul.mubr.bf16.gmra.mxu0 %v3299
        %v4345 = vpop.f32.mrf.mxu0
        %v4346 = vadd.f32 %v4185, %v4345
        %v4347 = vpop.f32.mrf.mxu0
        %v4348 = vpop.f32.mrf.mxu0
        %v4349 = vadd.f32 %v4188, %v4348
        %v4350 = vpop.f32.mrf.mxu0
        %4351 = vdwg.mxu0
        %v4352 = vadd.f32 %v3711, %v4226
        %v4353 = vadd.f32 %v3714, %v4229
        %v4354 = vadd.f32 %v3719, %v4234
        %v4355 = vadd.f32 %v3722, %v4237
        %v4356 = vadd.f32 %v3727, %v4242
        %v4357 = vadd.f32 %v3730, %v4245
        %v4358 = vadd.f32 %v3735, %v4250
        %v4359 = vadd.f32 %v3738, %v4253
        %v4360 = vadd.f32 %v3743, %v4258
        %v4361 = vadd.f32 %v3746, %v4261
        %v4362 = vadd.f32 %v3751, %v4266
        %v4363 = vadd.f32 %v3754, %v4269
        %v4364 = vadd.f32 %v3759, %v4274
        %v4365 = vadd.f32 %v3762, %v4277
        %v4366 = vadd.f32 %v3767, %v4282
        %v4367 = vadd.f32 %v3770, %v4285
        %v4368 = vadd.f32 %v3775, %v4290
        %v4369 = vadd.f32 %v3778, %v4293
        %v4370 = vadd.f32 %v3783, %v4298
        %v4371 = vadd.f32 %v3786, %v4301
        %v4372 = vadd.f32 %v3791, %v4306
        %v4373 = vadd.f32 %v3794, %v4309
        %v4374 = vadd.f32 %v3799, %v4314
        %v4375 = vadd.f32 %v3802, %v4317
        %v4376 = vadd.f32 %v3807, %v4322
        %v4377 = vadd.f32 %v3810, %v4325
        %v4378 = vadd.f32 %v3815, %v4330
        %v4379 = vadd.f32 %v3818, %v4333
        %v4380 = vadd.f32 %v3823, %v4338
        %v4381 = vadd.f32 %v3826, %v4341
        %v4382 = vadd.f32 %v3831, %v4346
        %v4383 = vadd.f32 %v3834, %v4349
        %s4384 = scalar_lea.vmem [#allocation8], 384
        %v4385 = vld [vmem:[%s4384] sm:$0xf]
        %v4386 = vld [vmem:[%s4384 + $0x4] sm:$0xf]
        %v4387 = vld [vmem:[%s4384 + $0x8] sm:$0xf]
        %v4388 = vld [vmem:[%s4384 + $0xc] sm:$0xf]
        %v4389 = vld [vmem:[%s4384 + $0x10] sm:$0xf]
        %v4390 = vld [vmem:[%s4384 + $0x14] sm:$0xf]
        %v4391 = vld [vmem:[%s4384 + $0x18] sm:$0xf]
        %v4392 = vld [vmem:[%s4384 + $0x1c] sm:$0xf]
        %v4393 = vld [vmem:[%s4384 + $0x20] sm:$0xf]
        %v4394 = vld [vmem:[%s4384 + $0x24] sm:$0xf]
        %v4395 = vld [vmem:[%s4384 + $0x28] sm:$0xf]
        %v4396 = vld [vmem:[%s4384 + $0x2c] sm:$0xf]
        %v4397 = vld [vmem:[%s4384 + $0x30] sm:$0xf]
        %v4398 = vld [vmem:[%s4384 + $0x34] sm:$0xf]
        %v4399 = vld [vmem:[%s4384 + $0x38] sm:$0xf]
        %v4400 = vld [vmem:[%s4384 + $0x3c] sm:$0xf]
        %v4401 = vld [vmem:[%s4384 + $0x40] sm:$0xf]
        %v4402 = vld [vmem:[%s4384 + $0x44] sm:$0xf]
        %v4403 = vld [vmem:[%s4384 + $0x48] sm:$0xf]
        %v4404 = vld [vmem:[%s4384 + $0x4c] sm:$0xf]
        %v4405 = vld [vmem:[%s4384 + $0x50] sm:$0xf]
        %v4406 = vld [vmem:[%s4384 + $0x54] sm:$0xf]
        %v4407 = vld [vmem:[%s4384 + $0x58] sm:$0xf]
        %v4408 = vld [vmem:[%s4384 + $0x5c] sm:$0xf]
        %v4409 = vld [vmem:[%s4384 + $0x60] sm:$0xf]
        %v4410 = vld [vmem:[%s4384 + $0x64] sm:$0xf]
        %v4411 = vld [vmem:[%s4384 + $0x68] sm:$0xf]
        %v4412 = vld [vmem:[%s4384 + $0x6c] sm:$0xf]
        %v4413 = vld [vmem:[%s4384 + $0x70] sm:$0xf]
        %v4414 = vld [vmem:[%s4384 + $0x74] sm:$0xf]
        %v4415 = vld [vmem:[%s4384 + $0x78] sm:$0xf]
        %v4416 = vld [vmem:[%s4384 + $0x7c] sm:$0xf]
        %v4417 = vld [vmem:[%s4384 + $0x80] sm:$0xf]
        %v4418 = vld [vmem:[%s4384 + $0x84] sm:$0xf]
        %v4419 = vld [vmem:[%s4384 + $0x88] sm:$0xf]
        %v4420 = vld [vmem:[%s4384 + $0x8c] sm:$0xf]
        %v4421 = vld [vmem:[%s4384 + $0x90] sm:$0xf]
        %v4422 = vld [vmem:[%s4384 + $0x94] sm:$0xf]
        %v4423 = vld [vmem:[%s4384 + $0x98] sm:$0xf]
        %v4424 = vld [vmem:[%s4384 + $0x9c] sm:$0xf]
        %v4425 = vld [vmem:[%s4384 + $0xa0] sm:$0xf]
        %v4426 = vld [vmem:[%s4384 + $0xa4] sm:$0xf]
        %v4427 = vld [vmem:[%s4384 + $0xa8] sm:$0xf]
        %v4428 = vld [vmem:[%s4384 + $0xac] sm:$0xf]
        %v4429 = vld [vmem:[%s4384 + $0xb0] sm:$0xf]
        %v4430 = vld [vmem:[%s4384 + $0xb4] sm:$0xf]
        %v4431 = vld [vmem:[%s4384 + $0xb8] sm:$0xf]
        %v4432 = vld [vmem:[%s4384 + $0xbc] sm:$0xf]
        %v4481 = vunpack.c.l.b16 %v4385
        %v4482 = vunpack.c.l.b16 %v4386
        %v4483 = vunpack.c.l.b16 %v4387
        %v4484 = vunpack.c.l.b16 %v4388
        %v4485 = vunpack.c.l.b16 %v4389
        %v4486 = vunpack.c.l.b16 %v4390
        %v4487 = vunpack.c.l.b16 %v4391
        %v4488 = vunpack.c.l.b16 %v4392
        %v4489 = vunpack.c.l.b16 %v4393
        %v4490 = vunpack.c.l.b16 %v4394
        %v4491 = vunpack.c.l.b16 %v4395
        %v4492 = vunpack.c.l.b16 %v4396
        %v4493 = vunpack.c.l.b16 %v4397
        %v4494 = vunpack.c.l.b16 %v4398
        %v4495 = vunpack.c.l.b16 %v4399
        %v4496 = vunpack.c.l.b16 %v4400
        %v4497 = vunpack.c.l.b16 %v4401
        %v4498 = vunpack.c.l.b16 %v4402
        %v4499 = vunpack.c.l.b16 %v4403
        %v4500 = vunpack.c.l.b16 %v4404
        %v4501 = vunpack.c.l.b16 %v4405
        %v4502 = vunpack.c.l.b16 %v4406
        %v4503 = vunpack.c.l.b16 %v4407
        %v4504 = vunpack.c.l.b16 %v4408
        %v4505 = vunpack.c.l.b16 %v4409
        %v4506 = vunpack.c.l.b16 %v4410
        %v4507 = vunpack.c.l.b16 %v4411
        %v4508 = vunpack.c.l.b16 %v4412
        %v4509 = vunpack.c.l.b16 %v4413
        %v4510 = vunpack.c.l.b16 %v4414
        %v4511 = vunpack.c.l.b16 %v4415
        %v4512 = vunpack.c.l.b16 %v4416
        %v4513 = vunpack.c.l.b16 %v4417
        %v4514 = vunpack.c.l.b16 %v4418
        %v4515 = vunpack.c.l.b16 %v4419
        %v4516 = vunpack.c.l.b16 %v4420
        %v4517 = vunpack.c.l.b16 %v4421
        %v4518 = vunpack.c.l.b16 %v4422
        %v4519 = vunpack.c.l.b16 %v4423
        %v4520 = vunpack.c.l.b16 %v4424
        %v4521 = vunpack.c.l.b16 %v4425
        %v4522 = vunpack.c.l.b16 %v4426
        %v4523 = vunpack.c.l.b16 %v4427
        %v4524 = vunpack.c.l.b16 %v4428
        %v4525 = vunpack.c.l.b16 %v4429
        %v4526 = vunpack.c.l.b16 %v4430
        %v4527 = vunpack.c.l.b16 %v4431
        %v4528 = vunpack.c.l.b16 %v4432
        %v4529 = vpack.c.b16 %v4482, %v4481
        %v4530 = vpack.c.b16 %v4484, %v4483
        %v4531 = vpack.c.b16 %v4486, %v4485
        %v4532 = vpack.c.b16 %v4488, %v4487
        %v4533 = vpack.c.b16 %v4490, %v4489
        %v4534 = vpack.c.b16 %v4492, %v4491
        %v4535 = vpack.c.b16 %v4494, %v4493
        %v4536 = vpack.c.b16 %v4496, %v4495
        %v4537 = vpack.c.b16 %v4498, %v4497
        %v4538 = vpack.c.b16 %v4500, %v4499
        %v4539 = vpack.c.b16 %v4502, %v4501
        %v4540 = vpack.c.b16 %v4504, %v4503
        %v4541 = vpack.c.b16 %v4506, %v4505
        %v4542 = vpack.c.b16 %v4508, %v4507
        %v4543 = vpack.c.b16 %v4510, %v4509
        %v4544 = vpack.c.b16 %v4512, %v4511
        %v4545 = vpack.c.b16 %v4514, %v4513
        %v4546 = vpack.c.b16 %v4516, %v4515
        %v4547 = vpack.c.b16 %v4518, %v4517
        %v4548 = vpack.c.b16 %v4520, %v4519
        %v4549 = vpack.c.b16 %v4522, %v4521
        %v4550 = vpack.c.b16 %v4524, %v4523
        %v4551 = vpack.c.b16 %v4526, %v4525
        %v4552 = vpack.c.b16 %v4528, %v4527
        %4577 = vmatprep.subr.bf16.mxu0 0
        %4578 = vmatpush1.bf16.msra.mxu0 %v4536
        %4579 = vmatprep.subr.bf16.mxu0 0
        %4580 = vmatpush1.bf16.msra.mxu0 %v4535
        %4581 = vmatprep.subr.bf16.mxu0 0
        %4582 = vmatpush1.bf16.msra.mxu0 %v4534
        %4583 = vmatprep.subr.bf16.mxu0 0
        %4584 = vmatpush1.bf16.msra.mxu0 %v4533
        %4585 = vmatprep.subr.bf16.mxu0 0
        %4586 = vmatpush1.bf16.msra.mxu0 %v4532
        %4587 = vmatprep.subr.bf16.mxu0 0
        %4588 = vmatpush1.bf16.msra.mxu0 %v4531
        %4589 = vmatprep.subr.bf16.mxu0 0
        %4590 = vmatpush1.bf16.msra.mxu0 %v4530
        %4591 = vmatprep.subr.bf16.mxu0 0
        %4592 = vmatpush1.bf16.msra.mxu0 %v4529
        %4593 = vmatprep.subr.bf16.mxu0 0
        %4594 = vmatpush2.bf16.msra.mxu0 %v4544
        %4595 = vmatprep.subr.bf16.mxu0 0
        %4596 = vmatpush2.bf16.msra.mxu0 %v4543
        %4597 = vmatprep.subr.bf16.mxu0 0
        %4598 = vmatpush2.bf16.msra.mxu0 %v4542
        %4599 = vmatprep.subr.bf16.mxu0 0
        %4600 = vmatpush2.bf16.msra.mxu0 %v4541
        %4601 = vmatprep.subr.bf16.mxu0 0
        %4602 = vmatpush2.bf16.msra.mxu0 %v4540
        %4603 = vmatprep.subr.bf16.mxu0 0
        %4604 = vmatpush2.bf16.msra.mxu0 %v4539
        %4605 = vmatprep.subr.bf16.mxu0 0
        %4606 = vmatpush2.bf16.msra.mxu0 %v4538
        %4607 = vmatprep.subr.bf16.mxu0 0
        %4608 = vmatpush2.bf16.msra.mxu0 %v4537
        %4609 = vmatprep.mubr.bf16.mxu0 %v3023
        %4610 = vmatmul.mubr.bf16.gmra.mxu0 %v2980
        %v4611 = vpop.f32.mrf.mxu0
        %v4612 = vadd.f32 0.0, %v4611
        %v4613 = vpop.f32.mrf.mxu0
        %v4614 = vpop.f32.mrf.mxu0
        %v4615 = vadd.f32 0.0, %v4614
        %v4616 = vpop.f32.mrf.mxu0
        %4617 = vmatprep.mubr.bf16.mxu0 %v3047
        %4618 = vmatmul.mubr.bf16.gmra.mxu0 %v2982
        %v4619 = vpop.f32.mrf.mxu0
        %v4620 = vadd.f32 0.0, %v4619
        %v4621 = vpop.f32.mrf.mxu0
        %v4622 = vpop.f32.mrf.mxu0
        %v4623 = vadd.f32 0.0, %v4622
        %v4624 = vpop.f32.mrf.mxu0
        %4625 = vmatprep.mubr.bf16.mxu0 %v3059
        %4626 = vmatmul.mubr.bf16.gmra.mxu0 %v2983
        %v4627 = vpop.f32.mrf.mxu0
        %v4628 = vadd.f32 0.0, %v4627
        %v4629 = vpop.f32.mrf.mxu0
        %v4630 = vpop.f32.mrf.mxu0
        %v4631 = vadd.f32 0.0, %v4630
        %v4632 = vpop.f32.mrf.mxu0
        %4633 = vmatprep.mubr.bf16.mxu0 %v3071
        %4634 = vmatmul.mubr.bf16.gmra.mxu0 %v2984
        %v4635 = vpop.f32.mrf.mxu0
        %v4636 = vadd.f32 0.0, %v4635
        %v4637 = vpop.f32.mrf.mxu0
        %v4638 = vpop.f32.mrf.mxu0
        %v4639 = vadd.f32 0.0, %v4638
        %v4640 = vpop.f32.mrf.mxu0
        %4641 = vmatprep.mubr.bf16.mxu0 %v3083
        %4642 = vmatmul.mubr.bf16.gmra.mxu0 %v2985
        %v4643 = vpop.f32.mrf.mxu0
        %v4644 = vadd.f32 0.0, %v4643
        %v4645 = vpop.f32.mrf.mxu0
        %v4646 = vpop.f32.mrf.mxu0
        %v4647 = vadd.f32 0.0, %v4646
        %v4648 = vpop.f32.mrf.mxu0
        %4649 = vmatprep.mubr.bf16.mxu0 %v3095
        %4650 = vmatmul.mubr.bf16.gmra.mxu0 %v2986
        %v4651 = vpop.f32.mrf.mxu0
        %v4652 = vadd.f32 0.0, %v4651
        %v4653 = vpop.f32.mrf.mxu0
        %v4654 = vpop.f32.mrf.mxu0
        %v4655 = vadd.f32 0.0, %v4654
        %v4656 = vpop.f32.mrf.mxu0
        %4657 = vmatprep.mubr.bf16.mxu0 %v3107
        %4658 = vmatmul.mubr.bf16.gmra.mxu0 %v2987
        %v4659 = vpop.f32.mrf.mxu0
        %v4660 = vadd.f32 0.0, %v4659
        %v4661 = vpop.f32.mrf.mxu0
        %v4662 = vpop.f32.mrf.mxu0
        %v4663 = vadd.f32 0.0, %v4662
        %v4664 = vpop.f32.mrf.mxu0
        %4665 = vmatprep.mubr.bf16.mxu0 %v3119
        %4666 = vmatmul.mubr.bf16.gmra.mxu0 %v2988
        %v4667 = vpop.f32.mrf.mxu0
        %v4668 = vadd.f32 0.0, %v4667
        %v4669 = vpop.f32.mrf.mxu0
        %v4670 = vpop.f32.mrf.mxu0
        %v4671 = vadd.f32 0.0, %v4670
        %v4672 = vpop.f32.mrf.mxu0
        %4673 = vmatprep.mubr.bf16.mxu0 %v3131
        %4674 = vmatmul.mubr.bf16.gmra.mxu0 %v2989
        %v4675 = vpop.f32.mrf.mxu0
        %v4676 = vadd.f32 0.0, %v4675
        %v4677 = vpop.f32.mrf.mxu0
        %v4678 = vpop.f32.mrf.mxu0
        %v4679 = vadd.f32 0.0, %v4678
        %v4680 = vpop.f32.mrf.mxu0
        %4681 = vmatprep.mubr.bf16.mxu0 %v3143
        %4682 = vmatmul.mubr.bf16.gmra.mxu0 %v2990
        %v4683 = vpop.f32.mrf.mxu0
        %v4684 = vadd.f32 0.0, %v4683
        %v4685 = vpop.f32.mrf.mxu0
        %v4686 = vpop.f32.mrf.mxu0
        %v4687 = vadd.f32 0.0, %v4686
        %v4688 = vpop.f32.mrf.mxu0
        %4689 = vmatprep.mubr.bf16.mxu0 %v3155
        %4690 = vmatmul.mubr.bf16.gmra.mxu0 %v2991
        %v4691 = vpop.f32.mrf.mxu0
        %v4692 = vadd.f32 0.0, %v4691
        %v4693 = vpop.f32.mrf.mxu0
        %v4694 = vpop.f32.mrf.mxu0
        %v4695 = vadd.f32 0.0, %v4694
        %v4696 = vpop.f32.mrf.mxu0
        %4697 = vmatprep.mubr.bf16.mxu0 %v3167
        %4698 = vmatmul.mubr.bf16.gmra.mxu0 %v2992
        %v4699 = vpop.f32.mrf.mxu0
        %v4700 = vadd.f32 0.0, %v4699
        %v4701 = vpop.f32.mrf.mxu0
        %v4702 = vpop.f32.mrf.mxu0
        %v4703 = vadd.f32 0.0, %v4702
        %v4704 = vpop.f32.mrf.mxu0
        %4705 = vmatprep.mubr.bf16.mxu0 %v3179
        %4706 = vmatmul.mubr.bf16.gmra.mxu0 %v2993
        %v4707 = vpop.f32.mrf.mxu0
        %v4708 = vadd.f32 0.0, %v4707
        %v4709 = vpop.f32.mrf.mxu0
        %v4710 = vpop.f32.mrf.mxu0
        %v4711 = vadd.f32 0.0, %v4710
        %v4712 = vpop.f32.mrf.mxu0
        %4713 = vmatprep.mubr.bf16.mxu0 %v3191
        %4714 = vmatmul.mubr.bf16.gmra.mxu0 %v2994
        %v4715 = vpop.f32.mrf.mxu0
        %v4716 = vadd.f32 0.0, %v4715
        %v4717 = vpop.f32.mrf.mxu0
        %v4718 = vpop.f32.mrf.mxu0
        %v4719 = vadd.f32 0.0, %v4718
        %v4720 = vpop.f32.mrf.mxu0
        %4721 = vmatprep.mubr.bf16.mxu0 %v3203
        %4722 = vmatmul.mubr.bf16.gmra.mxu0 %v2995
        %v4723 = vpop.f32.mrf.mxu0
        %v4724 = vadd.f32 0.0, %v4723
        %v4725 = vpop.f32.mrf.mxu0
        %v4726 = vpop.f32.mrf.mxu0
        %v4727 = vadd.f32 0.0, %v4726
        %v4728 = vpop.f32.mrf.mxu0
        %4729 = vmatprep.mubr.bf16.mxu0 %v3191
        %4730 = vmatmul.mubr.bf16.gmra.mxu0 %v2994
        %v4731 = vpop.f32.mrf.mxu0
        %v4732 = vadd.f32 0.0, %v4731
        %v4733 = vpop.f32.mrf.mxu0
        %v4734 = vpop.f32.mrf.mxu0
        %v4735 = vadd.f32 0.0, %v4734
        %v4736 = vpop.f32.mrf.mxu0
        %4737 = vdwg.mxu0
        %4738 = vmatprep.subr.bf16.mxu0 0
        %4739 = vmatpush1.bf16.msra.mxu0 %v4552
        %4740 = vmatprep.subr.bf16.mxu0 0
        %4741 = vmatpush1.bf16.msra.mxu0 %v4551
        %4742 = vmatprep.subr.bf16.mxu0 0
        %4743 = vmatpush1.bf16.msra.mxu0 %v4550
        %4744 = vmatprep.subr.bf16.mxu0 0
        %4745 = vmatpush1.bf16.msra.mxu0 %v4549
        %4746 = vmatprep.subr.bf16.mxu0 0
        %4747 = vmatpush1.bf16.msra.mxu0 %v4548
        %4748 = vmatprep.subr.bf16.mxu0 0
        %4749 = vmatpush1.bf16.msra.mxu0 %v4547
        %4750 = vmatprep.subr.bf16.mxu0 0
        %4751 = vmatpush1.bf16.msra.mxu0 %v4546
        %4752 = vmatprep.subr.bf16.mxu0 0
        %4753 = vmatpush1.bf16.msra.mxu0 %v4545
        %4754 = vmatprep.subr.bf16.mxu0 0
        %4755 = vmatpush2.bf16.msra.mxu0 0
        %4756 = vmatprep.subr.bf16.mxu0 0
        %4757 = vmatpush2.bf16.msra.mxu0 0
        %4758 = vmatprep.subr.bf16.mxu0 0
        %4759 = vmatpush2.bf16.msra.mxu0 0
        %4760 = vmatprep.subr.bf16.mxu0 0
        %4761 = vmatpush2.bf16.msra.mxu0 0
        %4762 = vmatprep.subr.bf16.mxu0 0
        %4763 = vmatpush2.bf16.msra.mxu0 0
        %4764 = vmatprep.subr.bf16.mxu0 0
        %4765 = vmatpush2.bf16.msra.mxu0 0
        %4766 = vmatprep.subr.bf16.mxu0 0
        %4767 = vmatpush2.bf16.msra.mxu0 0
        %4768 = vmatprep.subr.bf16.mxu0 0
        %4769 = vmatpush2.bf16.msra.mxu0 0
        %4770 = vmatprep.mubr.bf16.mxu0 0
        %4771 = vmatmul.mubr.bf16.gmra.mxu0 %v3254
        %v4772 = vpop.f32.mrf.mxu0
        %v4773 = vadd.f32 %v4612, %v4772
        %v4774 = vpop.f32.mrf.mxu0
        %v4775 = vpop.f32.mrf.mxu0
        %v4776 = vadd.f32 %v4615, %v4775
        %v4777 = vpop.f32.mrf.mxu0
        %4778 = vmatprep.mubr.bf16.mxu0 0
        %4779 = vmatmul.mubr.bf16.gmra.mxu0 %v3260
        %v4780 = vpop.f32.mrf.mxu0
        %v4781 = vadd.f32 %v4620, %v4780
        %v4782 = vpop.f32.mrf.mxu0
        %v4783 = vpop.f32.mrf.mxu0
        %v4784 = vadd.f32 %v4623, %v4783
        %v4785 = vpop.f32.mrf.mxu0
        %4786 = vmatprep.mubr.bf16.mxu0 0
        %4787 = vmatmul.mubr.bf16.gmra.mxu0 %v3263
        %v4788 = vpop.f32.mrf.mxu0
        %v4789 = vadd.f32 %v4628, %v4788
        %v4790 = vpop.f32.mrf.mxu0
        %v4791 = vpop.f32.mrf.mxu0
        %v4792 = vadd.f32 %v4631, %v4791
        %v4793 = vpop.f32.mrf.mxu0
        %4794 = vmatprep.mubr.bf16.mxu0 0
        %4795 = vmatmul.mubr.bf16.gmra.mxu0 %v3266
        %v4796 = vpop.f32.mrf.mxu0
        %v4797 = vadd.f32 %v4636, %v4796
        %v4798 = vpop.f32.mrf.mxu0
        %v4799 = vpop.f32.mrf.mxu0
        %v4800 = vadd.f32 %v4639, %v4799
        %v4801 = vpop.f32.mrf.mxu0
        %4802 = vmatprep.mubr.bf16.mxu0 0
        %4803 = vmatmul.mubr.bf16.gmra.mxu0 %v3269
        %v4804 = vpop.f32.mrf.mxu0
        %v4805 = vadd.f32 %v4644, %v4804
        %v4806 = vpop.f32.mrf.mxu0
        %v4807 = vpop.f32.mrf.mxu0
        %v4808 = vadd.f32 %v4647, %v4807
        %v4809 = vpop.f32.mrf.mxu0
        %4810 = vmatprep.mubr.bf16.mxu0 0
        %4811 = vmatmul.mubr.bf16.gmra.mxu0 %v3272
        %v4812 = vpop.f32.mrf.mxu0
        %v4813 = vadd.f32 %v4652, %v4812
        %v4814 = vpop.f32.mrf.mxu0
        %v4815 = vpop.f32.mrf.mxu0
        %v4816 = vadd.f32 %v4655, %v4815
        %v4817 = vpop.f32.mrf.mxu0
        %4818 = vmatprep.mubr.bf16.mxu0 0
        %4819 = vmatmul.mubr.bf16.gmra.mxu0 %v3275
        %v4820 = vpop.f32.mrf.mxu0
        %v4821 = vadd.f32 %v4660, %v4820
        %v4822 = vpop.f32.mrf.mxu0
        %v4823 = vpop.f32.mrf.mxu0
        %v4824 = vadd.f32 %v4663, %v4823
        %v4825 = vpop.f32.mrf.mxu0
        %4826 = vmatprep.mubr.bf16.mxu0 0
        %4827 = vmatmul.mubr.bf16.gmra.mxu0 %v3278
        %v4828 = vpop.f32.mrf.mxu0
        %v4829 = vadd.f32 %v4668, %v4828
        %v4830 = vpop.f32.mrf.mxu0
        %v4831 = vpop.f32.mrf.mxu0
        %v4832 = vadd.f32 %v4671, %v4831
        %v4833 = vpop.f32.mrf.mxu0
        %4834 = vmatprep.mubr.bf16.mxu0 0
        %4835 = vmatmul.mubr.bf16.gmra.mxu0 %v3281
        %v4836 = vpop.f32.mrf.mxu0
        %v4837 = vadd.f32 %v4676, %v4836
        %v4838 = vpop.f32.mrf.mxu0
        %v4839 = vpop.f32.mrf.mxu0
        %v4840 = vadd.f32 %v4679, %v4839
        %v4841 = vpop.f32.mrf.mxu0
        %4842 = vmatprep.mubr.bf16.mxu0 0
        %4843 = vmatmul.mubr.bf16.gmra.mxu0 %v3284
        %v4844 = vpop.f32.mrf.mxu0
        %v4845 = vadd.f32 %v4684, %v4844
        %v4846 = vpop.f32.mrf.mxu0
        %v4847 = vpop.f32.mrf.mxu0
        %v4848 = vadd.f32 %v4687, %v4847
        %v4849 = vpop.f32.mrf.mxu0
        %4850 = vmatprep.mubr.bf16.mxu0 0
        %4851 = vmatmul.mubr.bf16.gmra.mxu0 %v3287
        %v4852 = vpop.f32.mrf.mxu0
        %v4853 = vadd.f32 %v4692, %v4852
        %v4854 = vpop.f32.mrf.mxu0
        %v4855 = vpop.f32.mrf.mxu0
        %v4856 = vadd.f32 %v4695, %v4855
        %v4857 = vpop.f32.mrf.mxu0
        %4858 = vmatprep.mubr.bf16.mxu0 0
        %4859 = vmatmul.mubr.bf16.gmra.mxu0 %v3290
        %v4860 = vpop.f32.mrf.mxu0
        %v4861 = vadd.f32 %v4700, %v4860
        %v4862 = vpop.f32.mrf.mxu0
        %v4863 = vpop.f32.mrf.mxu0
        %v4864 = vadd.f32 %v4703, %v4863
        %v4865 = vpop.f32.mrf.mxu0
        %4866 = vmatprep.mubr.bf16.mxu0 0
        %4867 = vmatmul.mubr.bf16.gmra.mxu0 %v3293
        %v4868 = vpop.f32.mrf.mxu0
        %v4869 = vadd.f32 %v4708, %v4868
        %v4870 = vpop.f32.mrf.mxu0
        %v4871 = vpop.f32.mrf.mxu0
        %v4872 = vadd.f32 %v4711, %v4871
        %v4873 = vpop.f32.mrf.mxu0
        %4874 = vmatprep.mubr.bf16.mxu0 0
        %4875 = vmatmul.mubr.bf16.gmra.mxu0 %v3296
        %v4876 = vpop.f32.mrf.mxu0
        %v4877 = vadd.f32 %v4716, %v4876
        %v4878 = vpop.f32.mrf.mxu0
        %v4879 = vpop.f32.mrf.mxu0
        %v4880 = vadd.f32 %v4719, %v4879
        %v4881 = vpop.f32.mrf.mxu0
        %4882 = vmatprep.mubr.bf16.mxu0 0
        %4883 = vmatmul.mubr.bf16.gmra.mxu0 %v3299
        %v4884 = vpop.f32.mrf.mxu0
        %v4885 = vadd.f32 %v4724, %v4884
        %v4886 = vpop.f32.mrf.mxu0
        %v4887 = vpop.f32.mrf.mxu0
        %v4888 = vadd.f32 %v4727, %v4887
        %v4889 = vpop.f32.mrf.mxu0
        %4890 = vmatprep.mubr.bf16.mxu0 0
        %4891 = vmatmul.mubr.bf16.gmra.mxu0 %v3296
        %v4892 = vpop.f32.mrf.mxu0
        %v4893 = vadd.f32 %v4732, %v4892
        %v4894 = vpop.f32.mrf.mxu0
        %v4895 = vpop.f32.mrf.mxu0
        %v4896 = vadd.f32 %v4735, %v4895
        %v4897 = vpop.f32.mrf.mxu0
        %4898 = vdwg.mxu0
        %v4899 = vadd.f32 %v4352, %v4773
        %v4900 = vadd.f32 %v4353, %v4776
        %v4901 = vadd.f32 %v4354, %v4781
        %v4902 = vadd.f32 %v4355, %v4784
        %v4903 = vadd.f32 %v4356, %v4789
        %v4904 = vadd.f32 %v4357, %v4792
        %v4905 = vadd.f32 %v4358, %v4797
        %v4906 = vadd.f32 %v4359, %v4800
        %v4907 = vadd.f32 %v4360, %v4805
        %v4908 = vadd.f32 %v4361, %v4808
        %v4909 = vadd.f32 %v4362, %v4813
        %v4910 = vadd.f32 %v4363, %v4816
        %v4911 = vadd.f32 %v4364, %v4821
        %v4912 = vadd.f32 %v4365, %v4824
        %v4913 = vadd.f32 %v4366, %v4829
        %v4914 = vadd.f32 %v4367, %v4832
        %v4915 = vadd.f32 %v4368, %v4837
        %v4916 = vadd.f32 %v4369, %v4840
        %v4917 = vadd.f32 %v4370, %v4845
        %v4918 = vadd.f32 %v4371, %v4848
        %v4919 = vadd.f32 %v4372, %v4853
        %v4920 = vadd.f32 %v4373, %v4856
        %v4921 = vadd.f32 %v4374, %v4861
        %v4922 = vadd.f32 %v4375, %v4864
        %v4923 = vadd.f32 %v4376, %v4869
        %v4924 = vadd.f32 %v4377, %v4872
        %v4925 = vadd.f32 %v4378, %v4877
        %v4926 = vadd.f32 %v4379, %v4880
        %v4927 = vadd.f32 %v4380, %v4885
        %v4928 = vadd.f32 %v4381, %v4888
        %v4929 = vadd.f32 %v4382, %v4893
        %v4930 = vadd.f32 %v4383, %v4896
        %v4931 = vadd.f32 %v4899, %v4900
        %v4932 = vadd.f32 %v4931, %v4901
        %v4933 = vadd.f32 %v4932, %v4902
        %v4934 = vadd.f32 %v4933, %v4903
        %v4935 = vadd.f32 %v4934, %v4904
        %v4936 = vadd.f32 %v4935, %v4905
        %v4937 = vadd.f32 %v4936, %v4906
        %v4938 = vadd.f32 %v4937, %v4907
        %v4939 = vadd.f32 %v4938, %v4908
        %v4940 = vadd.f32 %v4939, %v4909
        %v4941 = vadd.f32 %v4940, %v4910
        %v4942 = vadd.f32 %v4941, %v4911
        %v4943 = vadd.f32 %v4942, %v4912
        %v4944 = vadd.f32 %v4943, %v4913
        %v4945 = vadd.f32 %v4944, %v4914
        %v4946 = vadd.f32 %v4945, %v4915
        %v4947 = vadd.f32 %v4946, %v4916
        %v4948 = vadd.f32 %v4947, %v4917
        %v4949 = vadd.f32 %v4948, %v4918
        %v4950 = vadd.f32 %v4949, %v4919
        %v4951 = vadd.f32 %v4950, %v4920
        %v4952 = vadd.f32 %v4951, %v4921
        %v4953 = vadd.f32 %v4952, %v4922
        %v4954 = vadd.f32 %v4953, %v4923
        %v4955 = vadd.f32 %v4954, %v4924
        %v4956 = vadd.f32 %v4955, %v4925
        %v4957 = vadd.f32 %v4956, %v4926
        %v4958 = vadd.f32 %v4957, %v4927
        %v4959 = vadd.f32 %v4958, %v4928
        %v4960 = vadd.f32 %v4959, %v4929
        %v4961 = vadd.f32 %v4960, %v4930
        %v4962 = vrot.slane %v4961, 4
        %v4963 = vadd.f32 %v4961, %v4962
        %v4964 = vrot.slane %v4963, 2
        %v4965 = vadd.f32 %v4963, %v4964
        %v4966 = vrot.slane %v4965, 1
        %v4967 = vadd.f32 %v4965, %v4966
        %v4968 = vmul.f32 %v4899, %v4899
        %v4969 = vmul.f32 %v4900, %v4900
        %v4970 = vmul.f32 %v4901, %v4901
        %v4971 = vmul.f32 %v4902, %v4902
        %v4972 = vmul.f32 %v4903, %v4903
        %v4973 = vmul.f32 %v4904, %v4904
        %v4974 = vmul.f32 %v4905, %v4905
        %v4975 = vmul.f32 %v4906, %v4906
        %v4976 = vmul.f32 %v4907, %v4907
        %v4977 = vmul.f32 %v4908, %v4908
        %v4978 = vmul.f32 %v4909, %v4909
        %v4979 = vmul.f32 %v4910, %v4910
        %v4980 = vmul.f32 %v4911, %v4911
        %v4981 = vmul.f32 %v4912, %v4912
        %v4982 = vmul.f32 %v4913, %v4913
        %v4983 = vmul.f32 %v4914, %v4914
        %v4984 = vmul.f32 %v4915, %v4915
        %v4985 = vmul.f32 %v4916, %v4916
        %v4986 = vmul.f32 %v4917, %v4917
        %v4987 = vmul.f32 %v4918, %v4918
        %v4988 = vmul.f32 %v4919, %v4919
        %v4989 = vmul.f32 %v4920, %v4920
        %v4990 = vmul.f32 %v4921, %v4921
        %v4991 = vmul.f32 %v4922, %v4922
        %v4992 = vmul.f32 %v4923, %v4923
        %v4993 = vmul.f32 %v4924, %v4924
        %v4994 = vmul.f32 %v4925, %v4925
        %v4995 = vmul.f32 %v4926, %v4926
        %v4996 = vmul.f32 %v4927, %v4927
        %v4997 = vmul.f32 %v4928, %v4928
        %v4998 = vmul.f32 %v4929, %v4929
        %v4999 = vmul.f32 %v4930, %v4930
        %v5000 = vadd.f32 %v4968, %v4969
        %v5001 = vadd.f32 %v5000, %v4970
        %v5002 = vadd.f32 %v5001, %v4971
        %v5003 = vadd.f32 %v5002, %v4972
        %v5004 = vadd.f32 %v5003, %v4973
        %v5005 = vadd.f32 %v5004, %v4974
        %v5006 = vadd.f32 %v5005, %v4975
        %v5007 = vadd.f32 %v5006, %v4976
        %v5008 = vadd.f32 %v5007, %v4977
        %v5009 = vadd.f32 %v5008, %v4978
        %v5010 = vadd.f32 %v5009, %v4979
        %v5011 = vadd.f32 %v5010, %v4980
        %v5012 = vadd.f32 %v5011, %v4981
        %v5013 = vadd.f32 %v5012, %v4982
        %v5014 = vadd.f32 %v5013, %v4983
        %v5015 = vadd.f32 %v5014, %v4984
        %v5016 = vadd.f32 %v5015, %v4985
        %v5017 = vadd.f32 %v5016, %v4986
        %v5018 = vadd.f32 %v5017, %v4987
        %v5019 = vadd.f32 %v5018, %v4988
        %v5020 = vadd.f32 %v5019, %v4989
        %v5021 = vadd.f32 %v5020, %v4990
        %v5022 = vadd.f32 %v5021, %v4991
        %v5023 = vadd.f32 %v5022, %v4992
        %v5024 = vadd.f32 %v5023, %v4993
        %v5025 = vadd.f32 %v5024, %v4994
        %v5026 = vadd.f32 %v5025, %v4995
        %v5027 = vadd.f32 %v5026, %v4996
        %v5028 = vadd.f32 %v5027, %v4997
        %v5029 = vadd.f32 %v5028, %v4998
        %v5030 = vadd.f32 %v5029, %v4999
        %v5031 = vrot.slane %v5030, 4
        %v5032 = vadd.f32 %v5030, %v5031
        %v5033 = vrot.slane %v5032, 2
        %v5034 = vadd.f32 %v5032, %v5033
        %v5035 = vrot.slane %v5034, 1
        %v5036 = vadd.f32 %v5034, %v5035
        %v5037 = vmul.f32 %v4967, 0.00390625
        %v5038 = vmul.f32 %v5036, 0.00390625
        %v5039 = vmul.f32 %v5037, %v5037
        %v5040 = vsub.f32 %v5038, %v5039
        %v5041 = vmax.f32 %v5040, 0.0
        %v5042 = vsub.f32 %v4899, %v5037
        %v5043 = vsub.f32 %v4900, %v5037
        %v5044 = vsub.f32 %v4901, %v5037
        %v5045 = vsub.f32 %v4902, %v5037
        %v5046 = vsub.f32 %v4903, %v5037
        %v5047 = vsub.f32 %v4904, %v5037
        %v5048 = vsub.f32 %v4905, %v5037
        %v5049 = vsub.f32 %v4906, %v5037
        %v5050 = vsub.f32 %v4907, %v5037
        %v5051 = vsub.f32 %v4908, %v5037
        %v5052 = vsub.f32 %v4909, %v5037
        %v5053 = vsub.f32 %v4910, %v5037
        %v5054 = vsub.f32 %v4911, %v5037
        %v5055 = vsub.f32 %v4912, %v5037
        %v5056 = vsub.f32 %v4913, %v5037
        %v5057 = vsub.f32 %v4914, %v5037
        %v5058 = vsub.f32 %v4915, %v5037
        %v5059 = vsub.f32 %v4916, %v5037
        %v5060 = vsub.f32 %v4917, %v5037
        %v5061 = vsub.f32 %v4918, %v5037
        %v5062 = vsub.f32 %v4919, %v5037
        %v5063 = vsub.f32 %v4920, %v5037
        %v5064 = vsub.f32 %v4921, %v5037
        %v5065 = vsub.f32 %v4922, %v5037
        %v5066 = vsub.f32 %v4923, %v5037
        %v5067 = vsub.f32 %v4924, %v5037
        %v5068 = vsub.f32 %v4925, %v5037
        %v5069 = vsub.f32 %v4926, %v5037
        %v5070 = vsub.f32 %v4927, %v5037
        %v5071 = vsub.f32 %v4928, %v5037
        %v5072 = vsub.f32 %v4929, %v5037
        %v5073 = vsub.f32 %v4930, %v5037
        %v5074 = vadd.f32 %v5041, 1e-05
        %v5075 = vrsqrt.pop %v5074
        %v5076 = vmul.f32 %v5042, %v5075
        %v5077 = vmul.f32 %v5043, %v5075
        %v5078 = vmul.f32 %v5044, %v5075
        %v5079 = vmul.f32 %v5045, %v5075
        %v5080 = vmul.f32 %v5046, %v5075
        %v5081 = vmul.f32 %v5047, %v5075
        %v5082 = vmul.f32 %v5048, %v5075
        %v5083 = vmul.f32 %v5049, %v5075
        %v5084 = vmul.f32 %v5050, %v5075
        %v5085 = vmul.f32 %v5051, %v5075
        %v5086 = vmul.f32 %v5052, %v5075
        %v5087 = vmul.f32 %v5053, %v5075
        %v5088 = vmul.f32 %v5054, %v5075
        %v5089 = vmul.f32 %v5055, %v5075
        %v5090 = vmul.f32 %v5056, %v5075
        %v5091 = vmul.f32 %v5057, %v5075
        %v5092 = vmul.f32 %v5058, %v5075
        %v5093 = vmul.f32 %v5059, %v5075
        %v5094 = vmul.f32 %v5060, %v5075
        %v5095 = vmul.f32 %v5061, %v5075
        %v5096 = vmul.f32 %v5062, %v5075
        %v5097 = vmul.f32 %v5063, %v5075
        %v5098 = vmul.f32 %v5064, %v5075
        %v5099 = vmul.f32 %v5065, %v5075
        %v5100 = vmul.f32 %v5066, %v5075
        %v5101 = vmul.f32 %v5067, %v5075
        %v5102 = vmul.f32 %v5068, %v5075
        %v5103 = vmul.f32 %v5069, %v5075
        %v5104 = vmul.f32 %v5070, %v5075
        %v5105 = vmul.f32 %v5071, %v5075
        %v5106 = vmul.f32 %v5072, %v5075
        %v5107 = vmul.f32 %v5073, %v5075
        %v5108 = vadd.f32 %v5076, %v302
        %v5109 = vadd.f32 %v5077, %v303
        %v5110 = vadd.f32 %v5078, %v304
        %v5111 = vadd.f32 %v5079, %v305
        %v5112 = vadd.f32 %v5080, %v306
        %v5113 = vadd.f32 %v5081, %v307
        %v5114 = vadd.f32 %v5082, %v308
        %v5115 = vadd.f32 %v5083, %v309
        %v5116 = vadd.f32 %v5084, %v310
        %v5117 = vadd.f32 %v5085, %v311
        %v5118 = vadd.f32 %v5086, %v312
        %v5119 = vadd.f32 %v5087, %v313
        %v5120 = vadd.f32 %v5088, %v314
        %v5121 = vadd.f32 %v5089, %v315
        %v5122 = vadd.f32 %v5090, %v316
        %v5123 = vadd.f32 %v5091, %v317
        %v5124 = vadd.f32 %v5092, %v318
        %v5125 = vadd.f32 %v5093, %v319
        %v5126 = vadd.f32 %v5094, %v320
        %v5127 = vadd.f32 %v5095, %v321
        %v5128 = vadd.f32 %v5096, %v322
        %v5129 = vadd.f32 %v5097, %v323
        %v5130 = vadd.f32 %v5098, %v324
        %v5131 = vadd.f32 %v5099, %v325
        %v5132 = vadd.f32 %v5100, %v326
        %v5133 = vadd.f32 %v5101, %v327
        %v5134 = vadd.f32 %v5102, %v328
        %v5135 = vadd.f32 %v5103, %v329
        %v5136 = vadd.f32 %v5104, %v330
        %v5137 = vadd.f32 %v5105, %v331
        %v5138 = vadd.f32 %v5106, %v332
        %v5139 = vadd.f32 %v5107, %v333
        %vm5140 = vcmp.ge.f32.partialorder %v5108, 0.0
        %vm5141 = vcmp.ge.f32.partialorder %v5109, 0.0
        %vm5142 = vcmp.ge.f32.partialorder %v5110, 0.0
        %vm5143 = vcmp.ge.f32.partialorder %v5111, 0.0
        %vm5144 = vcmp.ge.f32.partialorder %v5112, 0.0
        %vm5145 = vcmp.ge.f32.partialorder %v5113, 0.0
        %vm5146 = vcmp.ge.f32.partialorder %v5114, 0.0
        %vm5147 = vcmp.ge.f32.partialorder %v5115, 0.0
        %vm5148 = vcmp.ge.f32.partialorder %v5116, 0.0
        %vm5149 = vcmp.ge.f32.partialorder %v5117, 0.0
        %vm5150 = vcmp.ge.f32.partialorder %v5118, 0.0
        %vm5151 = vcmp.ge.f32.partialorder %v5119, 0.0
        %vm5152 = vcmp.ge.f32.partialorder %v5120, 0.0
        %vm5153 = vcmp.ge.f32.partialorder %v5121, 0.0
        %vm5154 = vcmp.ge.f32.partialorder %v5122, 0.0
        %vm5155 = vcmp.ge.f32.partialorder %v5123, 0.0
        %vm5156 = vcmp.ge.f32.partialorder %v5124, 0.0
        %vm5157 = vcmp.ge.f32.partialorder %v5125, 0.0
        %vm5158 = vcmp.ge.f32.partialorder %v5126, 0.0
        %vm5159 = vcmp.ge.f32.partialorder %v5127, 0.0
        %vm5160 = vcmp.ge.f32.partialorder %v5128, 0.0
        %vm5161 = vcmp.ge.f32.partialorder %v5129, 0.0
        %vm5162 = vcmp.ge.f32.partialorder %v5130, 0.0
        %vm5163 = vcmp.ge.f32.partialorder %v5131, 0.0
        %vm5164 = vcmp.ge.f32.partialorder %v5132, 0.0
        %vm5165 = vcmp.ge.f32.partialorder %v5133, 0.0
        %vm5166 = vcmp.ge.f32.partialorder %v5134, 0.0
        %vm5167 = vcmp.ge.f32.partialorder %v5135, 0.0
        %vm5168 = vcmp.ge.f32.partialorder %v5136, 0.0
        %vm5169 = vcmp.ge.f32.partialorder %v5137, 0.0
        %vm5170 = vcmp.ge.f32.partialorder %v5138, 0.0
        %vm5171 = vcmp.ge.f32.partialorder %v5139, 0.0
        %v5172 = vmul.f32 %v2707, %v5108
        %v5173 = vmul.f32 %v2707, %v5109
        %v5174 = vmul.f32 %v2707, %v5110
        %v5175 = vmul.f32 %v2707, %v5111
        %v5176 = vmul.f32 %v2707, %v5112
        %v5177 = vmul.f32 %v2707, %v5113
        %v5178 = vmul.f32 %v2707, %v5114
        %v5179 = vmul.f32 %v2707, %v5115
        %v5180 = vmul.f32 %v2707, %v5116
        %v5181 = vmul.f32 %v2707, %v5117
        %v5182 = vmul.f32 %v2707, %v5118
        %v5183 = vmul.f32 %v2707, %v5119
        %v5184 = vmul.f32 %v2707, %v5120
        %v5185 = vmul.f32 %v2707, %v5121
        %v5186 = vmul.f32 %v2707, %v5122
        %v5187 = vmul.f32 %v2707, %v5123
        %v5188 = vmul.f32 %v2707, %v5124
        %v5189 = vmul.f32 %v2707, %v5125
        %v5190 = vmul.f32 %v2707, %v5126
        %v5191 = vmul.f32 %v2707, %v5127
        %v5192 = vmul.f32 %v2707, %v5128
        %v5193 = vmul.f32 %v2707, %v5129
        %v5194 = vmul.f32 %v2707, %v5130
        %v5195 = vmul.f32 %v2707, %v5131
        %v5196 = vmul.f32 %v2707, %v5132
        %v5197 = vmul.f32 %v2707, %v5133
        %v5198 = vmul.f32 %v2707, %v5134
        %v5199 = vmul.f32 %v2707, %v5135
        %v5200 = vmul.f32 %v2707, %v5136
        %v5201 = vmul.f32 %v2707, %v5137
        %v5202 = vmul.f32 %v2707, %v5138
        %v5203 = vmul.f32 %v2707, %v5139
        %v5204 = vsel %vm5140, %v5108, %v5172
        %v5205 = vsel %vm5141, %v5109, %v5173
        %v5206 = vsel %vm5142, %v5110, %v5174
        %v5207 = vsel %vm5143, %v5111, %v5175
        %v5208 = vsel %vm5144, %v5112, %v5176
        %v5209 = vsel %vm5145, %v5113, %v5177
        %v5210 = vsel %vm5146, %v5114, %v5178
        %v5211 = vsel %vm5147, %v5115, %v5179
        %v5212 = vsel %vm5148, %v5116, %v5180
        %v5213 = vsel %vm5149, %v5117, %v5181
        %v5214 = vsel %vm5150, %v5118, %v5182
        %v5215 = vsel %vm5151, %v5119, %v5183
        %v5216 = vsel %vm5152, %v5120, %v5184
        %v5217 = vsel %vm5153, %v5121, %v5185
        %v5218 = vsel %vm5154, %v5122, %v5186
        %v5219 = vsel %vm5155, %v5123, %v5187
        %v5220 = vsel %vm5156, %v5124, %v5188
        %v5221 = vsel %vm5157, %v5125, %v5189
        %v5222 = vsel %vm5158, %v5126, %v5190
        %v5223 = vsel %vm5159, %v5127, %v5191
        %v5224 = vsel %vm5160, %v5128, %v5192
        %v5225 = vsel %vm5161, %v5129, %v5193
        %v5226 = vsel %vm5162, %v5130, %v5194
        %v5227 = vsel %vm5163, %v5131, %v5195
        %v5228 = vsel %vm5164, %v5132, %v5196
        %v5229 = vsel %vm5165, %v5133, %v5197
        %v5230 = vsel %vm5166, %v5134, %v5198
        %v5231 = vsel %vm5167, %v5135, %v5199
        %v5232 = vsel %vm5168, %v5136, %v5200
        %v5233 = vsel %vm5169, %v5137, %v5201
        %v5234 = vsel %vm5170, %v5138, %v5202
        %v5235 = vsel %vm5171, %v5139, %v5203
        %5236 = vst [vmem:[%s299] sm:$0xff] %v5204
        %5237 = vst [vmem:[%s299 + $0x8] sm:$0xff] %v5205
        %5238 = vst [vmem:[%s299 + $0x10] sm:$0xff] %v5206
        %5239 = vst [vmem:[%s299 + $0x18] sm:$0xff] %v5207
        %5240 = vst [vmem:[%s299 + $0x20] sm:$0xff] %v5208
        %5241 = vst [vmem:[%s299 + $0x28] sm:$0xff] %v5209
        %5242 = vst [vmem:[%s299 + $0x30] sm:$0xff] %v5210
        %5243 = vst [vmem:[%s299 + $0x38] sm:$0xff] %v5211
        %5244 = vst [vmem:[%s299 + $0x40] sm:$0xff] %v5212
        %5245 = vst [vmem:[%s299 + $0x48] sm:$0xff] %v5213
        %5246 = vst [vmem:[%s299 + $0x50] sm:$0xff] %v5214
        %5247 = vst [vmem:[%s299 + $0x58] sm:$0xff] %v5215
        %5248 = vst [vmem:[%s299 + $0x60] sm:$0xff] %v5216
        %5249 = vst [vmem:[%s299 + $0x68] sm:$0xff] %v5217
        %5250 = vst [vmem:[%s299 + $0x70] sm:$0xff] %v5218
        %5251 = vst [vmem:[%s299 + $0x78] sm:$0xff] %v5219
        %5252 = vst [vmem:[%s299 + $0x80] sm:$0xff] %v5220
        %5253 = vst [vmem:[%s299 + $0x88] sm:$0xff] %v5221
        %5254 = vst [vmem:[%s299 + $0x90] sm:$0xff] %v5222
        %5255 = vst [vmem:[%s299 + $0x98] sm:$0xff] %v5223
        %5256 = vst [vmem:[%s299 + $0xa0] sm:$0xff] %v5224
        %5257 = vst [vmem:[%s299 + $0xa8] sm:$0xff] %v5225
        %5258 = vst [vmem:[%s299 + $0xb0] sm:$0xff] %v5226
        %5259 = vst [vmem:[%s299 + $0xb8] sm:$0xff] %v5227
        %5260 = vst [vmem:[%s299 + $0xc0] sm:$0xff] %v5228
        %5261 = vst [vmem:[%s299 + $0xc8] sm:$0xff] %v5229
        %5262 = vst [vmem:[%s299 + $0xd0] sm:$0xff] %v5230
        %5263 = vst [vmem:[%s299 + $0xd8] sm:$0xff] %v5231
        %5264 = vst [vmem:[%s299 + $0xe0] sm:$0xff] %v5232
        %5265 = vst [vmem:[%s299 + $0xe8] sm:$0xff] %v5233
        %5266 = vst [vmem:[%s299 + $0xf0] sm:$0xff] %v5234
        %5267 = vst [vmem:[%s299 + $0xf8] sm:$0xff] %v5235
        %s5268 = sand.u32 %s164, 1
        %s5269 = scalar_lea.sflag [#allocation5], %s5268
        %s5270 = sand.u32 %s164, 1
        %s5271 = smul.addr %s5270, 256
        %s5272 = scalar_lea.vmem [#allocation9], %s5271
        // Predicated region
        $region57: #{tpu_custom_call.1} parent=43 // pred_check
          %p5273 = pneg %p174
        $region58: #{tpu_custom_call.1} parent=43 // pred_check_branch
          %5275 = sbr.rel (%p5273) target = $region60
        $region59: #{tpu_custom_call.1} parent=43 // pred_region
          %s5277 = ssub.s32 4096, 4096
          %5278 = vsyncadd %s5269, %s5277
          %s5279 = smul.addr %s25, 32
          %s5280 = smul.addr %s5279, 128
          %s5281 = scalar_lea.hbm %s6, %s5280
          %s5282 = sshll.u32 %s5272, 4
          %s5283 = int_to_ptr.vmem [resolvable:$true] %s5282
          %5288 = dma.vmem_to_hbm [thread:$0]  %s5283, 4096, %s5281, %s5269, 128, 128, 8
        $region60: #{tpu_custom_call.1} parent=43 // pred_fallthru
          _
      $region44: #{tpu_custom_call.1} parent=5 // pred_fallthru
        _
      %p5289 = scmp.le.s32.totalorder 2, %s20
      // Predicated region
      $region61: #{tpu_custom_call.1} parent=5 // pred_check
        %p5290 = pneg %p5289
      $region62: #{tpu_custom_call.1} parent=5 // pred_check_branch
        %5292 = sbr.rel (%p5290) target = $region64
      $region63: #{tpu_custom_call.1} parent=5 // pred_region
        %s5293 = ssub.s32 %s20, 2
        // Predicated region
        $region65: #{tpu_custom_call.1} parent=63 // pred_check
          %p5294 = pneg %p180
        $region66: #{tpu_custom_call.1} parent=63 // pred_check_branch
          %5296 = sbr.rel (%p5294) target = $region68
        $region67: #{tpu_custom_call.1} parent=63 // pred_region
          %s5297 = sand.u32 %s165, 1
          %s5298 = scalar_lea.sflag [#allocation5], %s5297
          %s5299 = sand.u32 %s165, 1
          %s5300 = smul.addr %s5299, 256
          %s5301 = scalar_lea.vmem [#allocation9], %s5300
          %5302 = dma.done %s5298, 4096
        $region68: #{tpu_custom_call.1} parent=63 // pred_fallthru
          _
      $region64: #{tpu_custom_call.1} parent=5 // pred_fallthru
        _
    $region6: #{tpu_custom_call.1} parent=1 // loop_footer
      %s24 = sadd.s32 1, %s20
    $region7: #{tpu_custom_call.1} parent=1 // loop_footer_branch
      %19 = sbr.rel target = $region3
    $region8: #{tpu_custom_call.1} parent=1 // loop_exit
      _
    %5303 = vsyncpa [#allocation4], 1
    %s5304 = scalar_lea.sflag [#allocation4], 1
    %5305 = vsyncpa %s5304, 1
    %5306 = vsyncpa [#allocation7], 1
    %5307 = vsyncpa [#allocation5], 1
    %s5308 = scalar_lea.sflag [#allocation5], 1
    %5309 = vsyncpa %s5308, 1

</llo_original>
